<compile_context>
chip_gen: v5e
topology: v5e:2x2
jax: 0.10.0
libtpu: 0.0.40
codegen_flags: <defaults>
</compile_context>

<pallas_src>
import functools
import math

import jax
import jax.numpy as jnp
from jax.experimental import pallas as pl
from jax.experimental.pallas import tpu as pltpu


# ----------------------------------------------------------------------------
# Exact GELU (erf-based, matching F.gelu default) via Abramowitz & Stegun erf
# (max abs err ~1.5e-7).  Always evaluated in f32 inside the kernels.
# ----------------------------------------------------------------------------
def _erf(x):
    a1, a2, a3, a4, a5 = 0.254829592, -0.284496736, 1.421413741, -1.453152027, 1.061405429
    p = 0.3275911
    s = jnp.where(x >= 0.0, 1.0, -1.0)
    z = jnp.abs(x)
    t = 1.0 / (1.0 + p * z)
    poly = ((((a5 * t + a4) * t + a3) * t + a2) * t + a1) * t
    return s * (1.0 - poly * jnp.exp(-z * z))


def _gelu(x):
    return 0.5 * x * (1.0 + _erf(x * (1.0 / math.sqrt(2.0))))


# ----------------------------------------------------------------------------
# Tiling helpers (pure Python, evaluated at trace / pack time).
# ----------------------------------------------------------------------------
def _row_pack(n):
    for p in (4, 2):
        if n % p == 0:
            return p
    return 1


def _row_tile(rows, target=512):
    if rows <= 16:
        return rows
    if rows >= 2 * target:
        return target
    return min(rows, max(16, ((rows // 2) // 16) * 16))


def _spectral_layout(M, C2):
    """Group lane_pack modes per matmul block so the lane dim is 128-dense.

    Returns (lane_pack, blk, Gm, group_tile, Gp):
      lane_pack : modes packed along the lane axis (blk = lane_pack * C2)
      Gm        : number of mode groups (ceil(M / lane_pack))
      group_tile: groups per grid step
      Gp        : padded group count (multiple of group_tile)
    """
    if C2 <= 128 and 128 % C2 == 0:
        lane_pack = 128 // C2
    else:
        lane_pack = 1
    lane_pack = max(1, min(lane_pack, M))
    blk = lane_pack * C2
    Gm = -(-M // lane_pack)
    # ~4 MiB of grouped spectral weight per grid step, but keep >=2 steps.
    budget = max(1, (4 << 20) // (blk * blk * 4))
    gt = min(Gm, budget)
    if Gm >= 2:
        gt = min(gt, -(-Gm // 2))
    Gp = -(-Gm // gt) * gt
    return lane_pack, blk, Gm, gt, Gp


def _compiler_params():
    return pltpu.CompilerParams(
        dimension_semantics=("parallel",),
        vmem_limit_bytes=48 * 1024 * 1024,
    )


# ----------------------------------------------------------------------------
# Pallas kernel 1: pointwise channel matmul  y = x @ W + b (+ add) (+ GELU)
# Operates on the row-packed representation: x (tile, P*Cin), W block-diagonal
# (P*Cin, P*Cout) so the output block is lane-dense (P*Cout = 128 for width=32).
# ----------------------------------------------------------------------------
def _pw_kernel(x_ref, w_ref, b_ref, o_ref, *, gelu):
    y = jnp.dot(x_ref[...], w_ref[...], preferred_element_type=jnp.float32)
    y = y + b_ref[...]
    if gelu:
        y = _gelu(y)
    o_ref[...] = y.astype(o_ref.dtype)


def _pw_add_kernel(x_ref, w_ref, b_ref, a_ref, o_ref, *, gelu):
    y = jnp.dot(x_ref[...], w_ref[...], preferred_element_type=jnp.float32)
    y = y + b_ref[...] + a_ref[...].astype(jnp.float32)
    if gelu:
        y = _gelu(y)
    o_ref[...] = y.astype(o_ref.dtype)


def pointwise(x, w, b, add=None, gelu=False, out_dtype=jnp.float32):
    """x: (R, K), w: (K, Nc), b: (1, Nc) f32, add: optional (R, Nc)."""
    R, K = x.shape
    Nc = w.shape[1]
    t = _row_tile(R)
    grid = (pl.cdiv(R, t),)
    in_specs = [
        pl.BlockSpec((t, K), lambda i: (i, 0)),
        pl.BlockSpec((K, Nc), lambda i: (0, 0)),
        pl.BlockSpec((1, Nc), lambda i: (0, 0)),
    ]
    args = [x, w, b]
    if add is not None:
        in_specs.append(pl.BlockSpec((t, Nc), lambda i: (i, 0)))
        args.append(add)
        kernel = functools.partial(_pw_add_kernel, gelu=gelu)
    else:
        kernel = functools.partial(_pw_kernel, gelu=gelu)
    return pl.pallas_call(
        kernel,
        out_shape=jax.ShapeDtypeStruct((R, Nc), out_dtype),
        grid=grid,
        in_specs=in_specs,
        out_specs=pl.BlockSpec((t, Nc), lambda i: (i, 0)),
        compiler_params=_compiler_params(),
    )(*args)


# ----------------------------------------------------------------------------
# Pallas kernel 2: fused fc1 -> GELU -> fc2 tail.  The (tile, P*128) hidden
# activation never leaves VMEM.
# ----------------------------------------------------------------------------
def _fc_tail_kernel(x_ref, w1_ref, b1_ref, w2_ref, b2_ref, o_ref):
    h = jnp.dot(x_ref[...], w1_ref[...], preferred_element_type=jnp.float32)
    h = _gelu(h + b1_ref[...])
    y = jnp.dot(h.astype(w2_ref.dtype), w2_ref[...],
                preferred_element_type=jnp.float32)
    o_ref[...] = (y + b2_ref[...]).astype(o_ref.dtype)


def fc_tail(x, w1, b1, w2, b2):
    R, K = x.shape
    H1 = w1.shape[1]
    N2 = w2.shape[1]
    t = _row_tile(R)
    grid = (pl.cdiv(R, t),)
    return pl.pallas_call(
        _fc_tail_kernel,
        out_shape=jax.ShapeDtypeStruct((R, N2), jnp.float32),
        grid=grid,
        in_specs=[
            pl.BlockSpec((t, K), lambda i: (i, 0)),
            pl.BlockSpec((K, H1), lambda i: (0, 0)),
            pl.BlockSpec((1, H1), lambda i: (0, 0)),
            pl.BlockSpec((H1, N2), lambda i: (0, 0)),
            pl.BlockSpec((1, N2), lambda i: (0, 0)),
        ],
        out_specs=pl.BlockSpec((t, N2), lambda i: (i, 0)),
        compiler_params=_compiler_params(),
    )(x, w1, b1, w2, b2)


# ----------------------------------------------------------------------------
# Pallas kernel 3: group-batched spectral multiply.
# x2: (Gp, B, blk) with blk = lane_pack*2C (128-lane dense), w2: (Gp, blk, blk)
# block-diagonal per group (one [[wr, wi], [-wi, wr]] block per packed mode).
# All groups of a grid step handled by one batched dot_general.
# ----------------------------------------------------------------------------
def _spectral_kernel(x_ref, w_ref, o_ref):
    o_ref[...] = jax.lax.dot_general(
        x_ref[...], w_ref[...],
        dimension_numbers=(((2,), (1,)), ((0,), (0,))),
        preferred_element_type=jnp.float32,
    ).astype(o_ref.dtype)


def spectral_matmul(x2, w2, group_tile):
    Gp, B, blk = x2.shape
    grid = (Gp // group_tile,)
    return pl.pallas_call(
        _spectral_kernel,
        out_shape=jax.ShapeDtypeStruct((Gp, B, blk), jnp.float32),
        grid=grid,
        in_specs=[
            pl.BlockSpec((group_tile, B, blk), lambda g: (g, 0, 0)),
            pl.BlockSpec((group_tile, blk, blk), lambda g: (g, 0, 0)),
        ],
        out_specs=pl.BlockSpec((group_tile, B, blk), lambda g: (g, 0, 0)),
        compiler_params=_compiler_params(),
    )(x2, w2)


# ----------------------------------------------------------------------------
# One-time parameter packing (outside the jitted forward).
# ----------------------------------------------------------------------------
def pack_params(params, modes1, modes2, B, H, W, mm_dtype=jnp.bfloat16):
    N = B * H * W
    P = _row_pack(N)
    width = params["fc0_w"].shape[1]
    m1 = min(modes1, H)
    m2 = min(modes2, W // 2 + 1)          # clamp to rfft width
    M = 2 * m1 * m2
    C2 = 2 * width
    lane_pack, blk, Gm, _, Gp = _spectral_layout(M, C2)

    def lin(w, b):
        cin, cout = w.shape
        wp = jnp.kron(jnp.eye(P, dtype=jnp.float32),
                      w.astype(jnp.float32)).astype(mm_dtype)      # (P*Cin, P*Cout)
        bp = jnp.tile(b.astype(jnp.float32), P).reshape(1, P * cout)
        return wp, bp

    def spec(w1, w2):
        c = w1.shape[0]
        w_m = jnp.concatenate([w1[:, :, :m1, :m2], w2[:, :, :m1, :m2]],
                              axis=2).reshape(c, c, M)
        wr, wi = jnp.real(w_m), jnp.imag(w_m)
        wb = jnp.concatenate(
            [jnp.concatenate([wr, wi], axis=1),
             jnp.concatenate([-wi, wr], axis=1)], axis=0)           # (2C, 2C, M)
        wb = jnp.transpose(wb, (2, 0, 1)).astype(jnp.float32)       # (M, C2, C2)
        Mtot = Gm * lane_pack
        if Mtot != M:
            wb = jnp.concatenate(
                [wb, jnp.zeros((Mtot - M, C2, C2), jnp.float32)], axis=0)
        wb = wb.reshape(Gm, lane_pack, C2, C2)
        wg = jnp.zeros((Gm, blk, blk), jnp.float32)
        for j in range(lane_pack):                                  # block-diag expand
            wg = wg.at[:, j * C2:(j + 1) * C2, j * C2:(j + 1) * C2].set(wb[:, j])
        if Gp != Gm:
            wg = jnp.concatenate(
                [wg, jnp.zeros((Gp - Gm, blk, blk), jnp.float32)], axis=0)
        return wg

    p = {}
    p["fc0_w"], p["fc0_b"] = lin(params["fc0_w"], params["fc0_b"])
    for k in range(4):
        p[f"conv{k}_w"] = spec(params[f"conv{k}_w1"], params[f"conv{k}_w2"])
        p[f"w{k}_w"], p[f"w{k}_b"] = lin(params[f"w{k}_w"], params[f"w{k}_b"])
    p["fc1_w"], p["fc1_b"] = lin(params["fc1_w"], params["fc1_b"])
    p["fc2_w"], p["fc2_b"] = lin(params["fc2_w"], params["fc2_b"])
    return p


# ----------------------------------------------------------------------------
# Full FNO2d forward (activations stay row-packed NHWC end-to-end).
# ----------------------------------------------------------------------------
def fno2d_forward(packed, x, modes1, modes2):
    B, Cin, H, W = x.shape
    N = B * H * W
    P = _row_pack(N)
    R = N // P
    mm_dtype = packed["fc0_w"].dtype
    width = packed["w0_w"].shape[1] // P
    out_ch = packed["fc2_w"].shape[1] // P

    m1 = min(modes1, H)
    m2 = min(modes2, W // 2 + 1)
    M = 2 * m1 * m2
    C2 = 2 * width
    lane_pack, blk, Gm, GT, Gp = _spectral_layout(M, C2)
    Fdim = W // 2 + 1

    # NCHW -> row-packed NHWC (R, P*Cin); later (N,C)<->(R,P*C) reshapes are free.
    h = jnp.transpose(x, (0, 2, 3, 1)).reshape(R, P * Cin).astype(mm_dtype)
    h = pointwise(h, packed["fc0_w"], packed["fc0_b"], out_dtype=mm_dtype)

    for k in range(4):
        # ---- spectral branch: FFT glue in f32, learnable part in Pallas ----
        xs = h.astype(jnp.float32).reshape(B, H, W, width)
        x_ft = jnp.fft.rfft2(xs, axes=(1, 2))                        # (B,H,Fdim,C)
        xm = jnp.concatenate([x_ft[:, :m1, :m2, :],
                              x_ft[:, H - m1:, :m2, :]], axis=1)     # (B,2m1,m2,C)
        xm = xm.reshape(B, M, width)
        x2 = jnp.concatenate([jnp.real(xm), jnp.imag(xm)], axis=-1)  # (B,M,2C)
        Mtot = Gm * lane_pack
        if Mtot != M:
            x2 = jnp.concatenate(
                [x2, jnp.zeros((B, Mtot - M, C2), x2.dtype)], axis=1)
        x2 = x2.reshape(B, Gm, blk)                                  # free reshape
        if Gp != Gm:
            x2 = jnp.concatenate(
                [x2, jnp.zeros((B, Gp - Gm, blk), x2.dtype)], axis=1)
        x2 = jnp.transpose(x2, (1, 0, 2))                            # (Gp,B,blk)
        out2 = spectral_matmul(x2, packed[f"conv{k}_w"], GT)         # (Gp,B,blk)
        out2 = jnp.transpose(out2[:Gm], (1, 0, 2)).reshape(B, Gm * lane_pack, C2)
        out2 = out2[:, :M]                                           # (B,M,2C)
        out_c = (out2[..., :width] + 1j * out2[..., width:]
                 ).reshape(B, 2 * m1, m2, width)
        out_ft = jnp.zeros((B, H, Fdim, width), jnp.complex64)
        out_ft = out_ft.at[:, :m1, :m2, :].set(out_c[:, :m1])
        out_ft = out_ft.at[:, H - m1:, :m2, :].set(out_c[:, m1:])
        spec = jnp.fft.irfft2(out_ft, s=(H, W), axes=(1, 2))         # (B,H,W,C)
        spec_flat = spec.reshape(R, P * width).astype(mm_dtype)      # free reshape

        # ---- fused 1x1 conv + spectral residual add (+ GELU for k<3) ----
        h = pointwise(h, packed[f"w{k}_w"], packed[f"w{k}_b"],
                      add=spec_flat, gelu=(k < 3), out_dtype=mm_dtype)

    # ---- fused fc1 -> GELU -> fc2 tail (hidden stays in VMEM) ----
    y = fc_tail(h, packed["fc1_w"], packed["fc1_b"],
                packed["fc2_w"], packed["fc2_b"])                    # (R, P*out) f32
    y = y.reshape(B, H, W, out_ch)
    return jnp.transpose(y, (0, 3, 1, 2))


# ----------------------------------------------------------------------------
# Deterministic parameter init (shapes from the PyTorch module __init__)
# ----------------------------------------------------------------------------
def init_params(key, modes1, modes2, width, in_ch, out_ch):
    keys = iter(jax.random.split(key, 32))

    def lin(k, fan_in, fan_out):
        k1, k2 = jax.random.split(k)
        bound = 1.0 / math.sqrt(fan_in)
        w = jax.random.uniform(k1, (fan_in, fan_out), jnp.float32, -bound, bound)
        b = jax.random.uniform(k2, (fan_out,), jnp.float32, -bound, bound)
        return w, b

    def spec(k):
        k1, k2 = jax.random.split(k)
        scale = 1.0 / (width * width)
        wr = jax.random.uniform(k1, (width, width, modes1, modes2), jnp.float32)
        wi = jax.random.uniform(k2, (width, width, modes1, modes2), jnp.float32)
        return (scale * (wr + 1j * wi)).astype(jnp.complex64)

    p = {}
    p["fc0_w"], p["fc0_b"] = lin(next(keys), in_ch, width)
    for k in range(4):
        p[f"conv{k}_w1"] = spec(next(keys))
        p[f"conv{k}_w2"] = spec(next(keys))
        p[f"w{k}_w"], p[f"w{k}_b"] = lin(next(keys), width, width)
    p["fc1_w"], p["fc1_b"] = lin(next(keys), width, 128)
    p["fc2_w"], p["fc2_b"] = lin(next(keys), 128, out_ch)
    return p


# ----------------------------------------------------------------------------
# Pure-JAX reference (mirrors the PyTorch forward exactly) for validation
# ----------------------------------------------------------------------------
def reference_forward(params, x, modes1, modes2):
    def gelu(v):
        return jax.nn.gelu(v, approximate=False)

    def spectral(xn, w1, w2):
        B, C, H, W = xn.shape
        m1, m2 = min(modes1, H), min(modes2, W)
        x_ft = jnp.fft.rfft2(xn)
        out_ft = jnp.zeros((B, C, H, W // 2 + 1), jnp.complex64)
        out_ft = out_ft.at[:, :, :m1, :m2].set(
            jnp.einsum("bixy,ioxy->boxy", x_ft[:, :, :m1, :m2], w1[:, :, :m1, :m2]))
        out_ft = out_ft.at[:, :, H - m1:, :m2].set(
            jnp.einsum("bixy,ioxy->boxy", x_ft[:, :, H - m1:, :m2], w2[:, :, :m1, :m2]))
        return jnp.fft.irfft2(out_ft, s=(H, W))

    h = jnp.einsum("bchw,cd->bdhw", x, params["fc0_w"]) + params["fc0_b"][None, :, None, None]
    for k in range(4):
        x1 = spectral(h, params[f"conv{k}_w1"], params[f"conv{k}_w2"])
        x2 = (jnp.einsum("bchw,cd->bdhw", h, params[f"w{k}_w"])
              + params[f"w{k}_b"][None, :, None, None])
        h = x1 + x2
        if k < 3:
            h = gelu(h)
    h = jnp.transpose(h, (0, 2, 3, 1))
    h = gelu(h @ params["fc1_w"] + params["fc1_b"])
    h = h @ params["fc2_w"] + params["fc2_b"]
    return jnp.transpose(h, (0, 3, 1, 2))


if __name__ == "__main__":
    modes1 = modes2 = 6
    width = 32
    in_ch, out_ch = 4, 3
    B, H, W = 2, 16, 16

    key = jax.random.PRNGKey(0)
    kp, kx = jax.random.split(key)
    params = init_params(kp, modes1, modes2, width, in_ch, out_ch)
    x = jax.random.normal(kx, (B, in_ch, H, W), jnp.float32)

    ref = reference_forward(params, x, modes1, modes2)
    fwd = jax.jit(functools.partial(fno2d_forward, modes1=modes1, modes2=modes2))

    # 1) f32 path: tight semantic check of the Pallas kernels vs the reference.
    packed_f32 = pack_params(params, modes1, modes2, B, H, W, mm_dtype=jnp.float32)
    out_f32 = jax.block_until_ready(fwd(packed_f32, x))
    assert out_f32.shape == (B, out_ch, H, W), out_f32.shape
    err_f32 = float(jnp.max(jnp.abs(out_f32 - ref)))
    assert err_f32 < 2e-3, f"f32 path: max abs err vs reference = {err_f32}"

    # 2) bf16 performance path: bf16 operands/activations, f32 accumulation.
    packed_bf16 = pack_params(params, modes1, modes2, B, H, W, mm_dtype=jnp.bfloat16)
    out_bf16 = jax.block_until_ready(fwd(packed_bf16, x))
    assert out_bf16.shape == (B, out_ch, H, W), out_bf16.shape
    scale = max(1.0, float(jnp.max(jnp.abs(ref))))
    err_bf16 = float(jnp.max(jnp.abs(out_bf16 - ref)))
    assert err_bf16 < 5e-2 * scale, f"bf16 path: max abs err vs reference = {err_bf16}"

    print("KERNEL_OK")
</pallas_src>

<mosaic_0001>
module attributes {stable_mosaic.version = 11 : i64} {
  func.func @_pw_kernel(%arg0: i32, %arg1: memref<64x16xf32, #tpu.memory_space<vmem>>, %arg2: memref<16x128xf32, #tpu.memory_space<vmem>>, %arg3: memref<1x128xf32, #tpu.memory_space<vmem>>, %arg4: memref<64x128xf32, #tpu.memory_space<vmem>>) attributes {dimension_semantics = [#tpu.dimension_semantics<parallel>], iteration_bounds = array<i64: 2>, scalar_prefetch = 0 : i64, scratch_operands = 0 : i64, tpu.core_type = #tpu.core_type<tc>, window_params = [{transform_indices = @transform_0, window_bounds = array<i64: 64, 16>}, {pipeline_mode = #tpu.pipeline_mode<synchronous>, transform_indices = @transform_1, window_bounds = array<i64: 16, 128>}, {pipeline_mode = #tpu.pipeline_mode<synchronous>, transform_indices = @transform_2, window_bounds = array<i64: 1, 128>}, {transform_indices = @transform_3, window_bounds = array<i64: 64, 128>}]} {
    %c0 = arith.constant 0 : index
    %c0_0 = arith.constant 0 : index
    %0 = vector.load %arg1[%c0, %c0_0] : memref<64x16xf32, #tpu.memory_space<vmem>>, vector<64x16xf32>
    %c0_1 = arith.constant 0 : index
    %c0_2 = arith.constant 0 : index
    %1 = vector.load %arg2[%c0_1, %c0_2] : memref<16x128xf32, #tpu.memory_space<vmem>>, vector<16x128xf32>
    %cst = arith.constant dense<0.000000e+00> : vector<64x128xf32>
    %2 = tpu.matmul %0, %1, %cst {dimension_numbers = #tpu.dot_dimension_numbers<[1], [0], [0], [1], [0, 0, 1, 1], [], []>} : vector<64x16xf32>, vector<16x128xf32>, vector<64x128xf32> -> vector<64x128xf32>
    %c0_3 = arith.constant 0 : index
    %c0_4 = arith.constant 0 : index
    %3 = vector.load %arg3[%c0_3, %c0_4] : memref<1x128xf32, #tpu.memory_space<vmem>>, vector<1x128xf32>
    %4 = vector.broadcast %3 : vector<1x128xf32> to vector<64x128xf32>
    %5 = arith.addf %2, %4 : vector<64x128xf32>
    %c0_5 = arith.constant 0 : index
    %c0_6 = arith.constant 0 : index
    %6 = vector.load %arg4[%c0_5, %c0_6] : memref<64x128xf32, #tpu.memory_space<vmem>>, vector<64x128xf32>
    tpu.vector_store %arg4[%c0_5, %c0_6], %5 {strides = array<i32>} : memref<64x128xf32, #tpu.memory_space<vmem>>, vector<64x128xf32>,
    return
  }
  func.func @transform_0(%arg0: i32) -> (i32, i32) {
    %c0_i32 = arith.constant 0 : i32
    %c0_i32_0 = arith.constant 0 : i32
    return %arg0, %c0_i32 : i32, i32
  }
  func.func @transform_1(%arg0: i32) -> (i32, i32) {
    %c0_i32 = arith.constant 0 : i32
    %c0_i32_0 = arith.constant 0 : i32
    %c0_i32_1 = arith.constant 0 : i32
    return %c0_i32, %c0_i32_0 : i32, i32
  }
  func.func @transform_2(%arg0: i32) -> (i32, i32) {
    %c0_i32 = arith.constant 0 : i32
    %c0_i32_0 = arith.constant 0 : i32
    %c0_i32_1 = arith.constant 0 : i32
    return %c0_i32, %c0_i32_0 : i32, i32
  }
  func.func @transform_3(%arg0: i32) -> (i32, i32) {
    %c0_i32 = arith.constant 0 : i32
    %c0_i32_0 = arith.constant 0 : i32
    return %arg0, %c0_i32 : i32, i32
  }
}

module attributes {stable_mosaic.version = 11 : i64} {
  func.func @_spectral_kernel(%arg0: i32, %arg1: memref<18x2x128xf32, #tpu.memory_space<vmem>>, %arg2: memref<18x128x128xf32, #tpu.memory_space<vmem>>, %arg3: memref<18x2x128xf32, #tpu.memory_space<vmem>>) attributes {dimension_semantics = [#tpu.dimension_semantics<parallel>], iteration_bounds = array<i64: 2>, scalar_prefetch = 0 : i64, scratch_operands = 0 : i64, tpu.core_type = #tpu.core_type<tc>, window_params = [{transform_indices = @transform_0, window_bounds = array<i64: 18, 2, 128>}, {transform_indices = @transform_1, window_bounds = array<i64: 18, 128, 128>}, {transform_indices = @transform_2, window_bounds = array<i64: 18, 2, 128>}]} {
    %c0 = arith.constant 0 : index
    %c0_0 = arith.constant 0 : index
    %c0_1 = arith.constant 0 : index
    %0 = vector.load %arg1[%c0, %c0_0, %c0_1] : memref<18x2x128xf32, #tpu.memory_space<vmem>>, vector<18x2x128xf32>
    %c0_2 = arith.constant 0 : index
    %c0_3 = arith.constant 0 : index
    %c0_4 = arith.constant 0 : index
    %1 = vector.load %arg2[%c0_2, %c0_3, %c0_4] : memref<18x128x128xf32, #tpu.memory_space<vmem>>, vector<18x128x128xf32>
    %cst = arith.constant dense<0.000000e+00> : vector<18x2x128xf32>
    %2 = tpu.matmul %0, %1, %cst {dimension_numbers = #tpu.dot_dimension_numbers<[2], [1], [1], [2], [0, 0, 0, 1, 1, 2], [0], [0]>} : vector<18x2x128xf32>, vector<18x128x128xf32>, vector<18x2x128xf32> -> vector<18x2x128xf32>
    %c0_5 = arith.constant 0 : index
    %c0_6 = arith.constant 0 : index
    %c0_7 = arith.constant 0 : index
    %3 = vector.load %arg3[%c0_5, %c0_6, %c0_7] : memref<18x2x128xf32, #tpu.memory_space<vmem>>, vector<18x2x128xf32>
    tpu.vector_store %arg3[%c0_5, %c0_6, %c0_7], %2 {strides = array<i32>} : memref<18x2x128xf32, #tpu.memory_space<vmem>>, vector<18x2x128xf32>,
    return
  }
  func.func @transform_0(%arg0: i32) -> (i32, i32, i32) {
    %c0_i32 = arith.constant 0 : i32
    %c0_i32_0 = arith.constant 0 : i32
    %c0_i32_1 = arith.constant 0 : i32
    return %arg0, %c0_i32, %c0_i32_0 : i32, i32, i32
  }
  func.func @transform_1(%arg0: i32) -> (i32, i32, i32) {
    %c0_i32 = arith.constant 0 : i32
    %c0_i32_0 = arith.constant 0 : i32
    %c0_i32_1 = arith.constant 0 : i32
    return %arg0, %c0_i32, %c0_i32_0 : i32, i32, i32
  }
  func.func @transform_2(%arg0: i32) -> (i32, i32, i32) {
    %c0_i32 = arith.constant 0 : i32
    %c0_i32_0 = arith.constant 0 : i32
    %c0_i32_1 = arith.constant 0 : i32
    return %arg0, %c0_i32, %c0_i32_0 : i32, i32, i32
  }
}

module attributes {stable_mosaic.version = 11 : i64} {
  func.func @_pw_add_kernel(%arg0: i32, %arg1: memref<64x128xf32, #tpu.memory_space<vmem>>, %arg2: memref<128x128xf32, #tpu.memory_space<vmem>>, %arg3: memref<1x128xf32, #tpu.memory_space<vmem>>, %arg4: memref<64x128xf32, #tpu.memory_space<vmem>>, %arg5: memref<64x128xf32, #tpu.memory_space<vmem>>) attributes {dimension_semantics = [#tpu.dimension_semantics<parallel>], iteration_bounds = array<i64: 2>, scalar_prefetch = 0 : i64, scratch_operands = 0 : i64, tpu.core_type = #tpu.core_type<tc>, window_params = [{transform_indices = @transform_0, window_bounds = array<i64: 64, 128>}, {pipeline_mode = #tpu.pipeline_mode<synchronous>, transform_indices = @transform_1, window_bounds = array<i64: 128, 128>}, {pipeline_mode = #tpu.pipeline_mode<synchronous>, transform_indices = @transform_2, window_bounds = array<i64: 1, 128>}, {transform_indices = @transform_3, window_bounds = array<i64: 64, 128>}, {transform_indices = @transform_4, window_bounds = array<i64: 64, 128>}]} {
    %c0 = arith.constant 0 : index
    %c0_0 = arith.constant 0 : index
    %0 = vector.load %arg1[%c0, %c0_0] : memref<64x128xf32, #tpu.memory_space<vmem>>, vector<64x128xf32>
    %c0_1 = arith.constant 0 : index
    %c0_2 = arith.constant 0 : index
    %1 = vector.load %arg2[%c0_1, %c0_2] : memref<128x128xf32, #tpu.memory_space<vmem>>, vector<128x128xf32>
    %cst = arith.constant dense<0.000000e+00> : vector<64x128xf32>
    %2 = tpu.matmul %0, %1, %cst {dimension_numbers = #tpu.dot_dimension_numbers<[1], [0], [0], [1], [0, 0, 1, 1], [], []>} : vector<64x128xf32>, vector<128x128xf32>, vector<64x128xf32> -> vector<64x128xf32>
    %c0_3 = arith.constant 0 : index
    %c0_4 = arith.constant 0 : index
    %3 = vector.load %arg3[%c0_3, %c0_4] : memref<1x128xf32, #tpu.memory_space<vmem>>, vector<1x128xf32>
    %4 = vector.broadcast %3 : vector<1x128xf32> to vector<64x128xf32>
    %5 = arith.addf %2, %4 : vector<64x128xf32>
    %c0_5 = arith.constant 0 : index
    %c0_6 = arith.constant 0 : index
    %6 = vector.load %arg4[%c0_5, %c0_6] : memref<64x128xf32, #tpu.memory_space<vmem>>, vector<64x128xf32>
    %7 = arith.addf %5, %6 : vector<64x128xf32>
    %cst_7 = arith.constant 5.000000e-01 : f32
    %8 = vector.broadcast %cst_7 : f32 to vector<64x128xf32>
    %9 = arith.mulf %8, %7 : vector<64x128xf32>
    %cst_8 = arith.constant 0.707106769 : f32
    %10 = vector.broadcast %cst_8 : f32 to vector<64x128xf32>
    %11 = arith.mulf %7, %10 : vector<64x128xf32>
    %cst_9 = arith.constant 0.000000e+00 : f32
    %12 = vector.broadcast %cst_9 : f32 to vector<64x128xf32>
    %13 = arith.cmpf oge, %11, %12 : vector<64x128xf32>
    %cst_10 = arith.constant 1.000000e+00 : f32
    %cst_11 = arith.constant -1.000000e+00 : f32
    %14 = vector.broadcast %cst_10 : f32 to vector<64x128xf32>
    %15 = vector.broadcast %cst_11 : f32 to vector<64x128xf32>
    %16 = arith.select %13, %14, %15 : vector<64x128xi1>, vector<64x128xf32>
    %17 = math.absf %11 : vector<64x128xf32>
    %cst_12 = arith.constant 0.327591091 : f32
    %18 = vector.broadcast %cst_12 : f32 to vector<64x128xf32>
    %19 = arith.mulf %18, %17 : vector<64x128xf32>
    %cst_13 = arith.constant 1.000000e+00 : f32
    %20 = vector.broadcast %cst_13 : f32 to vector<64x128xf32>
    %21 = arith.addf %20, %19 : vector<64x128xf32>
    %cst_14 = arith.constant 1.000000e+00 : f32
    %22 = vector.broadcast %cst_14 : f32 to vector<64x128xf32>
    %23 = arith.divf %22, %21 : vector<64x128xf32>
    %cst_15 = arith.constant 1.06140542 : f32
    %24 = vector.broadcast %cst_15 : f32 to vector<64x128xf32>
    %25 = arith.mulf %24, %23 : vector<64x128xf32>
    %cst_16 = arith.constant -1.45315206 : f32
    %26 = vector.broadcast %cst_16 : f32 to vector<64x128xf32>
    %27 = arith.addf %25, %26 : vector<64x128xf32>
    %28 = arith.mulf %27, %23 : vector<64x128xf32>
    %cst_17 = arith.constant 1.42141378 : f32
    %29 = vector.broadcast %cst_17 : f32 to vector<64x128xf32>
    %30 = arith.addf %28, %29 : vector<64x128xf32>
    %31 = arith.mulf %30, %23 : vector<64x128xf32>
    %cst_18 = arith.constant -0.284496725 : f32
    %32 = vector.broadcast %cst_18 : f32 to vector<64x128xf32>
    %33 = arith.addf %31, %32 : vector<64x128xf32>
    %34 = arith.mulf %33, %23 : vector<64x128xf32>
    %cst_19 = arith.constant 0.254829586 : f32
    %35 = vector.broadcast %cst_19 : f32 to vector<64x128xf32>
    %36 = arith.addf %34, %35 : vector<64x128xf32>
    %37 = arith.mulf %36, %23 : vector<64x128xf32>
    %cst_20 = arith.constant 0.000000e+00 : f32
    %38 = vector.broadcast %cst_20 : f32 to vector<64x128xf32>
    %39 = arith.subf %38, %17 : vector<64x128xf32>
    %40 = arith.mulf %39, %17 : vector<64x128xf32>
    %41 = math.exp %40 : vector<64x128xf32>
    %42 = arith.mulf %37, %41 : vector<64x128xf32>
    %cst_21 = arith.constant 1.000000e+00 : f32
    %43 = vector.broadcast %cst_21 : f32 to vector<64x128xf32>
    %44 = arith.subf %43, %42 : vector<64x128xf32>
    %45 = arith.mulf %16, %44 : vector<64x128xf32>
    %cst_22 = arith.constant 1.000000e+00 : f32
    %46 = vector.broadcast %cst_22 : f32 to vector<64x128xf32>
    %47 = arith.addf %46, %45 : vector<64x128xf32>
    %48 = arith.mulf %9, %47 : vector<64x128xf32>
    %c0_23 = arith.constant 0 : index
    %c0_24 = arith.constant 0 : index
    %49 = vector.load %arg5[%c0_23, %c0_24] : memref<64x128xf32, #tpu.memory_space<vmem>>, vector<64x128xf32>
    tpu.vector_store %arg5[%c0_23, %c0_24], %48 {strides = array<i32>} : memref<64x128xf32, #tpu.memory_space<vmem>>, vector<64x128xf32>,
    return
  }
  func.func @transform_0(%arg0: i32) -> (i32, i32) {
    %c0_i32 = arith.constant 0 : i32
    %c0_i32_0 = arith.constant 0 : i32
    return %arg0, %c0_i32 : i32, i32
  }
  func.func @transform_1(%arg0: i32) -> (i32, i32) {
    %c0_i32 = arith.constant 0 : i32
    %c0_i32_0 = arith.constant 0 : i32
    %c0_i32_1 = arith.constant 0 : i32
    return %c0_i32, %c0_i32_0 : i32, i32
  }
  func.func @transform_2(%arg0: i32) -> (i32, i32) {
    %c0_i32 = arith.constant 0 : i32
    %c0_i32_0 = arith.constant 0 : i32
    %c0_i32_1 = arith.constant 0 : i32
    return %c0_i32, %c0_i32_0 : i32, i32
  }
  func.func @transform_3(%arg0: i32) -> (i32, i32) {
    %c0_i32 = arith.constant 0 : i32
    %c0_i32_0 = arith.constant 0 : i32
    return %arg0, %c0_i32 : i32, i32
  }
  func.func @transform_4(%arg0: i32) -> (i32, i32) {
    %c0_i32 = arith.constant 0 : i32
    %c0_i32_0 = arith.constant 0 : i32
    return %arg0, %c0_i32 : i32, i32
  }
}

module attributes {stable_mosaic.version = 11 : i64} {
  func.func @_pw_add_kernel(%arg0: i32, %arg1: memref<64x128xf32, #tpu.memory_space<vmem>>, %arg2: memref<128x128xf32, #tpu.memory_space<vmem>>, %arg3: memref<1x128xf32, #tpu.memory_space<vmem>>, %arg4: memref<64x128xf32, #tpu.memory_space<vmem>>, %arg5: memref<64x128xf32, #tpu.memory_space<vmem>>) attributes {dimension_semantics = [#tpu.dimension_semantics<parallel>], iteration_bounds = array<i64: 2>, scalar_prefetch = 0 : i64, scratch_operands = 0 : i64, tpu.core_type = #tpu.core_type<tc>, window_params = [{transform_indices = @transform_0, window_bounds = array<i64: 64, 128>}, {pipeline_mode = #tpu.pipeline_mode<synchronous>, transform_indices = @transform_1, window_bounds = array<i64: 128, 128>}, {pipeline_mode = #tpu.pipeline_mode<synchronous>, transform_indices = @transform_2, window_bounds = array<i64: 1, 128>}, {transform_indices = @transform_3, window_bounds = array<i64: 64, 128>}, {transform_indices = @transform_4, window_bounds = array<i64: 64, 128>}]} {
    %c0 = arith.constant 0 : index
    %c0_0 = arith.constant 0 : index
    %0 = vector.load %arg1[%c0, %c0_0] : memref<64x128xf32, #tpu.memory_space<vmem>>, vector<64x128xf32>
    %c0_1 = arith.constant 0 : index
    %c0_2 = arith.constant 0 : index
    %1 = vector.load %arg2[%c0_1, %c0_2] : memref<128x128xf32, #tpu.memory_space<vmem>>, vector<128x128xf32>
    %cst = arith.constant dense<0.000000e+00> : vector<64x128xf32>
    %2 = tpu.matmul %0, %1, %cst {dimension_numbers = #tpu.dot_dimension_numbers<[1], [0], [0], [1], [0, 0, 1, 1], [], []>} : vector<64x128xf32>, vector<128x128xf32>, vector<64x128xf32> -> vector<64x128xf32>
    %c0_3 = arith.constant 0 : index
    %c0_4 = arith.constant 0 : index
    %3 = vector.load %arg3[%c0_3, %c0_4] : memref<1x128xf32, #tpu.memory_space<vmem>>, vector<1x128xf32>
    %4 = vector.broadcast %3 : vector<1x128xf32> to vector<64x128xf32>
    %5 = arith.addf %2, %4 : vector<64x128xf32>
    %c0_5 = arith.constant 0 : index
    %c0_6 = arith.constant 0 : index
    %6 = vector.load %arg4[%c0_5, %c0_6] : memref<64x128xf32, #tpu.memory_space<vmem>>, vector<64x128xf32>
    %7 = arith.addf %5, %6 : vector<64x128xf32>
    %c0_7 = arith.constant 0 : index
    %c0_8 = arith.constant 0 : index
    %8 = vector.load %arg5[%c0_7, %c0_8] : memref<64x128xf32, #tpu.memory_space<vmem>>, vector<64x128xf32>
    tpu.vector_store %arg5[%c0_7, %c0_8], %7 {strides = array<i32>} : memref<64x128xf32, #tpu.memory_space<vmem>>, vector<64x128xf32>,
    return
  }
  func.func @transform_0(%arg0: i32) -> (i32, i32) {
    %c0_i32 = arith.constant 0 : i32
    %c0_i32_0 = arith.constant 0 : i32
    return %arg0, %c0_i32 : i32, i32
  }
  func.func @transform_1(%arg0: i32) -> (i32, i32) {
    %c0_i32 = arith.constant 0 : i32
    %c0_i32_0 = arith.constant 0 : i32
    %c0_i32_1 = arith.constant 0 : i32
    return %c0_i32, %c0_i32_0 : i32, i32
  }
  func.func @transform_2(%arg0: i32) -> (i32, i32) {
    %c0_i32 = arith.constant 0 : i32
    %c0_i32_0 = arith.constant 0 : i32
    %c0_i32_1 = arith.constant 0 : i32
    return %c0_i32, %c0_i32_0 : i32, i32
  }
  func.func @transform_3(%arg0: i32) -> (i32, i32) {
    %c0_i32 = arith.constant 0 : i32
    %c0_i32_0 = arith.constant 0 : i32
    return %arg0, %c0_i32 : i32, i32
  }
  func.func @transform_4(%arg0: i32) -> (i32, i32) {
    %c0_i32 = arith.constant 0 : i32
    %c0_i32_0 = arith.constant 0 : i32
    return %arg0, %c0_i32 : i32, i32
  }
}

module attributes {stable_mosaic.version = 11 : i64} {
  func.func @_fc_tail_kernel(%arg0: i32, %arg1: memref<64x128xf32, #tpu.memory_space<vmem>>, %arg2: memref<128x512xf32, #tpu.memory_space<vmem>>, %arg3: memref<1x512xf32, #tpu.memory_space<vmem>>, %arg4: memref<512x12xf32, #tpu.memory_space<vmem>>, %arg5: memref<1x12xf32, #tpu.memory_space<vmem>>, %arg6: memref<64x12xf32, #tpu.memory_space<vmem>>) attributes {dimension_semantics = [#tpu.dimension_semantics<parallel>], iteration_bounds = array<i64: 2>, scalar_prefetch = 0 : i64, scratch_operands = 0 : i64, tpu.core_type = #tpu.core_type<tc>, window_params = [{transform_indices = @transform_0, window_bounds = array<i64: 64, 128>}, {pipeline_mode = #tpu.pipeline_mode<synchronous>, transform_indices = @transform_1, window_bounds = array<i64: 128, 512>}, {pipeline_mode = #tpu.pipeline_mode<synchronous>, transform_indices = @transform_2, window_bounds = array<i64: 1, 512>}, {pipeline_mode = #tpu.pipeline_mode<synchronous>, transform_indices = @transform_3, window_bounds = array<i64: 512, 12>}, {pipeline_mode = #tpu.pipeline_mode<synchronous>, transform_indices = @transform_4, window_bounds = array<i64: 1, 12>}, {transform_indices = @transform_5, window_bounds = array<i64: 64, 12>}]} {
    %c0 = arith.constant 0 : index
    %c0_0 = arith.constant 0 : index
    %0 = vector.load %arg1[%c0, %c0_0] : memref<64x128xf32, #tpu.memory_space<vmem>>, vector<64x128xf32>
    %c0_1 = arith.constant 0 : index
    %c0_2 = arith.constant 0 : index
    %1 = vector.load %arg2[%c0_1, %c0_2] : memref<128x512xf32, #tpu.memory_space<vmem>>, vector<128x512xf32>
    %cst = arith.constant dense<0.000000e+00> : vector<64x512xf32>
    %2 = tpu.matmul %0, %1, %cst {dimension_numbers = #tpu.dot_dimension_numbers<[1], [0], [0], [1], [0, 0, 1, 1], [], []>} : vector<64x128xf32>, vector<128x512xf32>, vector<64x512xf32> -> vector<64x512xf32>
    %c0_3 = arith.constant 0 : index
    %c0_4 = arith.constant 0 : index
    %3 = vector.load %arg3[%c0_3, %c0_4] : memref<1x512xf32, #tpu.memory_space<vmem>>, vector<1x512xf32>
    %4 = vector.broadcast %3 : vector<1x512xf32> to vector<64x512xf32>
    %5 = arith.addf %2, %4 : vector<64x512xf32>
    %cst_5 = arith.constant 5.000000e-01 : f32
    %6 = vector.broadcast %cst_5 : f32 to vector<64x512xf32>
    %7 = arith.mulf %6, %5 : vector<64x512xf32>
    %cst_6 = arith.constant 0.707106769 : f32
    %8 = vector.broadcast %cst_6 : f32 to vector<64x512xf32>
    %9 = arith.mulf %5, %8 : vector<64x512xf32>
    %cst_7 = arith.constant 0.000000e+00 : f32
    %10 = vector.broadcast %cst_7 : f32 to vector<64x512xf32>
    %11 = arith.cmpf oge, %9, %10 : vector<64x512xf32>
    %cst_8 = arith.constant 1.000000e+00 : f32
    %cst_9 = arith.constant -1.000000e+00 : f32
    %12 = vector.broadcast %cst_8 : f32 to vector<64x512xf32>
    %13 = vector.broadcast %cst_9 : f32 to vector<64x512xf32>
    %14 = arith.select %11, %12, %13 : vector<64x512xi1>, vector<64x512xf32>
    %15 = math.absf %9 : vector<64x512xf32>
    %cst_10 = arith.constant 0.327591091 : f32
    %16 = vector.broadcast %cst_10 : f32 to vector<64x512xf32>
    %17 = arith.mulf %16, %15 : vector<64x512xf32>
    %cst_11 = arith.constant 1.000000e+00 : f32
    %18 = vector.broadcast %cst_11 : f32 to vector<64x512xf32>
    %19 = arith.addf %18, %17 : vector<64x512xf32>
    %cst_12 = arith.constant 1.000000e+00 : f32
    %20 = vector.broadcast %cst_12 : f32 to vector<64x512xf32>
    %21 = arith.divf %20, %19 : vector<64x512xf32>
    %cst_13 = arith.constant 1.06140542 : f32
    %22 = vector.broadcast %cst_13 : f32 to vector<64x512xf32>
    %23 = arith.mulf %22, %21 : vector<64x512xf32>
    %cst_14 = arith.constant -1.45315206 : f32
    %24 = vector.broadcast %cst_14 : f32 to vector<64x512xf32>
    %25 = arith.addf %23, %24 : vector<64x512xf32>
    %26 = arith.mulf %25, %21 : vector<64x512xf32>
    %cst_15 = arith.constant 1.42141378 : f32
    %27 = vector.broadcast %cst_15 : f32 to vector<64x512xf32>
    %28 = arith.addf %26, %27 : vector<64x512xf32>
    %29 = arith.mulf %28, %21 : vector<64x512xf32>
    %cst_16 = arith.constant -0.284496725 : f32
    %30 = vector.broadcast %cst_16 : f32 to vector<64x512xf32>
    %31 = arith.addf %29, %30 : vector<64x512xf32>
    %32 = arith.mulf %31, %21 : vector<64x512xf32>
    %cst_17 = arith.constant 0.254829586 : f32
    %33 = vector.broadcast %cst_17 : f32 to vector<64x512xf32>
    %34 = arith.addf %32, %33 : vector<64x512xf32>
    %35 = arith.mulf %34, %21 : vector<64x512xf32>
    %cst_18 = arith.constant 0.000000e+00 : f32
    %36 = vector.broadcast %cst_18 : f32 to vector<64x512xf32>
    %37 = arith.subf %36, %15 : vector<64x512xf32>
    %38 = arith.mulf %37, %15 : vector<64x512xf32>
    %39 = math.exp %38 : vector<64x512xf32>
    %40 = arith.mulf %35, %39 : vector<64x512xf32>
    %cst_19 = arith.constant 1.000000e+00 : f32
    %41 = vector.broadcast %cst_19 : f32 to vector<64x512xf32>
    %42 = arith.subf %41, %40 : vector<64x512xf32>
    %43 = arith.mulf %14, %42 : vector<64x512xf32>
    %cst_20 = arith.constant 1.000000e+00 : f32
    %44 = vector.broadcast %cst_20 : f32 to vector<64x512xf32>
    %45 = arith.addf %44, %43 : vector<64x512xf32>
    %46 = arith.mulf %7, %45 : vector<64x512xf32>
    %c0_21 = arith.constant 0 : index
    %c0_22 = arith.constant 0 : index
    %47 = vector.load %arg4[%c0_21, %c0_22] : memref<512x12xf32, #tpu.memory_space<vmem>>, vector<512x12xf32>
    %cst_23 = arith.constant dense<0.000000e+00> : vector<64x12xf32>
    %48 = tpu.matmul %46, %47, %cst_23 {dimension_numbers = #tpu.dot_dimension_numbers<[1], [0], [0], [1], [0, 0, 1, 1], [], []>} : vector<64x512xf32>, vector<512x12xf32>, vector<64x12xf32> -> vector<64x12xf32>
    %c0_24 = arith.constant 0 : index
    %c0_25 = arith.constant 0 : index
    %49 = vector.load %arg5[%c0_24, %c0_25] : memref<1x12xf32, #tpu.memory_space<vmem>>, vector<1x12xf32>
    %50 = vector.broadcast %49 : vector<1x12xf32> to vector<64x12xf32>
    %51 = arith.addf %48, %50 : vector<64x12xf32>
    %c0_26 = arith.constant 0 : index
    %c0_27 = arith.constant 0 : index
    %52 = vector.load %arg6[%c0_26, %c0_27] : memref<64x12xf32, #tpu.memory_space<vmem>>, vector<64x12xf32>
    tpu.vector_store %arg6[%c0_26, %c0_27], %51 {strides = array<i32>} : memref<64x12xf32, #tpu.memory_space<vmem>>, vector<64x12xf32>,
    return
  }
  func.func @transform_0(%arg0: i32) -> (i32, i32) {
    %c0_i32 = arith.constant 0 : i32
    %c0_i32_0 = arith.constant 0 : i32
    return %arg0, %c0_i32 : i32, i32
  }
  func.func @transform_1(%arg0: i32) -> (i32, i32) {
    %c0_i32 = arith.constant 0 : i32
    %c0_i32_0 = arith.constant 0 : i32
    %c0_i32_1 = arith.constant 0 : i32
    return %c0_i32, %c0_i32_0 : i32, i32
  }
  func.func @transform_2(%arg0: i32) -> (i32, i32) {
    %c0_i32 = arith.constant 0 : i32
    %c0_i32_0 = arith.constant 0 : i32
    %c0_i32_1 = arith.constant 0 : i32
    return %c0_i32, %c0_i32_0 : i32, i32
  }
  func.func @transform_3(%arg0: i32) -> (i32, i32) {
    %c0_i32 = arith.constant 0 : i32
    %c0_i32_0 = arith.constant 0 : i32
    %c0_i32_1 = arith.constant 0 : i32
    return %c0_i32, %c0_i32_0 : i32, i32
  }
  func.func @transform_4(%arg0: i32) -> (i32, i32) {
    %c0_i32 = arith.constant 0 : i32
    %c0_i32_0 = arith.constant 0 : i32
    %c0_i32_1 = arith.constant 0 : i32
    return %c0_i32, %c0_i32_0 : i32, i32
  }
  func.func @transform_5(%arg0: i32) -> (i32, i32) {
    %c0_i32 = arith.constant 0 : i32
    %c0_i32_0 = arith.constant 0 : i32
    return %arg0, %c0_i32 : i32, i32
  }
}

</mosaic_0001>

<llo_original>
// kernel: fno2d_forward.10
$region0: #{fno2d_forward.10}
  #allocation0 [shape = 'u32[]', space=smem, size = 0x4, offset = 0x4, fixed_abs, tag = 'smem constant byte address 0x4 - core index']
  #allocation1 [shape = 'u32[72,128]{1,0:T(1,128)}', space=vmem, size = 0x9000, scoped, tag = 'internal scratch']
  %s0 = inlined_call_operand.vmem [shape: f32[128,16], index: 0, kind: input, shape index: {}]
  %s1 = inlined_call_operand.hbm [shape: f32[16,128], index: 1, kind: input, shape index: {}]
  %s2 = inlined_call_operand.hbm [shape: f32[1,128], index: 2, kind: input, shape index: {}]
  %s3 = inlined_call_operand.vmem [shape: f32[128,128], index: 3, kind: output, shape index: {}]
  %s4 = sld [smem:[#allocation0]]
  $region53: #{fno2d_forward.10} parent=0
    _
  %s6 = ssub.s32 1, %s4
  %s7 = scalar_select 0, %s6, %s4
  $region1: #{fno2d_forward.10} parent=0
    #allocation2 [shape = 'u8[8192]{0}', space=vmem, size = 0x2000, scoped, tag = 'input window, operand 1, single buffered']
    #allocation3 [shape = 's32[2]{0}', space=sflag, size = 0x8, scoped, tag = 'scoped memory for fno2d_forward.10']
    #allocation4 [shape = 'u8[512]{0}', space=vmem, size = 0x400, scoped, tag = 'input window, operand 2, single buffered']
    #allocation5 [shape = 's32[1]{0}', space=sflag, size = 0x4, scoped, tag = 'scoped memory for fno2d_forward.10']
    %8 = vsyncpa [#allocation3], 0
    %9 = vsyncpa [#allocation5], 0
    loop: start=0, step=1, limit=4
    $region2: #{fno2d_forward.10} parent=1 // loop_pre_header
      _
    $region3: #{fno2d_forward.10} parent=1 // loop_header
      %s11 = sphi 0, %s15
      %p12 = scmp.ge.s32.totalorder %s11, 4
      %s21 = sphi 0, %s23
      %s24 = sphi 0, %s21
      %s25 = sphi 0, %s24
      %s41 = sphi 0, %s25
      %s45 = sphi 0, %s45
      %s47 = sphi 0, %s45
      %s48 = sphi 0, %s47
      %s62 = sphi 0, %s48
      %s66 = sphi 0, %s66
      %s68 = sphi 0, %s66
      %s69 = sphi 0, %s68
      %s83 = sphi 0, %s69
      %s89 = sphi 0, %s91
      %s92 = sphi 0, %s89
      %s93 = sphi 0, %s92
      %s109 = sphi 0, %s93
    $region4: #{fno2d_forward.10} parent=1 // loop_header_branch
      %14 = sbr.rel (%p12) target = $region8
    $region5: #{fno2d_forward.10} parent=1 // loop_body
      %s16 = ssub.s32 %s11, 1
      %s17 = ssub.s32 %s11, 2
      %s18 = sadd.s32 %s11, 1
      %s19 = ssub.s32 %s11, %s18
      %p20 = scmp.eq.s32.totalorder %s19, 0
      %s22 = sadd.s32 %s21, 1
      %s23 = scalar_select %p20, %s21, %s22
      %p26 = pneg %p20
      %p27 = scmp.eq.s32.totalorder %s11, 1
      %p28 = por %p26, %p27
      %p29 = scmp.ne.s32.totalorder %s21, %s24
      %p30 = scmp.eq.s32.totalorder %s11, 0
      %p31 = por %p29, %p30
      %p32 = scmp.ne.s32.totalorder %s21, %s24
      %p33 = scmp.eq.s32.totalorder %s16, 1
      %p34 = por %p32, %p33
      %p35 = scmp.ne.s32.totalorder %s24, %s25
      %p36 = scmp.eq.s32.totalorder %s16, 0
      %p37 = por %p35, %p36
      %p38 = scmp.ne.s32.totalorder %s24, %s25
      %p39 = scmp.eq.s32.totalorder %s17, 1
      %p40 = por %p38, %p39
      %p42 = scmp.ne.s32.totalorder %s25, %s41
      %p43 = scmp.eq.s32.totalorder %s17, 0
      %p44 = por %p42, %p43
      %s46 = sadd.s32 %s45, 1
      %p49 = scmp.eq.s32.totalorder %s11, 1
      %p50 = scmp.ne.s32.totalorder %s45, %s47
      %p51 = scmp.eq.s32.totalorder %s11, 0
      %p52 = por %p50, %p51
      %p53 = scmp.ne.s32.totalorder %s45, %s47
      %p54 = scmp.eq.s32.totalorder %s16, 1
      %p55 = por %p53, %p54
      %p56 = scmp.ne.s32.totalorder %s47, %s48
      %p57 = scmp.eq.s32.totalorder %s16, 0
      %p58 = por %p56, %p57
      %p59 = scmp.ne.s32.totalorder %s47, %s48
      %p60 = scmp.eq.s32.totalorder %s17, 1
      %p61 = por %p59, %p60
      %p63 = scmp.ne.s32.totalorder %s48, %s62
      %p64 = scmp.eq.s32.totalorder %s17, 0
      %p65 = por %p63, %p64
      %s67 = sadd.s32 %s66, 1
      %p70 = scmp.eq.s32.totalorder %s11, 1
      %p71 = scmp.ne.s32.totalorder %s66, %s68
      %p72 = scmp.eq.s32.totalorder %s11, 0
      %p73 = por %p71, %p72
      %p74 = scmp.ne.s32.totalorder %s66, %s68
      %p75 = scmp.eq.s32.totalorder %s16, 1
      %p76 = por %p74, %p75
      %p77 = scmp.ne.s32.totalorder %s68, %s69
      %p78 = scmp.eq.s32.totalorder %s16, 0
      %p79 = por %p77, %p78
      %p80 = scmp.ne.s32.totalorder %s68, %s69
      %p81 = scmp.eq.s32.totalorder %s17, 1
      %p82 = por %p80, %p81
      %p84 = scmp.ne.s32.totalorder %s69, %s83
      %p85 = scmp.eq.s32.totalorder %s17, 0
      %p86 = por %p84, %p85
      %s87 = ssub.s32 %s11, %s18
      %p88 = scmp.eq.s32.totalorder %s87, 0
      %s90 = sadd.s32 %s89, 1
      %s91 = scalar_select %p88, %s89, %s90
      %p94 = pneg %p88
      %p95 = scmp.eq.s32.totalorder %s11, 1
      %p96 = por %p94, %p95
      %p97 = scmp.ne.s32.totalorder %s89, %s92
      %p98 = scmp.eq.s32.totalorder %s11, 0
      %p99 = por %p97, %p98
      %p100 = scmp.ne.s32.totalorder %s89, %s92
      %p101 = scmp.eq.s32.totalorder %s16, 1
      %p102 = por %p100, %p101
      %p103 = scmp.ne.s32.totalorder %s92, %s93
      %p104 = scmp.eq.s32.totalorder %s16, 0
      %p105 = por %p103, %p104
      %p106 = scmp.ne.s32.totalorder %s92, %s93
      %p107 = scmp.eq.s32.totalorder %s17, 1
      %p108 = por %p106, %p107
      %p110 = scmp.ne.s32.totalorder %s93, %s109
      %p111 = scmp.eq.s32.totalorder %s17, 0
      %p112 = por %p110, %p111
      %p113 = scmp.le.s32.totalorder 1, %s11
      %p114 = scmp.lt.s32.totalorder %s11, 3
      %p115 = pnand %p113, %p114
      %p116 = pneg %p115
      // Predicated region
      $region9: #{fno2d_forward.10} parent=5 // pred_check
        _
      $region10: #{fno2d_forward.10} parent=5 // pred_check_branch
        %118 = sbr.rel (%p115) target = $region12
      $region11: #{fno2d_forward.10} parent=5 // pred_region
        %s119 = ssub.s32 %s11, 1
        // Predicated region
        $region13: #{fno2d_forward.10} parent=11 // pred_check
          %p120 = pneg %p58
        $region14: #{fno2d_forward.10} parent=11 // pred_check_branch
          %122 = sbr.rel (%p120) target = $region16
        $region15: #{fno2d_forward.10} parent=11 // pred_region
          %124 = vsyncadd [#allocation3], 0
          %s125 = sshll.u32 %s1, 4
          %s126 = int_to_ptr.hbm [resolvable:$true] %s125
          %s127 = sshll.u32 [#allocation2], 4
          %s128 = int_to_ptr.vmem [resolvable:$true] %s127
          %133 = dma.hbm_to_vmem [thread:$0]  %s126, 256, %s128, [#allocation3], 128, 128, 8
        $region16: #{fno2d_forward.10} parent=11 // pred_fallthru
          _
        // Predicated region
        $region17: #{fno2d_forward.10} parent=11 // pred_check
          %p134 = pneg %p79
        $region18: #{fno2d_forward.10} parent=11 // pred_check_branch
          %136 = sbr.rel (%p134) target = $region20
        $region19: #{fno2d_forward.10} parent=11 // pred_region
          %138 = vsyncadd [#allocation5], 0
          %s140 = sshll.u32 %s2, 4
          %s141 = int_to_ptr.hbm [resolvable:$true] %s140
          %s142 = sshll.u32 [#allocation4], 4
          %s143 = int_to_ptr.vmem [resolvable:$true] %s142
          %145 = dma.hbm_to_vmem [thread:$0]  %s141, 16, %s143, [#allocation5]
        $region20: #{fno2d_forward.10} parent=11 // pred_fallthru
          _
      $region12: #{fno2d_forward.10} parent=5 // pred_fallthru
        _
      %p146 = scmp.lt.s32.totalorder %s11, 2
      // Predicated region
      $region21: #{fno2d_forward.10} parent=5 // pred_check
        %p147 = pneg %p146
      $region22: #{fno2d_forward.10} parent=5 // pred_check_branch
        %149 = sbr.rel (%p147) target = $region24
      $region23: #{fno2d_forward.10} parent=5 // pred_region
        // Predicated region
        $region25: #{fno2d_forward.10} parent=23 // pred_check
          %p150 = pneg %p31
        $region26: #{fno2d_forward.10} parent=23 // pred_check_branch
          %152 = sbr.rel (%p150) target = $region28
        $region27: #{fno2d_forward.10} parent=23 // pred_region
          %s153 = smul.u32 8, %s11
          %p154 = scmp.lt.s32.totalorder %s153, 15
          %s155 = scalar_select %p154, %s153, 15
          %s156 = smul.addr %s155, 8
          %s157 = scalar_lea.vmem %s0, %s156
          %s158 = smul.u32 8, %s11
        $region28: #{fno2d_forward.10} parent=23 // pred_fallthru
          _
      $region24: #{fno2d_forward.10} parent=5 // pred_fallthru
        _
      %p159 = scmp.le.s32.totalorder 1, %s11
      %p160 = scmp.lt.s32.totalorder %s11, 3
      %p161 = pnand %p159, %p160
      %p162 = pneg %p161
      // Predicated region
      $region29: #{fno2d_forward.10} parent=5 // pred_check
        _
      $region30: #{fno2d_forward.10} parent=5 // pred_check_branch
        %164 = sbr.rel (%p161) target = $region32
      $region31: #{fno2d_forward.10} parent=5 // pred_region
        %s165 = ssub.s32 %s11, 1
        // Predicated region
        $region33: #{fno2d_forward.10} parent=31 // pred_check
          %p166 = pneg %p58
        $region34: #{fno2d_forward.10} parent=31 // pred_check_branch
          %168 = sbr.rel (%p166) target = $region36
        $region35: #{fno2d_forward.10} parent=31 // pred_region
          %170 = dma.done [#allocation3], 256
        $region36: #{fno2d_forward.10} parent=31 // pred_fallthru
          _
        // Predicated region
        $region37: #{fno2d_forward.10} parent=31 // pred_check
          %p171 = pneg %p79
        $region38: #{fno2d_forward.10} parent=31 // pred_check_branch
          %173 = sbr.rel (%p171) target = $region40
        $region39: #{fno2d_forward.10} parent=31 // pred_region
          %175 = dma.done [#allocation5], 16
        $region40: #{fno2d_forward.10} parent=31 // pred_fallthru
          _
        %s176 = smul.u32 8, %s16
        %p177 = scmp.lt.s32.totalorder %s176, 15
        %s178 = scalar_select %p177, %s176, 15
        %s179 = smul.addr %s178, 8
        %s180 = scalar_lea.vmem %s0, %s179
        %p181 = pneg %p37
        %p182 = pneg %p34
        %p183 = pneg %p58
        %p184 = pneg %p55
        %p185 = pneg %p79
        %p186 = pneg %p76
        %p187 = pneg %p105
        %p188 = pneg %p102
        %s189 = smul.u32 8, %s16
        %p190 = scmp.lt.s32.totalorder %s189, 15
        %s191 = scalar_select %p190, %s189, 15
        %s192 = smul.addr %s191, 8
        %s193 = scalar_lea.vmem %s3, %s192
        %s194 = smul.u32 8, %s16
        %p195 = scmp.lt.s32.totalorder %s194, 15
        %s196 = scalar_select %p195, %s194, 15
        %s197 = smul.addr %s196, 8
        %s198 = scalar_lea.vmem %s0, %s197
        %s199 = smul.u32 8, %s16
        %s200 = smul.u32 8, %s16
        %p201 = scmp.lt.s32.totalorder %s200, 15
        %s202 = scalar_select %p201, %s200, 15
        %s203 = smul.addr %s202, 8
        %s204 = scalar_lea.vmem %s3, %s203
        %s205 = smul.u32 8, %s16
        %v206 = vld [vmem:[%s198] sm:$0xff]
        %v207 = vld [vmem:[%s198 + $0x8] sm:$0xff]
        %v208 = vld [vmem:[%s198 + $0x10] sm:$0xff]
        %v209 = vld [vmem:[%s198 + $0x18] sm:$0xff]
        %v210 = vld [vmem:[%s198 + $0x20] sm:$0xff]
        %v211 = vld [vmem:[%s198 + $0x28] sm:$0xff]
        %v212 = vld [vmem:[%s198 + $0x30] sm:$0xff]
        %v213 = vld [vmem:[%s198 + $0x38] sm:$0xff]
        %v214 = vld [vmem:[#allocation2] sm:$0xff]
        %v215 = vld [vmem:[#allocation2 + $0x8] sm:$0xff]
        %v216 = vld [vmem:[#allocation4] sm:$0x1]
        %v218 = vperm.slane %v216, 0
        %vm220 = vcmask 130048
        %v222 = vsel %vm220, %v206, 0
        %v225 = vsel %vm220, %v207, 0
        %v228 = vsel %vm220, %v208, 0
        %v231 = vsel %vm220, %v209, 0
        %v234 = vsel %vm220, %v210, 0
        %v237 = vsel %vm220, %v211, 0
        %v240 = vsel %vm220, %v212, 0
        %v243 = vsel %vm220, %v213, 0
        %245 = vmatpush.msra.mxu0 0.0
        %246 = vmatpush.msra.mxu0 0.0
        %247 = vmatpush.msra.mxu0 0.0
        %248 = vmatpush.msra.mxu0 0.0
        %249 = vmatpush.msra.mxu0 0.0
        %250 = vmatpush.msra.mxu0 0.0
        %251 = vmatpush.msra.mxu0 0.0
        %252 = vmatpush.msra.mxu0 0.0
        %253 = vmatpush.msra.mxu0 0.0
        %254 = vmatpush.msra.mxu0 0.0
        %255 = vmatpush.msra.mxu0 0.0
        %256 = vmatpush.msra.mxu0 0.0
        %257 = vmatpush.msra.mxu0 0.0
        %258 = vmatpush.msra.mxu0 0.0
        %259 = vmatpush.msra.mxu0 %v215
        %260 = vmatpush.msra.mxu0 %v214
        %261 = vmatmul.f32.gmra.mxu0 %v222
        %v262 = vpop.f32.mrf.mxu0
        %v263 = vadd.f32 %v218, %v262
        %264 = vmatmul.f32.gmra.mxu0 %v225
        %v265 = vpop.f32.mrf.mxu0
        %v266 = vadd.f32 %v218, %v265
        %267 = vmatmul.f32.gmra.mxu0 %v228
        %v268 = vpop.f32.mrf.mxu0
        %v269 = vadd.f32 %v218, %v268
        %270 = vmatmul.f32.gmra.mxu0 %v231
        %v271 = vpop.f32.mrf.mxu0
        %v272 = vadd.f32 %v218, %v271
        %273 = vmatmul.f32.gmra.mxu0 %v234
        %v274 = vpop.f32.mrf.mxu0
        %v275 = vadd.f32 %v218, %v274
        %276 = vmatmul.f32.gmra.mxu0 %v237
        %v277 = vpop.f32.mrf.mxu0
        %v278 = vadd.f32 %v218, %v277
        %279 = vmatmul.f32.gmra.mxu0 %v240
        %v280 = vpop.f32.mrf.mxu0
        %v281 = vadd.f32 %v218, %v280
        %282 = vmatmul.f32.gmra.mxu0 %v243
        %v283 = vpop.f32.mrf.mxu0
        %v284 = vadd.f32 %v218, %v283
        %285 = vdwg.mxu0
        %286 = vst [vmem:[%s204] sm:$0xff] %v263
        %287 = vst [vmem:[%s204 + $0x8] sm:$0xff] %v266
        %288 = vst [vmem:[%s204 + $0x10] sm:$0xff] %v269
        %289 = vst [vmem:[%s204 + $0x18] sm:$0xff] %v272
        %290 = vst [vmem:[%s204 + $0x20] sm:$0xff] %v275
        %291 = vst [vmem:[%s204 + $0x28] sm:$0xff] %v278
        %292 = vst [vmem:[%s204 + $0x30] sm:$0xff] %v281
        %293 = vst [vmem:[%s204 + $0x38] sm:$0xff] %v284
        %s294 = smul.u32 8, %s16
        %p295 = scmp.lt.s32.totalorder %s294, 15
        %s296 = scalar_select %p295, %s294, 15
        %s297 = smul.addr %s296, 8
        %s298 = scalar_lea.vmem %s3, %s297
        // Predicated region
        $region41: #{fno2d_forward.10} parent=31 // pred_check
          %p299 = pneg %p102
        $region42: #{fno2d_forward.10} parent=31 // pred_check_branch
          %301 = sbr.rel (%p299) target = $region44
        $region43: #{fno2d_forward.10} parent=31 // pred_region
          %s302 = smul.u32 8, %s16
        $region44: #{fno2d_forward.10} parent=31 // pred_fallthru
          _
      $region32: #{fno2d_forward.10} parent=5 // pred_fallthru
        _
      %p303 = scmp.le.s32.totalorder 2, %s11
      // Predicated region
      $region45: #{fno2d_forward.10} parent=5 // pred_check
        %p304 = pneg %p303
      $region46: #{fno2d_forward.10} parent=5 // pred_check_branch
        %306 = sbr.rel (%p304) target = $region48
      $region47: #{fno2d_forward.10} parent=5 // pred_region
        %s307 = ssub.s32 %s11, 2
        // Predicated region
        $region49: #{fno2d_forward.10} parent=47 // pred_check
          %p308 = pneg %p108
        $region50: #{fno2d_forward.10} parent=47 // pred_check_branch
          %310 = sbr.rel (%p308) target = $region52
        $region51: #{fno2d_forward.10} parent=47 // pred_region
          %s311 = smul.u32 8, %s17
          %p312 = scmp.lt.s32.totalorder %s311, 15
          %s313 = scalar_select %p312, %s311, 15
          %s314 = smul.addr %s313, 8
          %s315 = scalar_lea.vmem %s3, %s314
        $region52: #{fno2d_forward.10} parent=47 // pred_fallthru
          _
      $region48: #{fno2d_forward.10} parent=5 // pred_fallthru
        _
    $region6: #{fno2d_forward.10} parent=1 // loop_footer
      %s15 = sadd.s32 1, %s11
    $region7: #{fno2d_forward.10} parent=1 // loop_footer_branch
      %10 = sbr.rel target = $region3
    $region8: #{fno2d_forward.10} parent=1 // loop_exit
      _
    %316 = vsyncpa [#allocation3], 1
    %s317 = scalar_lea.sflag [#allocation3], 1
    %318 = vsyncpa %s317, 1
    %319 = vsyncpa [#allocation5], 1

// kernel: fno2d_forward.11
$region0: #{fno2d_forward.11}
  #allocation0 [shape = 'u32[]', space=smem, size = 0x4, offset = 0x4, fixed_abs, tag = 'smem constant byte address 0x4 - core index']
  #allocation1 [shape = 'u32[72,128]{1,0:T(1,128)}', space=vmem, size = 0x9000, scoped, tag = 'internal scratch']
  %s0 = inlined_call_operand.vmem [shape: f32[36,2,128], index: 0, kind: input, shape index: {}]
  %s1 = inlined_call_operand.vmem [shape: f32[36,128,128], index: 1, kind: input, shape index: {}]
  %s2 = inlined_call_operand.vmem [shape: f32[36,2,128], index: 2, kind: output, shape index: {}]
  %s3 = sld [smem:[#allocation0]]
  $region41: #{fno2d_forward.11} parent=0
    _
  %s5 = ssub.s32 1, %s3
  %s6 = scalar_select 0, %s5, %s3
  loop: start=0, step=1, limit=4
  $region2: #{fno2d_forward.11} parent=0 // loop_pre_header
    _
  $region3: #{fno2d_forward.11} parent=0 // loop_header
    %s8 = sphi 0, %s12
    %p9 = scmp.ge.s32.totalorder %s8, 4
    %s18 = sphi 0, %s20
    %s21 = sphi 0, %s18
    %s22 = sphi 0, %s21
    %s38 = sphi 0, %s22
    %s44 = sphi 0, %s46
    %s47 = sphi 0, %s44
    %s48 = sphi 0, %s47
    %s64 = sphi 0, %s48
    %s70 = sphi 0, %s72
    %s73 = sphi 0, %s70
    %s74 = sphi 0, %s73
    %s90 = sphi 0, %s74
  $region4: #{fno2d_forward.11} parent=0 // loop_header_branch
    %11 = sbr.rel (%p9) target = $region8
  $region5: #{fno2d_forward.11} parent=0 // loop_body
    %s13 = ssub.s32 %s8, 1
    %s14 = ssub.s32 %s8, 2
    %s15 = sadd.s32 %s8, 1
    %s16 = ssub.s32 %s8, %s15
    %p17 = scmp.eq.s32.totalorder %s16, 0
    %s19 = sadd.s32 %s18, 1
    %s20 = scalar_select %p17, %s18, %s19
    %p23 = pneg %p17
    %p24 = scmp.eq.s32.totalorder %s8, 1
    %p25 = por %p23, %p24
    %p26 = scmp.ne.s32.totalorder %s18, %s21
    %p27 = scmp.eq.s32.totalorder %s8, 0
    %p28 = por %p26, %p27
    %p29 = scmp.ne.s32.totalorder %s18, %s21
    %p30 = scmp.eq.s32.totalorder %s13, 1
    %p31 = por %p29, %p30
    %p32 = scmp.ne.s32.totalorder %s21, %s22
    %p33 = scmp.eq.s32.totalorder %s13, 0
    %p34 = por %p32, %p33
    %p35 = scmp.ne.s32.totalorder %s21, %s22
    %p36 = scmp.eq.s32.totalorder %s14, 1
    %p37 = por %p35, %p36
    %p39 = scmp.ne.s32.totalorder %s22, %s38
    %p40 = scmp.eq.s32.totalorder %s14, 0
    %p41 = por %p39, %p40
    %s42 = ssub.s32 %s8, %s15
    %p43 = scmp.eq.s32.totalorder %s42, 0
    %s45 = sadd.s32 %s44, 1
    %s46 = scalar_select %p43, %s44, %s45
    %p49 = pneg %p43
    %p50 = scmp.eq.s32.totalorder %s8, 1
    %p51 = por %p49, %p50
    %p52 = scmp.ne.s32.totalorder %s44, %s47
    %p53 = scmp.eq.s32.totalorder %s8, 0
    %p54 = por %p52, %p53
    %p55 = scmp.ne.s32.totalorder %s44, %s47
    %p56 = scmp.eq.s32.totalorder %s13, 1
    %p57 = por %p55, %p56
    %p58 = scmp.ne.s32.totalorder %s47, %s48
    %p59 = scmp.eq.s32.totalorder %s13, 0
    %p60 = por %p58, %p59
    %p61 = scmp.ne.s32.totalorder %s47, %s48
    %p62 = scmp.eq.s32.totalorder %s14, 1
    %p63 = por %p61, %p62
    %p65 = scmp.ne.s32.totalorder %s48, %s64
    %p66 = scmp.eq.s32.totalorder %s14, 0
    %p67 = por %p65, %p66
    %s68 = ssub.s32 %s8, %s15
    %p69 = scmp.eq.s32.totalorder %s68, 0
    %s71 = sadd.s32 %s70, 1
    %s72 = scalar_select %p69, %s70, %s71
    %p75 = pneg %p69
    %p76 = scmp.eq.s32.totalorder %s8, 1
    %p77 = por %p75, %p76
    %p78 = scmp.ne.s32.totalorder %s70, %s73
    %p79 = scmp.eq.s32.totalorder %s8, 0
    %p80 = por %p78, %p79
    %p81 = scmp.ne.s32.totalorder %s70, %s73
    %p82 = scmp.eq.s32.totalorder %s13, 1
    %p83 = por %p81, %p82
    %p84 = scmp.ne.s32.totalorder %s73, %s74
    %p85 = scmp.eq.s32.totalorder %s13, 0
    %p86 = por %p84, %p85
    %p87 = scmp.ne.s32.totalorder %s73, %s74
    %p88 = scmp.eq.s32.totalorder %s14, 1
    %p89 = por %p87, %p88
    %p91 = scmp.ne.s32.totalorder %s74, %s90
    %p92 = scmp.eq.s32.totalorder %s14, 0
    %p93 = por %p91, %p92
    %p94 = scmp.le.s32.totalorder 1, %s8
    %p95 = scmp.lt.s32.totalorder %s8, 3
    %p96 = pnand %p94, %p95
    %p97 = pneg %p96
    // Predicated region
    $region9: #{fno2d_forward.11} parent=5 // pred_check
      _
    $region10: #{fno2d_forward.11} parent=5 // pred_check_branch
      %99 = sbr.rel (%p96) target = $region12
    $region11: #{fno2d_forward.11} parent=5 // pred_region
      %s100 = ssub.s32 %s8, 1
    $region12: #{fno2d_forward.11} parent=5 // pred_fallthru
      _
    %p101 = scmp.lt.s32.totalorder %s8, 2
    // Predicated region
    $region13: #{fno2d_forward.11} parent=5 // pred_check
      %p102 = pneg %p101
    $region14: #{fno2d_forward.11} parent=5 // pred_check_branch
      %104 = sbr.rel (%p102) target = $region16
    $region15: #{fno2d_forward.11} parent=5 // pred_region
      // Predicated region
      $region17: #{fno2d_forward.11} parent=15 // pred_check
        %p105 = pneg %p28
      $region18: #{fno2d_forward.11} parent=15 // pred_check_branch
        %107 = sbr.rel (%p105) target = $region20
      $region19: #{fno2d_forward.11} parent=15 // pred_region
        %s108 = smul.u32 18, %s8
        %p109 = scmp.lt.s32.totalorder %s108, 35
        %s110 = scalar_select %p109, %s108, 35
        %s111 = smul.addr %s110, 2
        %s112 = scalar_lea.vmem %s0, %s111
        %s113 = smul.u32 18, %s8
      $region20: #{fno2d_forward.11} parent=15 // pred_fallthru
        _
      // Predicated region
      $region21: #{fno2d_forward.11} parent=15 // pred_check
        %p114 = pneg %p54
      $region22: #{fno2d_forward.11} parent=15 // pred_check_branch
        %116 = sbr.rel (%p114) target = $region24
      $region23: #{fno2d_forward.11} parent=15 // pred_region
        %s117 = smul.u32 18, %s8
        %p118 = scmp.lt.s32.totalorder %s117, 35
        %s119 = scalar_select %p118, %s117, 35
        %s120 = smul.addr %s119, 16
        %s121 = smul.addr %s120, 8
        %s122 = scalar_lea.vmem %s1, %s121
        %s123 = smul.u32 18, %s8
      $region24: #{fno2d_forward.11} parent=15 // pred_fallthru
        _
    $region16: #{fno2d_forward.11} parent=5 // pred_fallthru
      _
    %p124 = scmp.le.s32.totalorder 1, %s8
    %p125 = scmp.lt.s32.totalorder %s8, 3
    %p126 = pnand %p124, %p125
    %p127 = pneg %p126
    // Predicated region
    $region25: #{fno2d_forward.11} parent=5 // pred_check
      _
    $region26: #{fno2d_forward.11} parent=5 // pred_check_branch
      %129 = sbr.rel (%p126) target = $region28
    $region27: #{fno2d_forward.11} parent=5 // pred_region
      %s130 = ssub.s32 %s8, 1
      %s131 = smul.u32 18, %s13
      %p132 = scmp.lt.s32.totalorder %s131, 35
      %s133 = scalar_select %p132, %s131, 35
      %s134 = smul.addr %s133, 2
      %s135 = scalar_lea.vmem %s0, %s134
      %p136 = pneg %p34
      %p137 = pneg %p31
      %s138 = smul.u32 18, %s13
      %p139 = scmp.lt.s32.totalorder %s138, 35
      %s140 = scalar_select %p139, %s138, 35
      %s141 = smul.addr %s140, 16
      %s142 = smul.addr %s141, 8
      %s143 = scalar_lea.vmem %s1, %s142
      %p144 = pneg %p60
      %p145 = pneg %p57
      %p146 = pneg %p86
      %p147 = pneg %p83
      %s148 = smul.u32 18, %s13
      %p149 = scmp.lt.s32.totalorder %s148, 35
      %s150 = scalar_select %p149, %s148, 35
      %s151 = smul.addr %s150, 2
      %s152 = scalar_lea.vmem %s2, %s151
      %s153 = smul.u32 18, %s13
      %p154 = scmp.lt.s32.totalorder %s153, 35
      %s155 = scalar_select %p154, %s153, 35
      %s156 = smul.addr %s155, 2
      %s157 = scalar_lea.vmem %s0, %s156
      %s158 = smul.u32 18, %s13
      %s159 = smul.u32 18, %s13
      %p160 = scmp.lt.s32.totalorder %s159, 35
      %s161 = scalar_select %p160, %s159, 35
      %s162 = smul.addr %s161, 16
      %s163 = smul.addr %s162, 8
      %s164 = scalar_lea.vmem %s1, %s163
      %s165 = smul.u32 18, %s13
      %s166 = smul.u32 18, %s13
      %p167 = scmp.lt.s32.totalorder %s166, 35
      %s168 = scalar_select %p167, %s166, 35
      %s169 = smul.addr %s168, 2
      %s170 = scalar_lea.vmem %s2, %s169
      %s171 = smul.u32 18, %s13
      %v172 = vld [vmem:[%s157] sm:$0x3]
      %v173 = vld [vmem:[%s157 + $0x2] sm:$0x3]
      %v174 = vld [vmem:[%s157 + $0x4] sm:$0x3]
      %v175 = vld [vmem:[%s157 + $0x6] sm:$0x3]
      %v176 = vld [vmem:[%s157 + $0x8] sm:$0x3]
      %v177 = vld [vmem:[%s157 + $0xa] sm:$0x3]
      %v178 = vld [vmem:[%s157 + $0xc] sm:$0x3]
      %v179 = vld [vmem:[%s157 + $0xe] sm:$0x3]
      %v180 = vld [vmem:[%s157 + $0x10] sm:$0x3]
      %v181 = vld [vmem:[%s157 + $0x12] sm:$0x3]
      %v182 = vld [vmem:[%s157 + $0x14] sm:$0x3]
      %v183 = vld [vmem:[%s157 + $0x16] sm:$0x3]
      %v184 = vld [vmem:[%s157 + $0x18] sm:$0x3]
      %v185 = vld [vmem:[%s157 + $0x1a] sm:$0x3]
      %v186 = vld [vmem:[%s157 + $0x1c] sm:$0x3]
      %v187 = vld [vmem:[%s157 + $0x1e] sm:$0x3]
      %v188 = vld [vmem:[%s157 + $0x20] sm:$0x3]
      %v189 = vld [vmem:[%s157 + $0x22] sm:$0x3]
      %v190 = vld [vmem:[%s164] sm:$0xff]
      %v191 = vld [vmem:[%s164 + $0x8] sm:$0xff]
      %v192 = vld [vmem:[%s164 + $0x10] sm:$0xff]
      %v193 = vld [vmem:[%s164 + $0x18] sm:$0xff]
      %v194 = vld [vmem:[%s164 + $0x20] sm:$0xff]
      %v195 = vld [vmem:[%s164 + $0x28] sm:$0xff]
      %v196 = vld [vmem:[%s164 + $0x30] sm:$0xff]
      %v197 = vld [vmem:[%s164 + $0x38] sm:$0xff]
      %v198 = vld [vmem:[%s164 + $0x40] sm:$0xff]
      %v199 = vld [vmem:[%s164 + $0x48] sm:$0xff]
      %v200 = vld [vmem:[%s164 + $0x50] sm:$0xff]
      %v201 = vld [vmem:[%s164 + $0x58] sm:$0xff]
      %v202 = vld [vmem:[%s164 + $0x60] sm:$0xff]
      %v203 = vld [vmem:[%s164 + $0x68] sm:$0xff]
      %v204 = vld [vmem:[%s164 + $0x70] sm:$0xff]
      %v205 = vld [vmem:[%s164 + $0x78] sm:$0xff]
      %v206 = vld [vmem:[%s164 + $0x80] sm:$0xff]
      %v207 = vld [vmem:[%s164 + $0x88] sm:$0xff]
      %v208 = vld [vmem:[%s164 + $0x90] sm:$0xff]
      %v209 = vld [vmem:[%s164 + $0x98] sm:$0xff]
      %v210 = vld [vmem:[%s164 + $0xa0] sm:$0xff]
      %v211 = vld [vmem:[%s164 + $0xa8] sm:$0xff]
      %v212 = vld [vmem:[%s164 + $0xb0] sm:$0xff]
      %v213 = vld [vmem:[%s164 + $0xb8] sm:$0xff]
      %v214 = vld [vmem:[%s164 + $0xc0] sm:$0xff]
      %v215 = vld [vmem:[%s164 + $0xc8] sm:$0xff]
      %v216 = vld [vmem:[%s164 + $0xd0] sm:$0xff]
      %v217 = vld [vmem:[%s164 + $0xd8] sm:$0xff]
      %v218 = vld [vmem:[%s164 + $0xe0] sm:$0xff]
      %v219 = vld [vmem:[%s164 + $0xe8] sm:$0xff]
      %v220 = vld [vmem:[%s164 + $0xf0] sm:$0xff]
      %v221 = vld [vmem:[%s164 + $0xf8] sm:$0xff]
      %v222 = vld [vmem:[%s164 + $0x100] sm:$0xff]
      %v223 = vld [vmem:[%s164 + $0x108] sm:$0xff]
      %v224 = vld [vmem:[%s164 + $0x110] sm:$0xff]
      %v225 = vld [vmem:[%s164 + $0x118] sm:$0xff]
      %v226 = vld [vmem:[%s164 + $0x120] sm:$0xff]
      %v227 = vld [vmem:[%s164 + $0x128] sm:$0xff]
      %v228 = vld [vmem:[%s164 + $0x130] sm:$0xff]
      %v229 = vld [vmem:[%s164 + $0x138] sm:$0xff]
      %v230 = vld [vmem:[%s164 + $0x140] sm:$0xff]
      %v231 = vld [vmem:[%s164 + $0x148] sm:$0xff]
      %v232 = vld [vmem:[%s164 + $0x150] sm:$0xff]
      %v233 = vld [vmem:[%s164 + $0x158] sm:$0xff]
      %v234 = vld [vmem:[%s164 + $0x160] sm:$0xff]
      %v235 = vld [vmem:[%s164 + $0x168] sm:$0xff]
      %v236 = vld [vmem:[%s164 + $0x170] sm:$0xff]
      %v237 = vld [vmem:[%s164 + $0x178] sm:$0xff]
      %v238 = vld [vmem:[%s164 + $0x180] sm:$0xff]
      %v239 = vld [vmem:[%s164 + $0x188] sm:$0xff]
      %v240 = vld [vmem:[%s164 + $0x190] sm:$0xff]
      %v241 = vld [vmem:[%s164 + $0x198] sm:$0xff]
      %v242 = vld [vmem:[%s164 + $0x1a0] sm:$0xff]
      %v243 = vld [vmem:[%s164 + $0x1a8] sm:$0xff]
      %v244 = vld [vmem:[%s164 + $0x1b0] sm:$0xff]
      %v245 = vld [vmem:[%s164 + $0x1b8] sm:$0xff]
      %v246 = vld [vmem:[%s164 + $0x1c0] sm:$0xff]
      %v247 = vld [vmem:[%s164 + $0x1c8] sm:$0xff]
      %v248 = vld [vmem:[%s164 + $0x1d0] sm:$0xff]
      %v249 = vld [vmem:[%s164 + $0x1d8] sm:$0xff]
      %v250 = vld [vmem:[%s164 + $0x1e0] sm:$0xff]
      %v251 = vld [vmem:[%s164 + $0x1e8] sm:$0xff]
      %v252 = vld [vmem:[%s164 + $0x1f0] sm:$0xff]
      %v253 = vld [vmem:[%s164 + $0x1f8] sm:$0xff]
      %v254 = vld [vmem:[%s164 + $0x200] sm:$0xff]
      %v255 = vld [vmem:[%s164 + $0x208] sm:$0xff]
      %v256 = vld [vmem:[%s164 + $0x210] sm:$0xff]
      %v257 = vld [vmem:[%s164 + $0x218] sm:$0xff]
      %v258 = vld [vmem:[%s164 + $0x220] sm:$0xff]
      %v259 = vld [vmem:[%s164 + $0x228] sm:$0xff]
      %v260 = vld [vmem:[%s164 + $0x230] sm:$0xff]
      %v261 = vld [vmem:[%s164 + $0x238] sm:$0xff]
      %v262 = vld [vmem:[%s164 + $0x240] sm:$0xff]
      %v263 = vld [vmem:[%s164 + $0x248] sm:$0xff]
      %v264 = vld [vmem:[%s164 + $0x250] sm:$0xff]
      %v265 = vld [vmem:[%s164 + $0x258] sm:$0xff]
      %v266 = vld [vmem:[%s164 + $0x260] sm:$0xff]
      %v267 = vld [vmem:[%s164 + $0x268] sm:$0xff]
      %v268 = vld [vmem:[%s164 + $0x270] sm:$0xff]
      %v269 = vld [vmem:[%s164 + $0x278] sm:$0xff]
      %v270 = vld [vmem:[%s164 + $0x280] sm:$0xff]
      %v271 = vld [vmem:[%s164 + $0x288] sm:$0xff]
      %v272 = vld [vmem:[%s164 + $0x290] sm:$0xff]
      %v273 = vld [vmem:[%s164 + $0x298] sm:$0xff]
      %v274 = vld [vmem:[%s164 + $0x2a0] sm:$0xff]
      %v275 = vld [vmem:[%s164 + $0x2a8] sm:$0xff]
      %v276 = vld [vmem:[%s164 + $0x2b0] sm:$0xff]
      %v277 = vld [vmem:[%s164 + $0x2b8] sm:$0xff]
      %v278 = vld [vmem:[%s164 + $0x2c0] sm:$0xff]
      %v279 = vld [vmem:[%s164 + $0x2c8] sm:$0xff]
      %v280 = vld [vmem:[%s164 + $0x2d0] sm:$0xff]
      %v281 = vld [vmem:[%s164 + $0x2d8] sm:$0xff]
      %v282 = vld [vmem:[%s164 + $0x2e0] sm:$0xff]
      %v283 = vld [vmem:[%s164 + $0x2e8] sm:$0xff]
      %v284 = vld [vmem:[%s164 + $0x2f0] sm:$0xff]
      %v285 = vld [vmem:[%s164 + $0x2f8] sm:$0xff]
      %v286 = vld [vmem:[%s164 + $0x300] sm:$0xff]
      %v287 = vld [vmem:[%s164 + $0x308] sm:$0xff]
      %v288 = vld [vmem:[%s164 + $0x310] sm:$0xff]
      %v289 = vld [vmem:[%s164 + $0x318] sm:$0xff]
      %v290 = vld [vmem:[%s164 + $0x320] sm:$0xff]
      %v291 = vld [vmem:[%s164 + $0x328] sm:$0xff]
      %v292 = vld [vmem:[%s164 + $0x330] sm:$0xff]
      %v293 = vld [vmem:[%s164 + $0x338] sm:$0xff]
      %v294 = vld [vmem:[%s164 + $0x340] sm:$0xff]
      %v295 = vld [vmem:[%s164 + $0x348] sm:$0xff]
      %v296 = vld [vmem:[%s164 + $0x350] sm:$0xff]
      %v297 = vld [vmem:[%s164 + $0x358] sm:$0xff]
      %v298 = vld [vmem:[%s164 + $0x360] sm:$0xff]
      %v299 = vld [vmem:[%s164 + $0x368] sm:$0xff]
      %v300 = vld [vmem:[%s164 + $0x370] sm:$0xff]
      %v301 = vld [vmem:[%s164 + $0x378] sm:$0xff]
      %v302 = vld [vmem:[%s164 + $0x380] sm:$0xff]
      %v303 = vld [vmem:[%s164 + $0x388] sm:$0xff]
      %v304 = vld [vmem:[%s164 + $0x390] sm:$0xff]
      %v305 = vld [vmem:[%s164 + $0x398] sm:$0xff]
      %v306 = vld [vmem:[%s164 + $0x3a0] sm:$0xff]
      %v307 = vld [vmem:[%s164 + $0x3a8] sm:$0xff]
      %v308 = vld [vmem:[%s164 + $0x3b0] sm:$0xff]
      %v309 = vld [vmem:[%s164 + $0x3b8] sm:$0xff]
      %v310 = vld [vmem:[%s164 + $0x3c0] sm:$0xff]
      %v311 = vld [vmem:[%s164 + $0x3c8] sm:$0xff]
      %v312 = vld [vmem:[%s164 + $0x3d0] sm:$0xff]
      %v313 = vld [vmem:[%s164 + $0x3d8] sm:$0xff]
      %v314 = vld [vmem:[%s164 + $0x3e0] sm:$0xff]
      %v315 = vld [vmem:[%s164 + $0x3e8] sm:$0xff]
      %v316 = vld [vmem:[%s164 + $0x3f0] sm:$0xff]
      %v317 = vld [vmem:[%s164 + $0x3f8] sm:$0xff]
      %v318 = vld [vmem:[%s164 + $0x400] sm:$0xff]
      %v319 = vld [vmem:[%s164 + $0x408] sm:$0xff]
      %v320 = vld [vmem:[%s164 + $0x410] sm:$0xff]
      %v321 = vld [vmem:[%s164 + $0x418] sm:$0xff]
      %v322 = vld [vmem:[%s164 + $0x420] sm:$0xff]
      %v323 = vld [vmem:[%s164 + $0x428] sm:$0xff]
      %v324 = vld [vmem:[%s164 + $0x430] sm:$0xff]
      %v325 = vld [vmem:[%s164 + $0x438] sm:$0xff]
      %v326 = vld [vmem:[%s164 + $0x440] sm:$0xff]
      %v327 = vld [vmem:[%s164 + $0x448] sm:$0xff]
      %v328 = vld [vmem:[%s164 + $0x450] sm:$0xff]
      %v329 = vld [vmem:[%s164 + $0x458] sm:$0xff]
      %v330 = vld [vmem:[%s164 + $0x460] sm:$0xff]
      %v331 = vld [vmem:[%s164 + $0x468] sm:$0xff]
      %v332 = vld [vmem:[%s164 + $0x470] sm:$0xff]
      %v333 = vld [vmem:[%s164 + $0x478] sm:$0xff]
      %v334 = vld [vmem:[%s164 + $0x480] sm:$0xff]
      %v335 = vld [vmem:[%s164 + $0x488] sm:$0xff]
      %v336 = vld [vmem:[%s164 + $0x490] sm:$0xff]
      %v337 = vld [vmem:[%s164 + $0x498] sm:$0xff]
      %v338 = vld [vmem:[%s164 + $0x4a0] sm:$0xff]
      %v339 = vld [vmem:[%s164 + $0x4a8] sm:$0xff]
      %v340 = vld [vmem:[%s164 + $0x4b0] sm:$0xff]
      %v341 = vld [vmem:[%s164 + $0x4b8] sm:$0xff]
      %v342 = vld [vmem:[%s164 + $0x4c0] sm:$0xff]
      %v343 = vld [vmem:[%s164 + $0x4c8] sm:$0xff]
      %v344 = vld [vmem:[%s164 + $0x4d0] sm:$0xff]
      %v345 = vld [vmem:[%s164 + $0x4d8] sm:$0xff]
      %v346 = vld [vmem:[%s164 + $0x4e0] sm:$0xff]
      %v347 = vld [vmem:[%s164 + $0x4e8] sm:$0xff]
      %v348 = vld [vmem:[%s164 + $0x4f0] sm:$0xff]
      %v349 = vld [vmem:[%s164 + $0x4f8] sm:$0xff]
      %v350 = vld [vmem:[%s164 + $0x500] sm:$0xff]
      %v351 = vld [vmem:[%s164 + $0x508] sm:$0xff]
      %v352 = vld [vmem:[%s164 + $0x510] sm:$0xff]
      %v353 = vld [vmem:[%s164 + $0x518] sm:$0xff]
      %v354 = vld [vmem:[%s164 + $0x520] sm:$0xff]
      %v355 = vld [vmem:[%s164 + $0x528] sm:$0xff]
      %v356 = vld [vmem:[%s164 + $0x530] sm:$0xff]
      %v357 = vld [vmem:[%s164 + $0x538] sm:$0xff]
      %v358 = vld [vmem:[%s164 + $0x540] sm:$0xff]
      %v359 = vld [vmem:[%s164 + $0x548] sm:$0xff]
      %v360 = vld [vmem:[%s164 + $0x550] sm:$0xff]
      %v361 = vld [vmem:[%s164 + $0x558] sm:$0xff]
      %v362 = vld [vmem:[%s164 + $0x560] sm:$0xff]
      %v363 = vld [vmem:[%s164 + $0x568] sm:$0xff]
      %v364 = vld [vmem:[%s164 + $0x570] sm:$0xff]
      %v365 = vld [vmem:[%s164 + $0x578] sm:$0xff]
      %v366 = vld [vmem:[%s164 + $0x580] sm:$0xff]
      %v367 = vld [vmem:[%s164 + $0x588] sm:$0xff]
      %v368 = vld [vmem:[%s164 + $0x590] sm:$0xff]
      %v369 = vld [vmem:[%s164 + $0x598] sm:$0xff]
      %v370 = vld [vmem:[%s164 + $0x5a0] sm:$0xff]
      %v371 = vld [vmem:[%s164 + $0x5a8] sm:$0xff]
      %v372 = vld [vmem:[%s164 + $0x5b0] sm:$0xff]
      %v373 = vld [vmem:[%s164 + $0x5b8] sm:$0xff]
      %v374 = vld [vmem:[%s164 + $0x5c0] sm:$0xff]
      %v375 = vld [vmem:[%s164 + $0x5c8] sm:$0xff]
      %v376 = vld [vmem:[%s164 + $0x5d0] sm:$0xff]
      %v377 = vld [vmem:[%s164 + $0x5d8] sm:$0xff]
      %v378 = vld [vmem:[%s164 + $0x5e0] sm:$0xff]
      %v379 = vld [vmem:[%s164 + $0x5e8] sm:$0xff]
      %v380 = vld [vmem:[%s164 + $0x5f0] sm:$0xff]
      %v381 = vld [vmem:[%s164 + $0x5f8] sm:$0xff]
      %v382 = vld [vmem:[%s164 + $0x600] sm:$0xff]
      %v383 = vld [vmem:[%s164 + $0x608] sm:$0xff]
      %v384 = vld [vmem:[%s164 + $0x610] sm:$0xff]
      %v385 = vld [vmem:[%s164 + $0x618] sm:$0xff]
      %v386 = vld [vmem:[%s164 + $0x620] sm:$0xff]
      %v387 = vld [vmem:[%s164 + $0x628] sm:$0xff]
      %v388 = vld [vmem:[%s164 + $0x630] sm:$0xff]
      %v389 = vld [vmem:[%s164 + $0x638] sm:$0xff]
      %v390 = vld [vmem:[%s164 + $0x640] sm:$0xff]
      %v391 = vld [vmem:[%s164 + $0x648] sm:$0xff]
      %v392 = vld [vmem:[%s164 + $0x650] sm:$0xff]
      %v393 = vld [vmem:[%s164 + $0x658] sm:$0xff]
      %v394 = vld [vmem:[%s164 + $0x660] sm:$0xff]
      %v395 = vld [vmem:[%s164 + $0x668] sm:$0xff]
      %v396 = vld [vmem:[%s164 + $0x670] sm:$0xff]
      %v397 = vld [vmem:[%s164 + $0x678] sm:$0xff]
      %v398 = vld [vmem:[%s164 + $0x680] sm:$0xff]
      %v399 = vld [vmem:[%s164 + $0x688] sm:$0xff]
      %v400 = vld [vmem:[%s164 + $0x690] sm:$0xff]
      %v401 = vld [vmem:[%s164 + $0x698] sm:$0xff]
      %v402 = vld [vmem:[%s164 + $0x6a0] sm:$0xff]
      %v403 = vld [vmem:[%s164 + $0x6a8] sm:$0xff]
      %v404 = vld [vmem:[%s164 + $0x6b0] sm:$0xff]
      %v405 = vld [vmem:[%s164 + $0x6b8] sm:$0xff]
      %v406 = vld [vmem:[%s164 + $0x6c0] sm:$0xff]
      %v407 = vld [vmem:[%s164 + $0x6c8] sm:$0xff]
      %v408 = vld [vmem:[%s164 + $0x6d0] sm:$0xff]
      %v409 = vld [vmem:[%s164 + $0x6d8] sm:$0xff]
      %v410 = vld [vmem:[%s164 + $0x6e0] sm:$0xff]
      %v411 = vld [vmem:[%s164 + $0x6e8] sm:$0xff]
      %v412 = vld [vmem:[%s164 + $0x6f0] sm:$0xff]
      %v413 = vld [vmem:[%s164 + $0x6f8] sm:$0xff]
      %v414 = vld [vmem:[%s164 + $0x700] sm:$0xff]
      %v415 = vld [vmem:[%s164 + $0x708] sm:$0xff]
      %v416 = vld [vmem:[%s164 + $0x710] sm:$0xff]
      %v417 = vld [vmem:[%s164 + $0x718] sm:$0xff]
      %v418 = vld [vmem:[%s164 + $0x720] sm:$0xff]
      %v419 = vld [vmem:[%s164 + $0x728] sm:$0xff]
      %v420 = vld [vmem:[%s164 + $0x730] sm:$0xff]
      %v421 = vld [vmem:[%s164 + $0x738] sm:$0xff]
      %v422 = vld [vmem:[%s164 + $0x740] sm:$0xff]
      %v423 = vld [vmem:[%s164 + $0x748] sm:$0xff]
      %v424 = vld [vmem:[%s164 + $0x750] sm:$0xff]
      %v425 = vld [vmem:[%s164 + $0x758] sm:$0xff]
      %v426 = vld [vmem:[%s164 + $0x760] sm:$0xff]
      %v427 = vld [vmem:[%s164 + $0x768] sm:$0xff]
      %v428 = vld [vmem:[%s164 + $0x770] sm:$0xff]
      %v429 = vld [vmem:[%s164 + $0x778] sm:$0xff]
      %v430 = vld [vmem:[%s164 + $0x780] sm:$0xff]
      %v431 = vld [vmem:[%s164 + $0x788] sm:$0xff]
      %v432 = vld [vmem:[%s164 + $0x790] sm:$0xff]
      %v433 = vld [vmem:[%s164 + $0x798] sm:$0xff]
      %v434 = vld [vmem:[%s164 + $0x7a0] sm:$0xff]
      %v435 = vld [vmem:[%s164 + $0x7a8] sm:$0xff]
      %v436 = vld [vmem:[%s164 + $0x7b0] sm:$0xff]
      %v437 = vld [vmem:[%s164 + $0x7b8] sm:$0xff]
      %v438 = vld [vmem:[%s164 + $0x7c0] sm:$0xff]
      %v439 = vld [vmem:[%s164 + $0x7c8] sm:$0xff]
      %v440 = vld [vmem:[%s164 + $0x7d0] sm:$0xff]
      %v441 = vld [vmem:[%s164 + $0x7d8] sm:$0xff]
      %v442 = vld [vmem:[%s164 + $0x7e0] sm:$0xff]
      %v443 = vld [vmem:[%s164 + $0x7e8] sm:$0xff]
      %v444 = vld [vmem:[%s164 + $0x7f0] sm:$0xff]
      %v445 = vld [vmem:[%s164 + $0x7f8] sm:$0xff]
      %v446 = vld [vmem:[%s164 + $0x800] sm:$0xff]
      %v447 = vld [vmem:[%s164 + $0x808] sm:$0xff]
      %v448 = vld [vmem:[%s164 + $0x810] sm:$0xff]
      %v449 = vld [vmem:[%s164 + $0x818] sm:$0xff]
      %v450 = vld [vmem:[%s164 + $0x820] sm:$0xff]
      %v451 = vld [vmem:[%s164 + $0x828] sm:$0xff]
      %v452 = vld [vmem:[%s164 + $0x830] sm:$0xff]
      %v453 = vld [vmem:[%s164 + $0x838] sm:$0xff]
      %v454 = vld [vmem:[%s164 + $0x840] sm:$0xff]
      %v455 = vld [vmem:[%s164 + $0x848] sm:$0xff]
      %v456 = vld [vmem:[%s164 + $0x850] sm:$0xff]
      %v457 = vld [vmem:[%s164 + $0x858] sm:$0xff]
      %v458 = vld [vmem:[%s164 + $0x860] sm:$0xff]
      %v459 = vld [vmem:[%s164 + $0x868] sm:$0xff]
      %v460 = vld [vmem:[%s164 + $0x870] sm:$0xff]
      %v461 = vld [vmem:[%s164 + $0x878] sm:$0xff]
      %v462 = vld [vmem:[%s164 + $0x880] sm:$0xff]
      %v463 = vld [vmem:[%s164 + $0x888] sm:$0xff]
      %v464 = vld [vmem:[%s164 + $0x890] sm:$0xff]
      %v465 = vld [vmem:[%s164 + $0x898] sm:$0xff]
      %v466 = vld [vmem:[%s164 + $0x8a0] sm:$0xff]
      %v467 = vld [vmem:[%s164 + $0x8a8] sm:$0xff]
      %v468 = vld [vmem:[%s164 + $0x8b0] sm:$0xff]
      %v469 = vld [vmem:[%s164 + $0x8b8] sm:$0xff]
      %v470 = vld [vmem:[%s164 + $0x8c0] sm:$0xff]
      %v471 = vld [vmem:[%s164 + $0x8c8] sm:$0xff]
      %v472 = vld [vmem:[%s164 + $0x8d0] sm:$0xff]
      %v473 = vld [vmem:[%s164 + $0x8d8] sm:$0xff]
      %v474 = vld [vmem:[%s164 + $0x8e0] sm:$0xff]
      %v475 = vld [vmem:[%s164 + $0x8e8] sm:$0xff]
      %v476 = vld [vmem:[%s164 + $0x8f0] sm:$0xff]
      %v477 = vld [vmem:[%s164 + $0x8f8] sm:$0xff]
      %478 = vmatpush.msra.mxu0 %v205
      %479 = vmatpush.msra.mxu0 %v204
      %480 = vmatpush.msra.mxu0 %v203
      %481 = vmatpush.msra.mxu0 %v202
      %482 = vmatpush.msra.mxu0 %v201
      %483 = vmatpush.msra.mxu0 %v200
      %484 = vmatpush.msra.mxu0 %v199
      %485 = vmatpush.msra.mxu0 %v198
      %486 = vmatpush.msra.mxu0 %v197
      %487 = vmatpush.msra.mxu0 %v196
      %488 = vmatpush.msra.mxu0 %v195
      %489 = vmatpush.msra.mxu0 %v194
      %490 = vmatpush.msra.mxu0 %v193
      %491 = vmatpush.msra.mxu0 %v192
      %492 = vmatpush.msra.mxu0 %v191
      %493 = vmatpush.msra.mxu0 %v190
      %494 = vmatmul.f32.gmra.mxu0 %v172
      %v495 = vpop.f32.mrf.mxu0
      %v496 = vadd.f32 0.0, %v495
      %497 = vdwg.mxu0
      %498 = vmatpush.msra.mxu0 %v221
      %499 = vmatpush.msra.mxu0 %v220
      %500 = vmatpush.msra.mxu0 %v219
      %501 = vmatpush.msra.mxu0 %v218
      %502 = vmatpush.msra.mxu0 %v217
      %503 = vmatpush.msra.mxu0 %v216
      %504 = vmatpush.msra.mxu0 %v215
      %505 = vmatpush.msra.mxu0 %v214
      %506 = vmatpush.msra.mxu0 %v213
      %507 = vmatpush.msra.mxu0 %v212
      %508 = vmatpush.msra.mxu0 %v211
      %509 = vmatpush.msra.mxu0 %v210
      %510 = vmatpush.msra.mxu0 %v209
      %511 = vmatpush.msra.mxu0 %v208
      %512 = vmatpush.msra.mxu0 %v207
      %513 = vmatpush.msra.mxu0 %v206
      %514 = vmatmul.f32.gmra.mxu0 %v173
      %v515 = vpop.f32.mrf.mxu0
      %v516 = vadd.f32 0.0, %v515
      %517 = vdwg.mxu0
      %518 = vmatpush.msra.mxu0 %v237
      %519 = vmatpush.msra.mxu0 %v236
      %520 = vmatpush.msra.mxu0 %v235
      %521 = vmatpush.msra.mxu0 %v234
      %522 = vmatpush.msra.mxu0 %v233
      %523 = vmatpush.msra.mxu0 %v232
      %524 = vmatpush.msra.mxu0 %v231
      %525 = vmatpush.msra.mxu0 %v230
      %526 = vmatpush.msra.mxu0 %v229
      %527 = vmatpush.msra.mxu0 %v228
      %528 = vmatpush.msra.mxu0 %v227
      %529 = vmatpush.msra.mxu0 %v226
      %530 = vmatpush.msra.mxu0 %v225
      %531 = vmatpush.msra.mxu0 %v224
      %532 = vmatpush.msra.mxu0 %v223
      %533 = vmatpush.msra.mxu0 %v222
      %534 = vmatmul.f32.gmra.mxu0 %v174
      %v535 = vpop.f32.mrf.mxu0
      %v536 = vadd.f32 0.0, %v535
      %537 = vdwg.mxu0
      %538 = vmatpush.msra.mxu0 %v253
      %539 = vmatpush.msra.mxu0 %v252
      %540 = vmatpush.msra.mxu0 %v251
      %541 = vmatpush.msra.mxu0 %v250
      %542 = vmatpush.msra.mxu0 %v249
      %543 = vmatpush.msra.mxu0 %v248
      %544 = vmatpush.msra.mxu0 %v247
      %545 = vmatpush.msra.mxu0 %v246
      %546 = vmatpush.msra.mxu0 %v245
      %547 = vmatpush.msra.mxu0 %v244
      %548 = vmatpush.msra.mxu0 %v243
      %549 = vmatpush.msra.mxu0 %v242
      %550 = vmatpush.msra.mxu0 %v241
      %551 = vmatpush.msra.mxu0 %v240
      %552 = vmatpush.msra.mxu0 %v239
      %553 = vmatpush.msra.mxu0 %v238
      %554 = vmatmul.f32.gmra.mxu0 %v175
      %v555 = vpop.f32.mrf.mxu0
      %v556 = vadd.f32 0.0, %v555
      %557 = vdwg.mxu0
      %558 = vmatpush.msra.mxu0 %v269
      %559 = vmatpush.msra.mxu0 %v268
      %560 = vmatpush.msra.mxu0 %v267
      %561 = vmatpush.msra.mxu0 %v266
      %562 = vmatpush.msra.mxu0 %v265
      %563 = vmatpush.msra.mxu0 %v264
      %564 = vmatpush.msra.mxu0 %v263
      %565 = vmatpush.msra.mxu0 %v262
      %566 = vmatpush.msra.mxu0 %v261
      %567 = vmatpush.msra.mxu0 %v260
      %568 = vmatpush.msra.mxu0 %v259
      %569 = vmatpush.msra.mxu0 %v258
      %570 = vmatpush.msra.mxu0 %v257
      %571 = vmatpush.msra.mxu0 %v256
      %572 = vmatpush.msra.mxu0 %v255
      %573 = vmatpush.msra.mxu0 %v254
      %574 = vmatmul.f32.gmra.mxu0 %v176
      %v575 = vpop.f32.mrf.mxu0
      %v576 = vadd.f32 0.0, %v575
      %577 = vdwg.mxu0
      %578 = vmatpush.msra.mxu0 %v285
      %579 = vmatpush.msra.mxu0 %v284
      %580 = vmatpush.msra.mxu0 %v283
      %581 = vmatpush.msra.mxu0 %v282
      %582 = vmatpush.msra.mxu0 %v281
      %583 = vmatpush.msra.mxu0 %v280
      %584 = vmatpush.msra.mxu0 %v279
      %585 = vmatpush.msra.mxu0 %v278
      %586 = vmatpush.msra.mxu0 %v277
      %587 = vmatpush.msra.mxu0 %v276
      %588 = vmatpush.msra.mxu0 %v275
      %589 = vmatpush.msra.mxu0 %v274
      %590 = vmatpush.msra.mxu0 %v273
      %591 = vmatpush.msra.mxu0 %v272
      %592 = vmatpush.msra.mxu0 %v271
      %593 = vmatpush.msra.mxu0 %v270
      %594 = vmatmul.f32.gmra.mxu0 %v177
      %v595 = vpop.f32.mrf.mxu0
      %v596 = vadd.f32 0.0, %v595
      %597 = vdwg.mxu0
      %598 = vmatpush.msra.mxu0 %v301
      %599 = vmatpush.msra.mxu0 %v300
      %600 = vmatpush.msra.mxu0 %v299
      %601 = vmatpush.msra.mxu0 %v298
      %602 = vmatpush.msra.mxu0 %v297
      %603 = vmatpush.msra.mxu0 %v296
      %604 = vmatpush.msra.mxu0 %v295
      %605 = vmatpush.msra.mxu0 %v294
      %606 = vmatpush.msra.mxu0 %v293
      %607 = vmatpush.msra.mxu0 %v292
      %608 = vmatpush.msra.mxu0 %v291
      %609 = vmatpush.msra.mxu0 %v290
      %610 = vmatpush.msra.mxu0 %v289
      %611 = vmatpush.msra.mxu0 %v288
      %612 = vmatpush.msra.mxu0 %v287
      %613 = vmatpush.msra.mxu0 %v286
      %614 = vmatmul.f32.gmra.mxu0 %v178
      %v615 = vpop.f32.mrf.mxu0
      %v616 = vadd.f32 0.0, %v615
      %617 = vdwg.mxu0
      %618 = vmatpush.msra.mxu0 %v317
      %619 = vmatpush.msra.mxu0 %v316
      %620 = vmatpush.msra.mxu0 %v315
      %621 = vmatpush.msra.mxu0 %v314
      %622 = vmatpush.msra.mxu0 %v313
      %623 = vmatpush.msra.mxu0 %v312
      %624 = vmatpush.msra.mxu0 %v311
      %625 = vmatpush.msra.mxu0 %v310
      %626 = vmatpush.msra.mxu0 %v309
      %627 = vmatpush.msra.mxu0 %v308
      %628 = vmatpush.msra.mxu0 %v307
      %629 = vmatpush.msra.mxu0 %v306
      %630 = vmatpush.msra.mxu0 %v305
      %631 = vmatpush.msra.mxu0 %v304
      %632 = vmatpush.msra.mxu0 %v303
      %633 = vmatpush.msra.mxu0 %v302
      %634 = vmatmul.f32.gmra.mxu0 %v179
      %v635 = vpop.f32.mrf.mxu0
      %v636 = vadd.f32 0.0, %v635
      %637 = vdwg.mxu0
      %638 = vmatpush.msra.mxu0 %v333
      %639 = vmatpush.msra.mxu0 %v332
      %640 = vmatpush.msra.mxu0 %v331
      %641 = vmatpush.msra.mxu0 %v330
      %642 = vmatpush.msra.mxu0 %v329
      %643 = vmatpush.msra.mxu0 %v328
      %644 = vmatpush.msra.mxu0 %v327
      %645 = vmatpush.msra.mxu0 %v326
      %646 = vmatpush.msra.mxu0 %v325
      %647 = vmatpush.msra.mxu0 %v324
      %648 = vmatpush.msra.mxu0 %v323
      %649 = vmatpush.msra.mxu0 %v322
      %650 = vmatpush.msra.mxu0 %v321
      %651 = vmatpush.msra.mxu0 %v320
      %652 = vmatpush.msra.mxu0 %v319
      %653 = vmatpush.msra.mxu0 %v318
      %654 = vmatmul.f32.gmra.mxu0 %v180
      %v655 = vpop.f32.mrf.mxu0
      %v656 = vadd.f32 0.0, %v655
      %657 = vdwg.mxu0
      %658 = vmatpush.msra.mxu0 %v349
      %659 = vmatpush.msra.mxu0 %v348
      %660 = vmatpush.msra.mxu0 %v347
      %661 = vmatpush.msra.mxu0 %v346
      %662 = vmatpush.msra.mxu0 %v345
      %663 = vmatpush.msra.mxu0 %v344
      %664 = vmatpush.msra.mxu0 %v343
      %665 = vmatpush.msra.mxu0 %v342
      %666 = vmatpush.msra.mxu0 %v341
      %667 = vmatpush.msra.mxu0 %v340
      %668 = vmatpush.msra.mxu0 %v339
      %669 = vmatpush.msra.mxu0 %v338
      %670 = vmatpush.msra.mxu0 %v337
      %671 = vmatpush.msra.mxu0 %v336
      %672 = vmatpush.msra.mxu0 %v335
      %673 = vmatpush.msra.mxu0 %v334
      %674 = vmatmul.f32.gmra.mxu0 %v181
      %v675 = vpop.f32.mrf.mxu0
      %v676 = vadd.f32 0.0, %v675
      %677 = vdwg.mxu0
      %678 = vmatpush.msra.mxu0 %v365
      %679 = vmatpush.msra.mxu0 %v364
      %680 = vmatpush.msra.mxu0 %v363
      %681 = vmatpush.msra.mxu0 %v362
      %682 = vmatpush.msra.mxu0 %v361
      %683 = vmatpush.msra.mxu0 %v360
      %684 = vmatpush.msra.mxu0 %v359
      %685 = vmatpush.msra.mxu0 %v358
      %686 = vmatpush.msra.mxu0 %v357
      %687 = vmatpush.msra.mxu0 %v356
      %688 = vmatpush.msra.mxu0 %v355
      %689 = vmatpush.msra.mxu0 %v354
      %690 = vmatpush.msra.mxu0 %v353
      %691 = vmatpush.msra.mxu0 %v352
      %692 = vmatpush.msra.mxu0 %v351
      %693 = vmatpush.msra.mxu0 %v350
      %694 = vmatmul.f32.gmra.mxu0 %v182
      %v695 = vpop.f32.mrf.mxu0
      %v696 = vadd.f32 0.0, %v695
      %697 = vdwg.mxu0
      %698 = vmatpush.msra.mxu0 %v381
      %699 = vmatpush.msra.mxu0 %v380
      %700 = vmatpush.msra.mxu0 %v379
      %701 = vmatpush.msra.mxu0 %v378
      %702 = vmatpush.msra.mxu0 %v377
      %703 = vmatpush.msra.mxu0 %v376
      %704 = vmatpush.msra.mxu0 %v375
      %705 = vmatpush.msra.mxu0 %v374
      %706 = vmatpush.msra.mxu0 %v373
      %707 = vmatpush.msra.mxu0 %v372
      %708 = vmatpush.msra.mxu0 %v371
      %709 = vmatpush.msra.mxu0 %v370
      %710 = vmatpush.msra.mxu0 %v369
      %711 = vmatpush.msra.mxu0 %v368
      %712 = vmatpush.msra.mxu0 %v367
      %713 = vmatpush.msra.mxu0 %v366
      %714 = vmatmul.f32.gmra.mxu0 %v183
      %v715 = vpop.f32.mrf.mxu0
      %v716 = vadd.f32 0.0, %v715
      %717 = vdwg.mxu0
      %718 = vmatpush.msra.mxu0 %v397
      %719 = vmatpush.msra.mxu0 %v396
      %720 = vmatpush.msra.mxu0 %v395
      %721 = vmatpush.msra.mxu0 %v394
      %722 = vmatpush.msra.mxu0 %v393
      %723 = vmatpush.msra.mxu0 %v392
      %724 = vmatpush.msra.mxu0 %v391
      %725 = vmatpush.msra.mxu0 %v390
      %726 = vmatpush.msra.mxu0 %v389
      %727 = vmatpush.msra.mxu0 %v388
      %728 = vmatpush.msra.mxu0 %v387
      %729 = vmatpush.msra.mxu0 %v386
      %730 = vmatpush.msra.mxu0 %v385
      %731 = vmatpush.msra.mxu0 %v384
      %732 = vmatpush.msra.mxu0 %v383
      %733 = vmatpush.msra.mxu0 %v382
      %734 = vmatmul.f32.gmra.mxu0 %v184
      %v735 = vpop.f32.mrf.mxu0
      %v736 = vadd.f32 0.0, %v735
      %737 = vdwg.mxu0
      %738 = vmatpush.msra.mxu0 %v413
      %739 = vmatpush.msra.mxu0 %v412
      %740 = vmatpush.msra.mxu0 %v411
      %741 = vmatpush.msra.mxu0 %v410
      %742 = vmatpush.msra.mxu0 %v409
      %743 = vmatpush.msra.mxu0 %v408
      %744 = vmatpush.msra.mxu0 %v407
      %745 = vmatpush.msra.mxu0 %v406
      %746 = vmatpush.msra.mxu0 %v405
      %747 = vmatpush.msra.mxu0 %v404
      %748 = vmatpush.msra.mxu0 %v403
      %749 = vmatpush.msra.mxu0 %v402
      %750 = vmatpush.msra.mxu0 %v401
      %751 = vmatpush.msra.mxu0 %v400
      %752 = vmatpush.msra.mxu0 %v399
      %753 = vmatpush.msra.mxu0 %v398
      %754 = vmatmul.f32.gmra.mxu0 %v185
      %v755 = vpop.f32.mrf.mxu0
      %v756 = vadd.f32 0.0, %v755
      %757 = vdwg.mxu0
      %758 = vmatpush.msra.mxu0 %v429
      %759 = vmatpush.msra.mxu0 %v428
      %760 = vmatpush.msra.mxu0 %v427
      %761 = vmatpush.msra.mxu0 %v426
      %762 = vmatpush.msra.mxu0 %v425
      %763 = vmatpush.msra.mxu0 %v424
      %764 = vmatpush.msra.mxu0 %v423
      %765 = vmatpush.msra.mxu0 %v422
      %766 = vmatpush.msra.mxu0 %v421
      %767 = vmatpush.msra.mxu0 %v420
      %768 = vmatpush.msra.mxu0 %v419
      %769 = vmatpush.msra.mxu0 %v418
      %770 = vmatpush.msra.mxu0 %v417
      %771 = vmatpush.msra.mxu0 %v416
      %772 = vmatpush.msra.mxu0 %v415
      %773 = vmatpush.msra.mxu0 %v414
      %774 = vmatmul.f32.gmra.mxu0 %v186
      %v775 = vpop.f32.mrf.mxu0
      %v776 = vadd.f32 0.0, %v775
      %777 = vdwg.mxu0
      %778 = vmatpush.msra.mxu0 %v445
      %779 = vmatpush.msra.mxu0 %v444
      %780 = vmatpush.msra.mxu0 %v443
      %781 = vmatpush.msra.mxu0 %v442
      %782 = vmatpush.msra.mxu0 %v441
      %783 = vmatpush.msra.mxu0 %v440
      %784 = vmatpush.msra.mxu0 %v439
      %785 = vmatpush.msra.mxu0 %v438
      %786 = vmatpush.msra.mxu0 %v437
      %787 = vmatpush.msra.mxu0 %v436
      %788 = vmatpush.msra.mxu0 %v435
      %789 = vmatpush.msra.mxu0 %v434
      %790 = vmatpush.msra.mxu0 %v433
      %791 = vmatpush.msra.mxu0 %v432
      %792 = vmatpush.msra.mxu0 %v431
      %793 = vmatpush.msra.mxu0 %v430
      %794 = vmatmul.f32.gmra.mxu0 %v187
      %v795 = vpop.f32.mrf.mxu0
      %v796 = vadd.f32 0.0, %v795
      %797 = vdwg.mxu0
      %798 = vmatpush.msra.mxu0 %v461
      %799 = vmatpush.msra.mxu0 %v460
      %800 = vmatpush.msra.mxu0 %v459
      %801 = vmatpush.msra.mxu0 %v458
      %802 = vmatpush.msra.mxu0 %v457
      %803 = vmatpush.msra.mxu0 %v456
      %804 = vmatpush.msra.mxu0 %v455
      %805 = vmatpush.msra.mxu0 %v454
      %806 = vmatpush.msra.mxu0 %v453
      %807 = vmatpush.msra.mxu0 %v452
      %808 = vmatpush.msra.mxu0 %v451
      %809 = vmatpush.msra.mxu0 %v450
      %810 = vmatpush.msra.mxu0 %v449
      %811 = vmatpush.msra.mxu0 %v448
      %812 = vmatpush.msra.mxu0 %v447
      %813 = vmatpush.msra.mxu0 %v446
      %814 = vmatmul.f32.gmra.mxu0 %v188
      %v815 = vpop.f32.mrf.mxu0
      %v816 = vadd.f32 0.0, %v815
      %817 = vdwg.mxu0
      %818 = vmatpush.msra.mxu0 %v477
      %819 = vmatpush.msra.mxu0 %v476
      %820 = vmatpush.msra.mxu0 %v475
      %821 = vmatpush.msra.mxu0 %v474
      %822 = vmatpush.msra.mxu0 %v473
      %823 = vmatpush.msra.mxu0 %v472
      %824 = vmatpush.msra.mxu0 %v471
      %825 = vmatpush.msra.mxu0 %v470
      %826 = vmatpush.msra.mxu0 %v469
      %827 = vmatpush.msra.mxu0 %v468
      %828 = vmatpush.msra.mxu0 %v467
      %829 = vmatpush.msra.mxu0 %v466
      %830 = vmatpush.msra.mxu0 %v465
      %831 = vmatpush.msra.mxu0 %v464
      %832 = vmatpush.msra.mxu0 %v463
      %833 = vmatpush.msra.mxu0 %v462
      %834 = vmatmul.f32.gmra.mxu0 %v189
      %v835 = vpop.f32.mrf.mxu0
      %v836 = vadd.f32 0.0, %v835
      %837 = vdwg.mxu0
      %838 = vst [vmem:[%s170] sm:$0x3] %v496
      %839 = vst [vmem:[%s170 + $0x2] sm:$0x3] %v516
      %840 = vst [vmem:[%s170 + $0x4] sm:$0x3] %v536
      %841 = vst [vmem:[%s170 + $0x6] sm:$0x3] %v556
      %842 = vst [vmem:[%s170 + $0x8] sm:$0x3] %v576
      %843 = vst [vmem:[%s170 + $0xa] sm:$0x3] %v596
      %844 = vst [vmem:[%s170 + $0xc] sm:$0x3] %v616
      %845 = vst [vmem:[%s170 + $0xe] sm:$0x3] %v636
      %846 = vst [vmem:[%s170 + $0x10] sm:$0x3] %v656
      %847 = vst [vmem:[%s170 + $0x12] sm:$0x3] %v676
      %848 = vst [vmem:[%s170 + $0x14] sm:$0x3] %v696
      %849 = vst [vmem:[%s170 + $0x16] sm:$0x3] %v716
      %850 = vst [vmem:[%s170 + $0x18] sm:$0x3] %v736
      %851 = vst [vmem:[%s170 + $0x1a] sm:$0x3] %v756
      %852 = vst [vmem:[%s170 + $0x1c] sm:$0x3] %v776
      %853 = vst [vmem:[%s170 + $0x1e] sm:$0x3] %v796
      %854 = vst [vmem:[%s170 + $0x20] sm:$0x3] %v816
      %855 = vst [vmem:[%s170 + $0x22] sm:$0x3] %v836
      %s856 = smul.u32 18, %s13
      %p857 = scmp.lt.s32.totalorder %s856, 35
      %s858 = scalar_select %p857, %s856, 35
      %s859 = smul.addr %s858, 2
      %s860 = scalar_lea.vmem %s2, %s859
      // Predicated region
      $region29: #{fno2d_forward.11} parent=27 // pred_check
        %p861 = pneg %p83
      $region30: #{fno2d_forward.11} parent=27 // pred_check_branch
        %863 = sbr.rel (%p861) target = $region32
      $region31: #{fno2d_forward.11} parent=27 // pred_region
        %s864 = smul.u32 18, %s13
      $region32: #{fno2d_forward.11} parent=27 // pred_fallthru
        _
    $region28: #{fno2d_forward.11} parent=5 // pred_fallthru
      _
    %p865 = scmp.le.s32.totalorder 2, %s8
    // Predicated region
    $region33: #{fno2d_forward.11} parent=5 // pred_check
      %p866 = pneg %p865
    $region34: #{fno2d_forward.11} parent=5 // pred_check_branch
      %868 = sbr.rel (%p866) target = $region36
    $region35: #{fno2d_forward.11} parent=5 // pred_region
      %s869 = ssub.s32 %s8, 2
      // Predicated region
      $region37: #{fno2d_forward.11} parent=35 // pred_check
        %p870 = pneg %p89
      $region38: #{fno2d_forward.11} parent=35 // pred_check_branch
        %872 = sbr.rel (%p870) target = $region40
      $region39: #{fno2d_forward.11} parent=35 // pred_region
        %s873 = smul.u32 18, %s14
        %p874 = scmp.lt.s32.totalorder %s873, 35
        %s875 = scalar_select %p874, %s873, 35
        %s876 = smul.addr %s875, 2
        %s877 = scalar_lea.vmem %s2, %s876
      $region40: #{fno2d_forward.11} parent=35 // pred_fallthru
        _
    $region36: #{fno2d_forward.11} parent=5 // pred_fallthru
      _
  $region6: #{fno2d_forward.11} parent=0 // loop_footer
    %s12 = sadd.s32 1, %s8
  $region7: #{fno2d_forward.11} parent=0 // loop_footer_branch
    %7 = sbr.rel target = $region3
  $region8: #{fno2d_forward.11} parent=0 // loop_exit
    _

// kernel: reverse.8
$region0: #{reverse.8}
  #allocation0 [shape = 's32[1]{0}', space=sflag, size = 0x4, scoped, tag = 'scoped memory for reverse.8']
  %s0 = inlined_call_operand.vmem [shape: f32[2,32,16,7], index: 0, kind: input, shape index: {}]
  %s1 = inlined_call_operand.vmem [shape: f32[2,32,16,7], index: 1, kind: output, shape index: {}]
  %s2 = scalar_lea.vmem %s0, 96
  %v3 = vld [vmem:[%s2] sm:$0xff]
  %4 = vst [vmem:[%s1] sm:$0xff] %v3
  %s5 = scalar_lea.vmem %s0, 208
  %v6 = vld [vmem:[%s5] sm:$0xff]
  %s7 = scalar_lea.vmem %s1, 112
  %8 = vst [vmem:[%s7] sm:$0xff] %v6
  %s9 = scalar_lea.vmem %s0, 80
  %v10 = vld [vmem:[%s9] sm:$0xff]
  %s11 = scalar_lea.vmem %s1, 16
  %12 = vst [vmem:[%s11] sm:$0xff] %v10
  %s13 = scalar_lea.vmem %s0, 192
  %v14 = vld [vmem:[%s13] sm:$0xff]
  %s15 = scalar_lea.vmem %s1, 128
  %16 = vst [vmem:[%s15] sm:$0xff] %v14
  %s17 = scalar_lea.vmem %s0, 64
  %v18 = vld [vmem:[%s17] sm:$0xff]
  %s19 = scalar_lea.vmem %s1, 32
  %20 = vst [vmem:[%s19] sm:$0xff] %v18
  %s21 = scalar_lea.vmem %s0, 176
  %v22 = vld [vmem:[%s21] sm:$0xff]
  %s23 = scalar_lea.vmem %s1, 144
  %24 = vst [vmem:[%s23] sm:$0xff] %v22
  %s25 = scalar_lea.vmem %s0, 48
  %v26 = vld [vmem:[%s25] sm:$0xff]
  %s27 = scalar_lea.vmem %s1, 48
  %28 = vst [vmem:[%s27] sm:$0xff] %v26
  %s29 = scalar_lea.vmem %s0, 160
  %v30 = vld [vmem:[%s29] sm:$0xff]
  %s31 = scalar_lea.vmem %s1, 160
  %32 = vst [vmem:[%s31] sm:$0xff] %v30
  %s33 = scalar_lea.vmem %s0, 32
  %v34 = vld [vmem:[%s33] sm:$0xff]
  %s35 = scalar_lea.vmem %s1, 64
  %36 = vst [vmem:[%s35] sm:$0xff] %v34
  %s37 = scalar_lea.vmem %s0, 144
  %v38 = vld [vmem:[%s37] sm:$0xff]
  %s39 = scalar_lea.vmem %s1, 176
  %40 = vst [vmem:[%s39] sm:$0xff] %v38
  %s41 = scalar_lea.vmem %s0, 16
  %v42 = vld [vmem:[%s41] sm:$0xff]
  %s43 = scalar_lea.vmem %s1, 80
  %44 = vst [vmem:[%s43] sm:$0xff] %v42
  %s45 = scalar_lea.vmem %s0, 128
  %v46 = vld [vmem:[%s45] sm:$0xff]
  %s47 = scalar_lea.vmem %s1, 192
  %48 = vst [vmem:[%s47] sm:$0xff] %v46
  %v49 = vld [vmem:[%s0] sm:$0xff]
  %s50 = scalar_lea.vmem %s1, 96
  %51 = vst [vmem:[%s50] sm:$0xff] %v49
  %s52 = scalar_lea.vmem %s0, 112
  %v53 = vld [vmem:[%s52] sm:$0xff]
  %s54 = scalar_lea.vmem %s1, 208
  %55 = vst [vmem:[%s54] sm:$0xff] %v53
  %s56 = scalar_lea.vmem %s0, 104
  %v57 = vld [vmem:[%s56] sm:$0xff]
  %s58 = scalar_lea.vmem %s1, 8
  %59 = vst [vmem:[%s58] sm:$0xff] %v57
  %s60 = scalar_lea.vmem %s0, 216
  %v61 = vld [vmem:[%s60] sm:$0xff]
  %s62 = scalar_lea.vmem %s1, 120
  %63 = vst [vmem:[%s62] sm:$0xff] %v61
  %s64 = scalar_lea.vmem %s0, 88
  %v65 = vld [vmem:[%s64] sm:$0xff]
  %s66 = scalar_lea.vmem %s1, 24
  %67 = vst [vmem:[%s66] sm:$0xff] %v65
  %s68 = scalar_lea.vmem %s0, 200
  %v69 = vld [vmem:[%s68] sm:$0xff]
  %s70 = scalar_lea.vmem %s1, 136
  %71 = vst [vmem:[%s70] sm:$0xff] %v69
  %s72 = scalar_lea.vmem %s0, 72
  %v73 = vld [vmem:[%s72] sm:$0xff]
  %s74 = scalar_lea.vmem %s1, 40
  %75 = vst [vmem:[%s74] sm:$0xff] %v73
  %s76 = scalar_lea.vmem %s0, 184
  %v77 = vld [vmem:[%s76] sm:$0xff]
  %s78 = scalar_lea.vmem %s1, 152
  %79 = vst [vmem:[%s78] sm:$0xff] %v77
  %s80 = scalar_lea.vmem %s0, 56
  %v81 = vld [vmem:[%s80] sm:$0xff]
  %s82 = scalar_lea.vmem %s1, 56
  %83 = vst [vmem:[%s82] sm:$0xff] %v81
  %s84 = scalar_lea.vmem %s0, 168
  %v85 = vld [vmem:[%s84] sm:$0xff]
  %s86 = scalar_lea.vmem %s1, 168
  %87 = vst [vmem:[%s86] sm:$0xff] %v85
  %s88 = scalar_lea.vmem %s0, 40
  %v89 = vld [vmem:[%s88] sm:$0xff]
  %s90 = scalar_lea.vmem %s1, 72
  %91 = vst [vmem:[%s90] sm:$0xff] %v89
  %s92 = scalar_lea.vmem %s0, 152
  %v93 = vld [vmem:[%s92] sm:$0xff]
  %s94 = scalar_lea.vmem %s1, 184
  %95 = vst [vmem:[%s94] sm:$0xff] %v93
  %s96 = scalar_lea.vmem %s0, 24
  %v97 = vld [vmem:[%s96] sm:$0xff]
  %s98 = scalar_lea.vmem %s1, 88
  %99 = vst [vmem:[%s98] sm:$0xff] %v97
  %s100 = scalar_lea.vmem %s0, 136
  %v101 = vld [vmem:[%s100] sm:$0xff]
  %s102 = scalar_lea.vmem %s1, 200
  %103 = vst [vmem:[%s102] sm:$0xff] %v101
  %s104 = scalar_lea.vmem %s0, 8
  %v105 = vld [vmem:[%s104] sm:$0xff]
  %s106 = scalar_lea.vmem %s1, 104
  %107 = vst [vmem:[%s106] sm:$0xff] %v105
  %s108 = scalar_lea.vmem %s0, 120
  %v109 = vld [vmem:[%s108] sm:$0xff]
  %s110 = scalar_lea.vmem %s1, 216
  %111 = vst [vmem:[%s110] sm:$0xff] %v109

// kernel: fno2d_forward.12
$region0: #{fno2d_forward.12}
  #allocation0 [shape = 'u32[]', space=smem, size = 0x4, offset = 0x4, fixed_abs, tag = 'smem constant byte address 0x4 - core index']
  #allocation1 [shape = 'u32[72,128]{1,0:T(1,128)}', space=vmem, size = 0x9000, scoped, tag = 'internal scratch']
  %s0 = inlined_call_operand.vmem [shape: f32[128,128], index: 0, kind: input, shape index: {}]
  %s1 = inlined_call_operand.vmem [shape: f32[128,128], index: 1, kind: input, shape index: {}]
  %s2 = inlined_call_operand.vmem [shape: f32[1,128], index: 2, kind: input, shape index: {}]
  %s3 = inlined_call_operand.vmem [shape: f32[128,128], index: 3, kind: input, shape index: {}]
  %s4 = inlined_call_operand.vmem [shape: f32[128,128], index: 4, kind: output, shape index: {}]
  %s5 = sld [smem:[#allocation0]]
  $region49: #{fno2d_forward.12} parent=0
    _
  %s7 = ssub.s32 1, %s5
  %s8 = scalar_select 0, %s7, %s5
  loop: start=0, step=1, limit=4
  $region2: #{fno2d_forward.12} parent=0 // loop_pre_header
    _
  $region3: #{fno2d_forward.12} parent=0 // loop_header
    %s10 = sphi 0, %s14
    %p11 = scmp.ge.s32.totalorder %s10, 4
    %s20 = sphi 0, %s22
    %s23 = sphi 0, %s20
    %s24 = sphi 0, %s23
    %s40 = sphi 0, %s24
    %s44 = sphi 0, %s44
    %s46 = sphi 0, %s44
    %s47 = sphi 0, %s46
    %s61 = sphi 0, %s47
    %s65 = sphi 0, %s65
    %s67 = sphi 0, %s65
    %s68 = sphi 0, %s67
    %s82 = sphi 0, %s68
    %s88 = sphi 0, %s90
    %s91 = sphi 0, %s88
    %s92 = sphi 0, %s91
    %s108 = sphi 0, %s92
    %s114 = sphi 0, %s116
    %s117 = sphi 0, %s114
    %s118 = sphi 0, %s117
    %s134 = sphi 0, %s118
  $region4: #{fno2d_forward.12} parent=0 // loop_header_branch
    %13 = sbr.rel (%p11) target = $region8
  $region5: #{fno2d_forward.12} parent=0 // loop_body
    %s15 = ssub.s32 %s10, 1
    %s16 = ssub.s32 %s10, 2
    %s17 = sadd.s32 %s10, 1
    %s18 = ssub.s32 %s10, %s17
    %p19 = scmp.eq.s32.totalorder %s18, 0
    %s21 = sadd.s32 %s20, 1
    %s22 = scalar_select %p19, %s20, %s21
    %p25 = pneg %p19
    %p26 = scmp.eq.s32.totalorder %s10, 1
    %p27 = por %p25, %p26
    %p28 = scmp.ne.s32.totalorder %s20, %s23
    %p29 = scmp.eq.s32.totalorder %s10, 0
    %p30 = por %p28, %p29
    %p31 = scmp.ne.s32.totalorder %s20, %s23
    %p32 = scmp.eq.s32.totalorder %s15, 1
    %p33 = por %p31, %p32
    %p34 = scmp.ne.s32.totalorder %s23, %s24
    %p35 = scmp.eq.s32.totalorder %s15, 0
    %p36 = por %p34, %p35
    %p37 = scmp.ne.s32.totalorder %s23, %s24
    %p38 = scmp.eq.s32.totalorder %s16, 1
    %p39 = por %p37, %p38
    %p41 = scmp.ne.s32.totalorder %s24, %s40
    %p42 = scmp.eq.s32.totalorder %s16, 0
    %p43 = por %p41, %p42
    %s45 = sadd.s32 %s44, 1
    %p48 = scmp.eq.s32.totalorder %s10, 1
    %p49 = scmp.ne.s32.totalorder %s44, %s46
    %p50 = scmp.eq.s32.totalorder %s10, 0
    %p51 = por %p49, %p50
    %p52 = scmp.ne.s32.totalorder %s44, %s46
    %p53 = scmp.eq.s32.totalorder %s15, 1
    %p54 = por %p52, %p53
    %p55 = scmp.ne.s32.totalorder %s46, %s47
    %p56 = scmp.eq.s32.totalorder %s15, 0
    %p57 = por %p55, %p56
    %p58 = scmp.ne.s32.totalorder %s46, %s47
    %p59 = scmp.eq.s32.totalorder %s16, 1
    %p60 = por %p58, %p59
    %p62 = scmp.ne.s32.totalorder %s47, %s61
    %p63 = scmp.eq.s32.totalorder %s16, 0
    %p64 = por %p62, %p63
    %s66 = sadd.s32 %s65, 1
    %p69 = scmp.eq.s32.totalorder %s10, 1
    %p70 = scmp.ne.s32.totalorder %s65, %s67
    %p71 = scmp.eq.s32.totalorder %s10, 0
    %p72 = por %p70, %p71
    %p73 = scmp.ne.s32.totalorder %s65, %s67
    %p74 = scmp.eq.s32.totalorder %s15, 1
    %p75 = por %p73, %p74
    %p76 = scmp.ne.s32.totalorder %s67, %s68
    %p77 = scmp.eq.s32.totalorder %s15, 0
    %p78 = por %p76, %p77
    %p79 = scmp.ne.s32.totalorder %s67, %s68
    %p80 = scmp.eq.s32.totalorder %s16, 1
    %p81 = por %p79, %p80
    %p83 = scmp.ne.s32.totalorder %s68, %s82
    %p84 = scmp.eq.s32.totalorder %s16, 0
    %p85 = por %p83, %p84
    %s86 = ssub.s32 %s10, %s17
    %p87 = scmp.eq.s32.totalorder %s86, 0
    %s89 = sadd.s32 %s88, 1
    %s90 = scalar_select %p87, %s88, %s89
    %p93 = pneg %p87
    %p94 = scmp.eq.s32.totalorder %s10, 1
    %p95 = por %p93, %p94
    %p96 = scmp.ne.s32.totalorder %s88, %s91
    %p97 = scmp.eq.s32.totalorder %s10, 0
    %p98 = por %p96, %p97
    %p99 = scmp.ne.s32.totalorder %s88, %s91
    %p100 = scmp.eq.s32.totalorder %s15, 1
    %p101 = por %p99, %p100
    %p102 = scmp.ne.s32.totalorder %s91, %s92
    %p103 = scmp.eq.s32.totalorder %s15, 0
    %p104 = por %p102, %p103
    %p105 = scmp.ne.s32.totalorder %s91, %s92
    %p106 = scmp.eq.s32.totalorder %s16, 1
    %p107 = por %p105, %p106
    %p109 = scmp.ne.s32.totalorder %s92, %s108
    %p110 = scmp.eq.s32.totalorder %s16, 0
    %p111 = por %p109, %p110
    %s112 = ssub.s32 %s10, %s17
    %p113 = scmp.eq.s32.totalorder %s112, 0
    %s115 = sadd.s32 %s114, 1
    %s116 = scalar_select %p113, %s114, %s115
    %p119 = pneg %p113
    %p120 = scmp.eq.s32.totalorder %s10, 1
    %p121 = por %p119, %p120
    %p122 = scmp.ne.s32.totalorder %s114, %s117
    %p123 = scmp.eq.s32.totalorder %s10, 0
    %p124 = por %p122, %p123
    %p125 = scmp.ne.s32.totalorder %s114, %s117
    %p126 = scmp.eq.s32.totalorder %s15, 1
    %p127 = por %p125, %p126
    %p128 = scmp.ne.s32.totalorder %s117, %s118
    %p129 = scmp.eq.s32.totalorder %s15, 0
    %p130 = por %p128, %p129
    %p131 = scmp.ne.s32.totalorder %s117, %s118
    %p132 = scmp.eq.s32.totalorder %s16, 1
    %p133 = por %p131, %p132
    %p135 = scmp.ne.s32.totalorder %s118, %s134
    %p136 = scmp.eq.s32.totalorder %s16, 0
    %p137 = por %p135, %p136
    %p138 = scmp.le.s32.totalorder 1, %s10
    %p139 = scmp.lt.s32.totalorder %s10, 3
    %p140 = pnand %p138, %p139
    %p141 = pneg %p140
    // Predicated region
    $region9: #{fno2d_forward.12} parent=5 // pred_check
      _
    $region10: #{fno2d_forward.12} parent=5 // pred_check_branch
      %143 = sbr.rel (%p140) target = $region12
    $region11: #{fno2d_forward.12} parent=5 // pred_region
      %s144 = ssub.s32 %s10, 1
      // Predicated region
      $region13: #{fno2d_forward.12} parent=11 // pred_check
        %p145 = pneg %p57
      $region14: #{fno2d_forward.12} parent=11 // pred_check_branch
        %147 = sbr.rel (%p145) target = $region16
      $region15: #{fno2d_forward.12} parent=11 // pred_region
        _
      $region16: #{fno2d_forward.12} parent=11 // pred_fallthru
        _
      // Predicated region
      $region17: #{fno2d_forward.12} parent=11 // pred_check
        %p148 = pneg %p78
      $region18: #{fno2d_forward.12} parent=11 // pred_check_branch
        %150 = sbr.rel (%p148) target = $region20
      $region19: #{fno2d_forward.12} parent=11 // pred_region
        _
      $region20: #{fno2d_forward.12} parent=11 // pred_fallthru
        _
    $region12: #{fno2d_forward.12} parent=5 // pred_fallthru
      _
    %p151 = scmp.lt.s32.totalorder %s10, 2
    // Predicated region
    $region21: #{fno2d_forward.12} parent=5 // pred_check
      %p152 = pneg %p151
    $region22: #{fno2d_forward.12} parent=5 // pred_check_branch
      %154 = sbr.rel (%p152) target = $region24
    $region23: #{fno2d_forward.12} parent=5 // pred_region
      // Predicated region
      $region25: #{fno2d_forward.12} parent=23 // pred_check
        %p155 = pneg %p30
      $region26: #{fno2d_forward.12} parent=23 // pred_check_branch
        %157 = sbr.rel (%p155) target = $region28
      $region27: #{fno2d_forward.12} parent=23 // pred_region
        %s158 = smul.u32 8, %s10
        %p159 = scmp.lt.s32.totalorder %s158, 15
        %s160 = scalar_select %p159, %s158, 15
        %s161 = smul.addr %s160, 8
        %s162 = scalar_lea.vmem %s0, %s161
        %s163 = smul.u32 8, %s10
      $region28: #{fno2d_forward.12} parent=23 // pred_fallthru
        _
      // Predicated region
      $region29: #{fno2d_forward.12} parent=23 // pred_check
        %p164 = pneg %p98
      $region30: #{fno2d_forward.12} parent=23 // pred_check_branch
        %166 = sbr.rel (%p164) target = $region32
      $region31: #{fno2d_forward.12} parent=23 // pred_region
        %s167 = smul.u32 8, %s10
        %p168 = scmp.lt.s32.totalorder %s167, 15
        %s169 = scalar_select %p168, %s167, 15
        %s170 = smul.addr %s169, 8
        %s171 = scalar_lea.vmem %s3, %s170
        %s172 = smul.u32 8, %s10
      $region32: #{fno2d_forward.12} parent=23 // pred_fallthru
        _
    $region24: #{fno2d_forward.12} parent=5 // pred_fallthru
      _
    %p173 = scmp.le.s32.totalorder 1, %s10
    %p174 = scmp.lt.s32.totalorder %s10, 3
    %p175 = pnand %p173, %p174
    %p176 = pneg %p175
    // Predicated region
    $region33: #{fno2d_forward.12} parent=5 // pred_check
      _
    $region34: #{fno2d_forward.12} parent=5 // pred_check_branch
      %178 = sbr.rel (%p175) target = $region36
    $region35: #{fno2d_forward.12} parent=5 // pred_region
      %s179 = ssub.s32 %s10, 1
      %s180 = smul.u32 8, %s15
      %p181 = scmp.lt.s32.totalorder %s180, 15
      %s182 = scalar_select %p181, %s180, 15
      %s183 = smul.addr %s182, 8
      %s184 = scalar_lea.vmem %s0, %s183
      %p185 = pneg %p36
      %p186 = pneg %p33
      %p187 = pneg %p57
      %p188 = pneg %p54
      %p189 = pneg %p78
      %p190 = pneg %p75
      %s191 = smul.u32 8, %s15
      %p192 = scmp.lt.s32.totalorder %s191, 15
      %s193 = scalar_select %p192, %s191, 15
      %s194 = smul.addr %s193, 8
      %s195 = scalar_lea.vmem %s3, %s194
      %p196 = pneg %p104
      %p197 = pneg %p101
      %p198 = pneg %p130
      %p199 = pneg %p127
      %s200 = smul.u32 8, %s15
      %p201 = scmp.lt.s32.totalorder %s200, 15
      %s202 = scalar_select %p201, %s200, 15
      %s203 = smul.addr %s202, 8
      %s204 = scalar_lea.vmem %s4, %s203
      %s205 = smul.u32 8, %s15
      %p206 = scmp.lt.s32.totalorder %s205, 15
      %s207 = scalar_select %p206, %s205, 15
      %s208 = smul.addr %s207, 8
      %s209 = scalar_lea.vmem %s0, %s208
      %s210 = smul.u32 8, %s15
      %s211 = smul.u32 8, %s15
      %p212 = scmp.lt.s32.totalorder %s211, 15
      %s213 = scalar_select %p212, %s211, 15
      %s214 = smul.addr %s213, 8
      %s215 = scalar_lea.vmem %s3, %s214
      %s216 = smul.u32 8, %s15
      %s217 = smul.u32 8, %s15
      %p218 = scmp.lt.s32.totalorder %s217, 15
      %s219 = scalar_select %p218, %s217, 15
      %s220 = smul.addr %s219, 8
      %s221 = scalar_lea.vmem %s4, %s220
      %s222 = smul.u32 8, %s15
      %v223 = vld [vmem:[%s209] sm:$0xff]
      %v224 = vld [vmem:[%s209 + $0x8] sm:$0xff]
      %v225 = vld [vmem:[%s209 + $0x10] sm:$0xff]
      %v226 = vld [vmem:[%s209 + $0x18] sm:$0xff]
      %v227 = vld [vmem:[%s209 + $0x20] sm:$0xff]
      %v228 = vld [vmem:[%s209 + $0x28] sm:$0xff]
      %v229 = vld [vmem:[%s209 + $0x30] sm:$0xff]
      %v230 = vld [vmem:[%s209 + $0x38] sm:$0xff]
      %v231 = vld [vmem:[%s1] sm:$0xff]
      %v232 = vld [vmem:[%s1 + $0x8] sm:$0xff]
      %v233 = vld [vmem:[%s1 + $0x10] sm:$0xff]
      %v234 = vld [vmem:[%s1 + $0x18] sm:$0xff]
      %v235 = vld [vmem:[%s1 + $0x20] sm:$0xff]
      %v236 = vld [vmem:[%s1 + $0x28] sm:$0xff]
      %v237 = vld [vmem:[%s1 + $0x30] sm:$0xff]
      %v238 = vld [vmem:[%s1 + $0x38] sm:$0xff]
      %v239 = vld [vmem:[%s1 + $0x40] sm:$0xff]
      %v240 = vld [vmem:[%s1 + $0x48] sm:$0xff]
      %v241 = vld [vmem:[%s1 + $0x50] sm:$0xff]
      %v242 = vld [vmem:[%s1 + $0x58] sm:$0xff]
      %v243 = vld [vmem:[%s1 + $0x60] sm:$0xff]
      %v244 = vld [vmem:[%s1 + $0x68] sm:$0xff]
      %v245 = vld [vmem:[%s1 + $0x70] sm:$0xff]
      %v246 = vld [vmem:[%s1 + $0x78] sm:$0xff]
      %v247 = vld [vmem:[%s2] sm:$0x1]
      %v249 = vperm.slane %v247, 0
      %251 = vmatpush.msra.mxu0 %v246
      %252 = vmatpush.msra.mxu0 %v245
      %253 = vmatpush.msra.mxu0 %v244
      %254 = vmatpush.msra.mxu0 %v243
      %255 = vmatpush.msra.mxu0 %v242
      %256 = vmatpush.msra.mxu0 %v241
      %257 = vmatpush.msra.mxu0 %v240
      %258 = vmatpush.msra.mxu0 %v239
      %259 = vmatpush.msra.mxu0 %v238
      %260 = vmatpush.msra.mxu0 %v237
      %261 = vmatpush.msra.mxu0 %v236
      %262 = vmatpush.msra.mxu0 %v235
      %263 = vmatpush.msra.mxu0 %v234
      %264 = vmatpush.msra.mxu0 %v233
      %265 = vmatpush.msra.mxu0 %v232
      %266 = vmatpush.msra.mxu0 %v231
      %267 = vmatmul.f32.gmra.mxu0 %v223
      %v268 = vpop.f32.mrf.mxu0
      %v269 = vadd.f32 %v249, %v268
      %270 = vmatmul.f32.gmra.mxu0 %v224
      %v271 = vpop.f32.mrf.mxu0
      %v272 = vadd.f32 %v249, %v271
      %273 = vmatmul.f32.gmra.mxu0 %v225
      %v274 = vpop.f32.mrf.mxu0
      %v275 = vadd.f32 %v249, %v274
      %276 = vmatmul.f32.gmra.mxu0 %v226
      %v277 = vpop.f32.mrf.mxu0
      %v278 = vadd.f32 %v249, %v277
      %279 = vmatmul.f32.gmra.mxu0 %v227
      %v280 = vpop.f32.mrf.mxu0
      %v281 = vadd.f32 %v249, %v280
      %282 = vmatmul.f32.gmra.mxu0 %v228
      %v283 = vpop.f32.mrf.mxu0
      %v284 = vadd.f32 %v249, %v283
      %285 = vmatmul.f32.gmra.mxu0 %v229
      %v286 = vpop.f32.mrf.mxu0
      %v287 = vadd.f32 %v249, %v286
      %288 = vmatmul.f32.gmra.mxu0 %v230
      %v289 = vpop.f32.mrf.mxu0
      %v290 = vadd.f32 %v249, %v289
      %291 = vdwg.mxu0
      %v292 = vld [vmem:[%s215] sm:$0xff]
      %v293 = vld [vmem:[%s215 + $0x8] sm:$0xff]
      %v294 = vld [vmem:[%s215 + $0x10] sm:$0xff]
      %v295 = vld [vmem:[%s215 + $0x18] sm:$0xff]
      %v296 = vld [vmem:[%s215 + $0x20] sm:$0xff]
      %v297 = vld [vmem:[%s215 + $0x28] sm:$0xff]
      %v298 = vld [vmem:[%s215 + $0x30] sm:$0xff]
      %v299 = vld [vmem:[%s215 + $0x38] sm:$0xff]
      %v300 = vadd.f32 %v269, %v292
      %v301 = vadd.f32 %v272, %v293
      %v302 = vadd.f32 %v275, %v294
      %v303 = vadd.f32 %v278, %v295
      %v304 = vadd.f32 %v281, %v296
      %v305 = vadd.f32 %v284, %v297
      %v306 = vadd.f32 %v287, %v298
      %v307 = vadd.f32 %v290, %v299
      %v308 = vmul.f32 %v300, 0.5
      %v309 = vmul.f32 %v301, 0.5
      %v310 = vmul.f32 %v302, 0.5
      %v311 = vmul.f32 %v303, 0.5
      %v312 = vmul.f32 %v304, 0.5
      %v313 = vmul.f32 %v305, 0.5
      %v314 = vmul.f32 %v306, 0.5
      %v315 = vmul.f32 %v307, 0.5
      %v316 = vmul.f32 %v300, 0.70710677
      %v317 = vmul.f32 %v301, 0.70710677
      %v318 = vmul.f32 %v302, 0.70710677
      %v319 = vmul.f32 %v303, 0.70710677
      %v320 = vmul.f32 %v304, 0.70710677
      %v321 = vmul.f32 %v305, 0.70710677
      %v322 = vmul.f32 %v306, 0.70710677
      %v323 = vmul.f32 %v307, 0.70710677
      %vm324 = vcmp.ge.f32.partialorder %v316, 0.0
      %vm325 = vcmp.ge.f32.partialorder %v317, 0.0
      %vm326 = vcmp.ge.f32.partialorder %v318, 0.0
      %vm327 = vcmp.ge.f32.partialorder %v319, 0.0
      %vm328 = vcmp.ge.f32.partialorder %v320, 0.0
      %vm329 = vcmp.ge.f32.partialorder %v321, 0.0
      %vm330 = vcmp.ge.f32.partialorder %v322, 0.0
      %vm331 = vcmp.ge.f32.partialorder %v323, 0.0
      %v332 = vsel %vm324, 1.0, -1.0
      %v333 = vsel %vm325, 1.0, -1.0
      %v334 = vsel %vm326, 1.0, -1.0
      %v335 = vsel %vm327, 1.0, -1.0
      %v336 = vsel %vm328, 1.0, -1.0
      %v337 = vsel %vm329, 1.0, -1.0
      %v338 = vsel %vm330, 1.0, -1.0
      %v339 = vsel %vm331, 1.0, -1.0
      %v340 = vand.u32 2147483647, %v316
      %v341 = vand.u32 2147483647, %v317
      %v342 = vand.u32 2147483647, %v318
      %v343 = vand.u32 2147483647, %v319
      %v344 = vand.u32 2147483647, %v320
      %v345 = vand.u32 2147483647, %v321
      %v346 = vand.u32 2147483647, %v322
      %v347 = vand.u32 2147483647, %v323
      %v348 = vmul.f32 %v340, 0.3275911
      %v349 = vmul.f32 %v341, 0.3275911
      %v350 = vmul.f32 %v342, 0.3275911
      %v351 = vmul.f32 %v343, 0.3275911
      %v352 = vmul.f32 %v344, 0.3275911
      %v353 = vmul.f32 %v345, 0.3275911
      %v354 = vmul.f32 %v346, 0.3275911
      %v355 = vmul.f32 %v347, 0.3275911
      %v356 = vadd.f32 %v348, 1.0
      %v357 = vadd.f32 %v349, 1.0
      %v358 = vadd.f32 %v350, 1.0
      %v359 = vadd.f32 %v351, 1.0
      %v360 = vadd.f32 %v352, 1.0
      %v361 = vadd.f32 %v353, 1.0
      %v362 = vadd.f32 %v354, 1.0
      %v363 = vadd.f32 %v355, 1.0
      %v364 = vrcp.pop %v356
      %v365 = vmul.f32 %v356, %v364
      %v366 = vsub.f32 1.0, %v365
      %v367 = vmul.f32 %v364, %v366
      %v368 = vadd.f32 %v364, %v367
      %vm369 = vweird.f32 %v356
      %vm370 = vweird.f32 %v364
      %vm371 = vmor %vm369, %vm370
      %v372 = vsel %vm371, %v364, %v368
      %v373 = vand.u32 2147483647, %v356
      %vm374 = vcmp.eq.f32.partialorder %v373, 8.507059e+37
      %v375 = vand.u32 %v356, 2147483648
      %v376 = vor.u32 1.1754944e-38, %v375
      %v377 = vsel %vm374, %v376, %v372
      %v378 = vmul.f32 1.0, %v377
      %v379 = vrcp.pop %v357
      %v380 = vmul.f32 %v357, %v379
      %v381 = vsub.f32 1.0, %v380
      %v382 = vmul.f32 %v379, %v381
      %v383 = vadd.f32 %v379, %v382
      %vm384 = vweird.f32 %v357
      %vm385 = vweird.f32 %v379
      %vm386 = vmor %vm384, %vm385
      %v387 = vsel %vm386, %v379, %v383
      %v388 = vand.u32 2147483647, %v357
      %vm389 = vcmp.eq.f32.partialorder %v388, 8.507059e+37
      %v390 = vand.u32 %v357, 2147483648
      %v391 = vor.u32 1.1754944e-38, %v390
      %v392 = vsel %vm389, %v391, %v387
      %v393 = vmul.f32 1.0, %v392
      %v394 = vrcp.pop %v358
      %v395 = vmul.f32 %v358, %v394
      %v396 = vsub.f32 1.0, %v395
      %v397 = vmul.f32 %v394, %v396
      %v398 = vadd.f32 %v394, %v397
      %vm399 = vweird.f32 %v358
      %vm400 = vweird.f32 %v394
      %vm401 = vmor %vm399, %vm400
      %v402 = vsel %vm401, %v394, %v398
      %v403 = vand.u32 2147483647, %v358
      %vm404 = vcmp.eq.f32.partialorder %v403, 8.507059e+37
      %v405 = vand.u32 %v358, 2147483648
      %v406 = vor.u32 1.1754944e-38, %v405
      %v407 = vsel %vm404, %v406, %v402
      %v408 = vmul.f32 1.0, %v407
      %v409 = vrcp.pop %v359
      %v410 = vmul.f32 %v359, %v409
      %v411 = vsub.f32 1.0, %v410
      %v412 = vmul.f32 %v409, %v411
      %v413 = vadd.f32 %v409, %v412
      %vm414 = vweird.f32 %v359
      %vm415 = vweird.f32 %v409
      %vm416 = vmor %vm414, %vm415
      %v417 = vsel %vm416, %v409, %v413
      %v418 = vand.u32 2147483647, %v359
      %vm419 = vcmp.eq.f32.partialorder %v418, 8.507059e+37
      %v420 = vand.u32 %v359, 2147483648
      %v421 = vor.u32 1.1754944e-38, %v420
      %v422 = vsel %vm419, %v421, %v417
      %v423 = vmul.f32 1.0, %v422
      %v424 = vrcp.pop %v360
      %v425 = vmul.f32 %v360, %v424
      %v426 = vsub.f32 1.0, %v425
      %v427 = vmul.f32 %v424, %v426
      %v428 = vadd.f32 %v424, %v427
      %vm429 = vweird.f32 %v360
      %vm430 = vweird.f32 %v424
      %vm431 = vmor %vm429, %vm430
      %v432 = vsel %vm431, %v424, %v428
      %v433 = vand.u32 2147483647, %v360
      %vm434 = vcmp.eq.f32.partialorder %v433, 8.507059e+37
      %v435 = vand.u32 %v360, 2147483648
      %v436 = vor.u32 1.1754944e-38, %v435
      %v437 = vsel %vm434, %v436, %v432
      %v438 = vmul.f32 1.0, %v437
      %v439 = vrcp.pop %v361
      %v440 = vmul.f32 %v361, %v439
      %v441 = vsub.f32 1.0, %v440
      %v442 = vmul.f32 %v439, %v441
      %v443 = vadd.f32 %v439, %v442
      %vm444 = vweird.f32 %v361
      %vm445 = vweird.f32 %v439
      %vm446 = vmor %vm444, %vm445
      %v447 = vsel %vm446, %v439, %v443
      %v448 = vand.u32 2147483647, %v361
      %vm449 = vcmp.eq.f32.partialorder %v448, 8.507059e+37
      %v450 = vand.u32 %v361, 2147483648
      %v451 = vor.u32 1.1754944e-38, %v450
      %v452 = vsel %vm449, %v451, %v447
      %v453 = vmul.f32 1.0, %v452
      %v454 = vrcp.pop %v362
      %v455 = vmul.f32 %v362, %v454
      %v456 = vsub.f32 1.0, %v455
      %v457 = vmul.f32 %v454, %v456
      %v458 = vadd.f32 %v454, %v457
      %vm459 = vweird.f32 %v362
      %vm460 = vweird.f32 %v454
      %vm461 = vmor %vm459, %vm460
      %v462 = vsel %vm461, %v454, %v458
      %v463 = vand.u32 2147483647, %v362
      %vm464 = vcmp.eq.f32.partialorder %v463, 8.507059e+37
      %v465 = vand.u32 %v362, 2147483648
      %v466 = vor.u32 1.1754944e-38, %v465
      %v467 = vsel %vm464, %v466, %v462
      %v468 = vmul.f32 1.0, %v467
      %v469 = vrcp.pop %v363
      %v470 = vmul.f32 %v363, %v469
      %v471 = vsub.f32 1.0, %v470
      %v472 = vmul.f32 %v469, %v471
      %v473 = vadd.f32 %v469, %v472
      %vm474 = vweird.f32 %v363
      %vm475 = vweird.f32 %v469
      %vm476 = vmor %vm474, %vm475
      %v477 = vsel %vm476, %v469, %v473
      %v478 = vand.u32 2147483647, %v363
      %vm479 = vcmp.eq.f32.partialorder %v478, 8.507059e+37
      %v480 = vand.u32 %v363, 2147483648
      %v481 = vor.u32 1.1754944e-38, %v480
      %v482 = vsel %vm479, %v481, %v477
      %v483 = vmul.f32 1.0, %v482
      %v484 = vmul.f32 %v378, 1.0614054
      %v485 = vmul.f32 %v393, 1.0614054
      %v486 = vmul.f32 %v408, 1.0614054
      %v487 = vmul.f32 %v423, 1.0614054
      %v488 = vmul.f32 %v438, 1.0614054
      %v489 = vmul.f32 %v453, 1.0614054
      %v490 = vmul.f32 %v468, 1.0614054
      %v491 = vmul.f32 %v483, 1.0614054
      %v492 = vadd.f32 %v484, -1.4531521
      %v493 = vadd.f32 %v485, -1.4531521
      %v494 = vadd.f32 %v486, -1.4531521
      %v495 = vadd.f32 %v487, -1.4531521
      %v496 = vadd.f32 %v488, -1.4531521
      %v497 = vadd.f32 %v489, -1.4531521
      %v498 = vadd.f32 %v490, -1.4531521
      %v499 = vadd.f32 %v491, -1.4531521
      %v500 = vmul.f32 %v492, %v378
      %v501 = vmul.f32 %v493, %v393
      %v502 = vmul.f32 %v494, %v408
      %v503 = vmul.f32 %v495, %v423
      %v504 = vmul.f32 %v496, %v438
      %v505 = vmul.f32 %v497, %v453
      %v506 = vmul.f32 %v498, %v468
      %v507 = vmul.f32 %v499, %v483
      %v508 = vadd.f32 %v500, 1.4214138
      %v509 = vadd.f32 %v501, 1.4214138
      %v510 = vadd.f32 %v502, 1.4214138
      %v511 = vadd.f32 %v503, 1.4214138
      %v512 = vadd.f32 %v504, 1.4214138
      %v513 = vadd.f32 %v505, 1.4214138
      %v514 = vadd.f32 %v506, 1.4214138
      %v515 = vadd.f32 %v507, 1.4214138
      %v516 = vmul.f32 %v508, %v378
      %v517 = vmul.f32 %v509, %v393
      %v518 = vmul.f32 %v510, %v408
      %v519 = vmul.f32 %v511, %v423
      %v520 = vmul.f32 %v512, %v438
      %v521 = vmul.f32 %v513, %v453
      %v522 = vmul.f32 %v514, %v468
      %v523 = vmul.f32 %v515, %v483
      %v524 = vadd.f32 %v516, -0.28449672
      %v525 = vadd.f32 %v517, -0.28449672
      %v526 = vadd.f32 %v518, -0.28449672
      %v527 = vadd.f32 %v519, -0.28449672
      %v528 = vadd.f32 %v520, -0.28449672
      %v529 = vadd.f32 %v521, -0.28449672
      %v530 = vadd.f32 %v522, -0.28449672
      %v531 = vadd.f32 %v523, -0.28449672
      %v532 = vmul.f32 %v524, %v378
      %v533 = vmul.f32 %v525, %v393
      %v534 = vmul.f32 %v526, %v408
      %v535 = vmul.f32 %v527, %v423
      %v536 = vmul.f32 %v528, %v438
      %v537 = vmul.f32 %v529, %v453
      %v538 = vmul.f32 %v530, %v468
      %v539 = vmul.f32 %v531, %v483
      %v540 = vadd.f32 %v532, 0.2548296
      %v541 = vadd.f32 %v533, 0.2548296
      %v542 = vadd.f32 %v534, 0.2548296
      %v543 = vadd.f32 %v535, 0.2548296
      %v544 = vadd.f32 %v536, 0.2548296
      %v545 = vadd.f32 %v537, 0.2548296
      %v546 = vadd.f32 %v538, 0.2548296
      %v547 = vadd.f32 %v539, 0.2548296
      %v548 = vmul.f32 %v540, %v378
      %v549 = vmul.f32 %v541, %v393
      %v550 = vmul.f32 %v542, %v408
      %v551 = vmul.f32 %v543, %v423
      %v552 = vmul.f32 %v544, %v438
      %v553 = vmul.f32 %v545, %v453
      %v554 = vmul.f32 %v546, %v468
      %v555 = vmul.f32 %v547, %v483
      %v556 = vsub.f32 0.0, %v340
      %v557 = vsub.f32 0.0, %v341
      %v558 = vsub.f32 0.0, %v342
      %v559 = vsub.f32 0.0, %v343
      %v560 = vsub.f32 0.0, %v344
      %v561 = vsub.f32 0.0, %v345
      %v562 = vsub.f32 0.0, %v346
      %v563 = vsub.f32 0.0, %v347
      %v564 = vmul.f32 %v556, %v340
      %v565 = vmul.f32 %v557, %v341
      %v566 = vmul.f32 %v558, %v342
      %v567 = vmul.f32 %v559, %v343
      %v568 = vmul.f32 %v560, %v344
      %v569 = vmul.f32 %v561, %v345
      %v570 = vmul.f32 %v562, %v346
      %v571 = vmul.f32 %v563, %v347
      %v572 = vmul.f32 %v564, 1.442695
      %v573 = vpow.pop %v572
      %v574 = vmul.f32 %v565, 1.442695
      %v575 = vpow.pop %v574
      %v576 = vmul.f32 %v566, 1.442695
      %v577 = vpow.pop %v576
      %v578 = vmul.f32 %v567, 1.442695
      %v579 = vpow.pop %v578
      %v580 = vmul.f32 %v568, 1.442695
      %v581 = vpow.pop %v580
      %v582 = vmul.f32 %v569, 1.442695
      %v583 = vpow.pop %v582
      %v584 = vmul.f32 %v570, 1.442695
      %v585 = vpow.pop %v584
      %v586 = vmul.f32 %v571, 1.442695
      %v587 = vpow.pop %v586
      %v588 = vmul.f32 %v548, %v573
      %v589 = vmul.f32 %v549, %v575
      %v590 = vmul.f32 %v550, %v577
      %v591 = vmul.f32 %v551, %v579
      %v592 = vmul.f32 %v552, %v581
      %v593 = vmul.f32 %v553, %v583
      %v594 = vmul.f32 %v554, %v585
      %v595 = vmul.f32 %v555, %v587
      %v596 = vsub.f32 1.0, %v588
      %v597 = vsub.f32 1.0, %v589
      %v598 = vsub.f32 1.0, %v590
      %v599 = vsub.f32 1.0, %v591
      %v600 = vsub.f32 1.0, %v592
      %v601 = vsub.f32 1.0, %v593
      %v602 = vsub.f32 1.0, %v594
      %v603 = vsub.f32 1.0, %v595
      %v604 = vmul.f32 %v332, %v596
      %v605 = vmul.f32 %v333, %v597
      %v606 = vmul.f32 %v334, %v598
      %v607 = vmul.f32 %v335, %v599
      %v608 = vmul.f32 %v336, %v600
      %v609 = vmul.f32 %v337, %v601
      %v610 = vmul.f32 %v338, %v602
      %v611 = vmul.f32 %v339, %v603
      %v612 = vadd.f32 %v604, 1.0
      %v613 = vadd.f32 %v605, 1.0
      %v614 = vadd.f32 %v606, 1.0
      %v615 = vadd.f32 %v607, 1.0
      %v616 = vadd.f32 %v608, 1.0
      %v617 = vadd.f32 %v609, 1.0
      %v618 = vadd.f32 %v610, 1.0
      %v619 = vadd.f32 %v611, 1.0
      %v620 = vmul.f32 %v308, %v612
      %v621 = vmul.f32 %v309, %v613
      %v622 = vmul.f32 %v310, %v614
      %v623 = vmul.f32 %v311, %v615
      %v624 = vmul.f32 %v312, %v616
      %v625 = vmul.f32 %v313, %v617
      %v626 = vmul.f32 %v314, %v618
      %v627 = vmul.f32 %v315, %v619
      %628 = vst [vmem:[%s221] sm:$0xff] %v620
      %629 = vst [vmem:[%s221 + $0x8] sm:$0xff] %v621
      %630 = vst [vmem:[%s221 + $0x10] sm:$0xff] %v622
      %631 = vst [vmem:[%s221 + $0x18] sm:$0xff] %v623
      %632 = vst [vmem:[%s221 + $0x20] sm:$0xff] %v624
      %633 = vst [vmem:[%s221 + $0x28] sm:$0xff] %v625
      %634 = vst [vmem:[%s221 + $0x30] sm:$0xff] %v626
      %635 = vst [vmem:[%s221 + $0x38] sm:$0xff] %v627
      %s636 = smul.u32 8, %s15
      %p637 = scmp.lt.s32.totalorder %s636, 15
      %s638 = scalar_select %p637, %s636, 15
      %s639 = smul.addr %s638, 8
      %s640 = scalar_lea.vmem %s4, %s639
      // Predicated region
      $region37: #{fno2d_forward.12} parent=35 // pred_check
        %p641 = pneg %p127
      $region38: #{fno2d_forward.12} parent=35 // pred_check_branch
        %643 = sbr.rel (%p641) target = $region40
      $region39: #{fno2d_forward.12} parent=35 // pred_region
        %s644 = smul.u32 8, %s15
      $region40: #{fno2d_forward.12} parent=35 // pred_fallthru
        _
    $region36: #{fno2d_forward.12} parent=5 // pred_fallthru
      _
    %p645 = scmp.le.s32.totalorder 2, %s10
    // Predicated region
    $region41: #{fno2d_forward.12} parent=5 // pred_check
      %p646 = pneg %p645
    $region42: #{fno2d_forward.12} parent=5 // pred_check_branch
      %648 = sbr.rel (%p646) target = $region44
    $region43: #{fno2d_forward.12} parent=5 // pred_region
      %s649 = ssub.s32 %s10, 2
      // Predicated region
      $region45: #{fno2d_forward.12} parent=43 // pred_check
        %p650 = pneg %p133
      $region46: #{fno2d_forward.12} parent=43 // pred_check_branch
        %652 = sbr.rel (%p650) target = $region48
      $region47: #{fno2d_forward.12} parent=43 // pred_region
        %s653 = smul.u32 8, %s16
        %p654 = scmp.lt.s32.totalorder %s653, 15
        %s655 = scalar_select %p654, %s653, 15
        %s656 = smul.addr %s655, 8
        %s657 = scalar_lea.vmem %s4, %s656
      $region48: #{fno2d_forward.12} parent=43 // pred_fallthru
        _
    $region44: #{fno2d_forward.12} parent=5 // pred_fallthru
      _
  $region6: #{fno2d_forward.12} parent=0 // loop_footer
    %s14 = sadd.s32 1, %s10
  $region7: #{fno2d_forward.12} parent=0 // loop_footer_branch
    %9 = sbr.rel target = $region3
  $region8: #{fno2d_forward.12} parent=0 // loop_exit
    _

// kernel: fno2d_forward.18
$region0: #{fno2d_forward.18}
  #allocation0 [shape = 'u32[]', space=smem, size = 0x4, offset = 0x4, fixed_abs, tag = 'smem constant byte address 0x4 - core index']
  #allocation1 [shape = 'u32[72,128]{1,0:T(1,128)}', space=vmem, size = 0x9000, scoped, tag = 'internal scratch']
  %s0 = inlined_call_operand.vmem [shape: f32[128,128], index: 0, kind: input, shape index: {}]
  %s1 = inlined_call_operand.vmem [shape: f32[128,128], index: 1, kind: input, shape index: {}]
  %s2 = inlined_call_operand.vmem [shape: f32[1,128], index: 2, kind: input, shape index: {}]
  %s3 = inlined_call_operand.vmem [shape: f32[128,128], index: 3, kind: input, shape index: {}]
  %s4 = inlined_call_operand.vmem [shape: f32[128,128], index: 4, kind: output, shape index: {}]
  %s5 = sld [smem:[#allocation0]]
  $region49: #{fno2d_forward.18} parent=0
    _
  %s7 = ssub.s32 1, %s5
  %s8 = scalar_select 0, %s7, %s5
  loop: start=0, step=1, limit=4
  $region2: #{fno2d_forward.18} parent=0 // loop_pre_header
    _
  $region3: #{fno2d_forward.18} parent=0 // loop_header
    %s10 = sphi 0, %s14
    %p11 = scmp.ge.s32.totalorder %s10, 4
    %s20 = sphi 0, %s22
    %s23 = sphi 0, %s20
    %s24 = sphi 0, %s23
    %s40 = sphi 0, %s24
    %s44 = sphi 0, %s44
    %s46 = sphi 0, %s44
    %s47 = sphi 0, %s46
    %s61 = sphi 0, %s47
    %s65 = sphi 0, %s65
    %s67 = sphi 0, %s65
    %s68 = sphi 0, %s67
    %s82 = sphi 0, %s68
    %s88 = sphi 0, %s90
    %s91 = sphi 0, %s88
    %s92 = sphi 0, %s91
    %s108 = sphi 0, %s92
    %s114 = sphi 0, %s116
    %s117 = sphi 0, %s114
    %s118 = sphi 0, %s117
    %s134 = sphi 0, %s118
  $region4: #{fno2d_forward.18} parent=0 // loop_header_branch
    %13 = sbr.rel (%p11) target = $region8
  $region5: #{fno2d_forward.18} parent=0 // loop_body
    %s15 = ssub.s32 %s10, 1
    %s16 = ssub.s32 %s10, 2
    %s17 = sadd.s32 %s10, 1
    %s18 = ssub.s32 %s10, %s17
    %p19 = scmp.eq.s32.totalorder %s18, 0
    %s21 = sadd.s32 %s20, 1
    %s22 = scalar_select %p19, %s20, %s21
    %p25 = pneg %p19
    %p26 = scmp.eq.s32.totalorder %s10, 1
    %p27 = por %p25, %p26
    %p28 = scmp.ne.s32.totalorder %s20, %s23
    %p29 = scmp.eq.s32.totalorder %s10, 0
    %p30 = por %p28, %p29
    %p31 = scmp.ne.s32.totalorder %s20, %s23
    %p32 = scmp.eq.s32.totalorder %s15, 1
    %p33 = por %p31, %p32
    %p34 = scmp.ne.s32.totalorder %s23, %s24
    %p35 = scmp.eq.s32.totalorder %s15, 0
    %p36 = por %p34, %p35
    %p37 = scmp.ne.s32.totalorder %s23, %s24
    %p38 = scmp.eq.s32.totalorder %s16, 1
    %p39 = por %p37, %p38
    %p41 = scmp.ne.s32.totalorder %s24, %s40
    %p42 = scmp.eq.s32.totalorder %s16, 0
    %p43 = por %p41, %p42
    %s45 = sadd.s32 %s44, 1
    %p48 = scmp.eq.s32.totalorder %s10, 1
    %p49 = scmp.ne.s32.totalorder %s44, %s46
    %p50 = scmp.eq.s32.totalorder %s10, 0
    %p51 = por %p49, %p50
    %p52 = scmp.ne.s32.totalorder %s44, %s46
    %p53 = scmp.eq.s32.totalorder %s15, 1
    %p54 = por %p52, %p53
    %p55 = scmp.ne.s32.totalorder %s46, %s47
    %p56 = scmp.eq.s32.totalorder %s15, 0
    %p57 = por %p55, %p56
    %p58 = scmp.ne.s32.totalorder %s46, %s47
    %p59 = scmp.eq.s32.totalorder %s16, 1
    %p60 = por %p58, %p59
    %p62 = scmp.ne.s32.totalorder %s47, %s61
    %p63 = scmp.eq.s32.totalorder %s16, 0
    %p64 = por %p62, %p63
    %s66 = sadd.s32 %s65, 1
    %p69 = scmp.eq.s32.totalorder %s10, 1
    %p70 = scmp.ne.s32.totalorder %s65, %s67
    %p71 = scmp.eq.s32.totalorder %s10, 0
    %p72 = por %p70, %p71
    %p73 = scmp.ne.s32.totalorder %s65, %s67
    %p74 = scmp.eq.s32.totalorder %s15, 1
    %p75 = por %p73, %p74
    %p76 = scmp.ne.s32.totalorder %s67, %s68
    %p77 = scmp.eq.s32.totalorder %s15, 0
    %p78 = por %p76, %p77
    %p79 = scmp.ne.s32.totalorder %s67, %s68
    %p80 = scmp.eq.s32.totalorder %s16, 1
    %p81 = por %p79, %p80
    %p83 = scmp.ne.s32.totalorder %s68, %s82
    %p84 = scmp.eq.s32.totalorder %s16, 0
    %p85 = por %p83, %p84
    %s86 = ssub.s32 %s10, %s17
    %p87 = scmp.eq.s32.totalorder %s86, 0
    %s89 = sadd.s32 %s88, 1
    %s90 = scalar_select %p87, %s88, %s89
    %p93 = pneg %p87
    %p94 = scmp.eq.s32.totalorder %s10, 1
    %p95 = por %p93, %p94
    %p96 = scmp.ne.s32.totalorder %s88, %s91
    %p97 = scmp.eq.s32.totalorder %s10, 0
    %p98 = por %p96, %p97
    %p99 = scmp.ne.s32.totalorder %s88, %s91
    %p100 = scmp.eq.s32.totalorder %s15, 1
    %p101 = por %p99, %p100
    %p102 = scmp.ne.s32.totalorder %s91, %s92
    %p103 = scmp.eq.s32.totalorder %s15, 0
    %p104 = por %p102, %p103
    %p105 = scmp.ne.s32.totalorder %s91, %s92
    %p106 = scmp.eq.s32.totalorder %s16, 1
    %p107 = por %p105, %p106
    %p109 = scmp.ne.s32.totalorder %s92, %s108
    %p110 = scmp.eq.s32.totalorder %s16, 0
    %p111 = por %p109, %p110
    %s112 = ssub.s32 %s10, %s17
    %p113 = scmp.eq.s32.totalorder %s112, 0
    %s115 = sadd.s32 %s114, 1
    %s116 = scalar_select %p113, %s114, %s115
    %p119 = pneg %p113
    %p120 = scmp.eq.s32.totalorder %s10, 1
    %p121 = por %p119, %p120
    %p122 = scmp.ne.s32.totalorder %s114, %s117
    %p123 = scmp.eq.s32.totalorder %s10, 0
    %p124 = por %p122, %p123
    %p125 = scmp.ne.s32.totalorder %s114, %s117
    %p126 = scmp.eq.s32.totalorder %s15, 1
    %p127 = por %p125, %p126
    %p128 = scmp.ne.s32.totalorder %s117, %s118
    %p129 = scmp.eq.s32.totalorder %s15, 0
    %p130 = por %p128, %p129
    %p131 = scmp.ne.s32.totalorder %s117, %s118
    %p132 = scmp.eq.s32.totalorder %s16, 1
    %p133 = por %p131, %p132
    %p135 = scmp.ne.s32.totalorder %s118, %s134
    %p136 = scmp.eq.s32.totalorder %s16, 0
    %p137 = por %p135, %p136
    %p138 = scmp.le.s32.totalorder 1, %s10
    %p139 = scmp.lt.s32.totalorder %s10, 3
    %p140 = pnand %p138, %p139
    %p141 = pneg %p140
    // Predicated region
    $region9: #{fno2d_forward.18} parent=5 // pred_check
      _
    $region10: #{fno2d_forward.18} parent=5 // pred_check_branch
      %143 = sbr.rel (%p140) target = $region12
    $region11: #{fno2d_forward.18} parent=5 // pred_region
      %s144 = ssub.s32 %s10, 1
      // Predicated region
      $region13: #{fno2d_forward.18} parent=11 // pred_check
        %p145 = pneg %p57
      $region14: #{fno2d_forward.18} parent=11 // pred_check_branch
        %147 = sbr.rel (%p145) target = $region16
      $region15: #{fno2d_forward.18} parent=11 // pred_region
        _
      $region16: #{fno2d_forward.18} parent=11 // pred_fallthru
        _
      // Predicated region
      $region17: #{fno2d_forward.18} parent=11 // pred_check
        %p148 = pneg %p78
      $region18: #{fno2d_forward.18} parent=11 // pred_check_branch
        %150 = sbr.rel (%p148) target = $region20
      $region19: #{fno2d_forward.18} parent=11 // pred_region
        _
      $region20: #{fno2d_forward.18} parent=11 // pred_fallthru
        _
    $region12: #{fno2d_forward.18} parent=5 // pred_fallthru
      _
    %p151 = scmp.lt.s32.totalorder %s10, 2
    // Predicated region
    $region21: #{fno2d_forward.18} parent=5 // pred_check
      %p152 = pneg %p151
    $region22: #{fno2d_forward.18} parent=5 // pred_check_branch
      %154 = sbr.rel (%p152) target = $region24
    $region23: #{fno2d_forward.18} parent=5 // pred_region
      // Predicated region
      $region25: #{fno2d_forward.18} parent=23 // pred_check
        %p155 = pneg %p30
      $region26: #{fno2d_forward.18} parent=23 // pred_check_branch
        %157 = sbr.rel (%p155) target = $region28
      $region27: #{fno2d_forward.18} parent=23 // pred_region
        %s158 = smul.u32 8, %s10
        %p159 = scmp.lt.s32.totalorder %s158, 15
        %s160 = scalar_select %p159, %s158, 15
        %s161 = smul.addr %s160, 8
        %s162 = scalar_lea.vmem %s0, %s161
        %s163 = smul.u32 8, %s10
      $region28: #{fno2d_forward.18} parent=23 // pred_fallthru
        _
      // Predicated region
      $region29: #{fno2d_forward.18} parent=23 // pred_check
        %p164 = pneg %p98
      $region30: #{fno2d_forward.18} parent=23 // pred_check_branch
        %166 = sbr.rel (%p164) target = $region32
      $region31: #{fno2d_forward.18} parent=23 // pred_region
        %s167 = smul.u32 8, %s10
        %p168 = scmp.lt.s32.totalorder %s167, 15
        %s169 = scalar_select %p168, %s167, 15
        %s170 = smul.addr %s169, 8
        %s171 = scalar_lea.vmem %s3, %s170
        %s172 = smul.u32 8, %s10
      $region32: #{fno2d_forward.18} parent=23 // pred_fallthru
        _
    $region24: #{fno2d_forward.18} parent=5 // pred_fallthru
      _
    %p173 = scmp.le.s32.totalorder 1, %s10
    %p174 = scmp.lt.s32.totalorder %s10, 3
    %p175 = pnand %p173, %p174
    %p176 = pneg %p175
    // Predicated region
    $region33: #{fno2d_forward.18} parent=5 // pred_check
      _
    $region34: #{fno2d_forward.18} parent=5 // pred_check_branch
      %178 = sbr.rel (%p175) target = $region36
    $region35: #{fno2d_forward.18} parent=5 // pred_region
      %s179 = ssub.s32 %s10, 1
      %s180 = smul.u32 8, %s15
      %p181 = scmp.lt.s32.totalorder %s180, 15
      %s182 = scalar_select %p181, %s180, 15
      %s183 = smul.addr %s182, 8
      %s184 = scalar_lea.vmem %s0, %s183
      %p185 = pneg %p36
      %p186 = pneg %p33
      %p187 = pneg %p57
      %p188 = pneg %p54
      %p189 = pneg %p78
      %p190 = pneg %p75
      %s191 = smul.u32 8, %s15
      %p192 = scmp.lt.s32.totalorder %s191, 15
      %s193 = scalar_select %p192, %s191, 15
      %s194 = smul.addr %s193, 8
      %s195 = scalar_lea.vmem %s3, %s194
      %p196 = pneg %p104
      %p197 = pneg %p101
      %p198 = pneg %p130
      %p199 = pneg %p127
      %s200 = smul.u32 8, %s15
      %p201 = scmp.lt.s32.totalorder %s200, 15
      %s202 = scalar_select %p201, %s200, 15
      %s203 = smul.addr %s202, 8
      %s204 = scalar_lea.vmem %s4, %s203
      %s205 = smul.u32 8, %s15
      %p206 = scmp.lt.s32.totalorder %s205, 15
      %s207 = scalar_select %p206, %s205, 15
      %s208 = smul.addr %s207, 8
      %s209 = scalar_lea.vmem %s0, %s208
      %s210 = smul.u32 8, %s15
      %s211 = smul.u32 8, %s15
      %p212 = scmp.lt.s32.totalorder %s211, 15
      %s213 = scalar_select %p212, %s211, 15
      %s214 = smul.addr %s213, 8
      %s215 = scalar_lea.vmem %s3, %s214
      %s216 = smul.u32 8, %s15
      %s217 = smul.u32 8, %s15
      %p218 = scmp.lt.s32.totalorder %s217, 15
      %s219 = scalar_select %p218, %s217, 15
      %s220 = smul.addr %s219, 8
      %s221 = scalar_lea.vmem %s4, %s220
      %s222 = smul.u32 8, %s15
      %v223 = vld [vmem:[%s209] sm:$0xff]
      %v224 = vld [vmem:[%s209 + $0x8] sm:$0xff]
      %v225 = vld [vmem:[%s209 + $0x10] sm:$0xff]
      %v226 = vld [vmem:[%s209 + $0x18] sm:$0xff]
      %v227 = vld [vmem:[%s209 + $0x20] sm:$0xff]
      %v228 = vld [vmem:[%s209 + $0x28] sm:$0xff]
      %v229 = vld [vmem:[%s209 + $0x30] sm:$0xff]
      %v230 = vld [vmem:[%s209 + $0x38] sm:$0xff]
      %v231 = vld [vmem:[%s1] sm:$0xff]
      %v232 = vld [vmem:[%s1 + $0x8] sm:$0xff]
      %v233 = vld [vmem:[%s1 + $0x10] sm:$0xff]
      %v234 = vld [vmem:[%s1 + $0x18] sm:$0xff]
      %v235 = vld [vmem:[%s1 + $0x20] sm:$0xff]
      %v236 = vld [vmem:[%s1 + $0x28] sm:$0xff]
      %v237 = vld [vmem:[%s1 + $0x30] sm:$0xff]
      %v238 = vld [vmem:[%s1 + $0x38] sm:$0xff]
      %v239 = vld [vmem:[%s1 + $0x40] sm:$0xff]
      %v240 = vld [vmem:[%s1 + $0x48] sm:$0xff]
      %v241 = vld [vmem:[%s1 + $0x50] sm:$0xff]
      %v242 = vld [vmem:[%s1 + $0x58] sm:$0xff]
      %v243 = vld [vmem:[%s1 + $0x60] sm:$0xff]
      %v244 = vld [vmem:[%s1 + $0x68] sm:$0xff]
      %v245 = vld [vmem:[%s1 + $0x70] sm:$0xff]
      %v246 = vld [vmem:[%s1 + $0x78] sm:$0xff]
      %v247 = vld [vmem:[%s2] sm:$0x1]
      %v249 = vperm.slane %v247, 0
      %251 = vmatpush.msra.mxu0 %v246
      %252 = vmatpush.msra.mxu0 %v245
      %253 = vmatpush.msra.mxu0 %v244
      %254 = vmatpush.msra.mxu0 %v243
      %255 = vmatpush.msra.mxu0 %v242
      %256 = vmatpush.msra.mxu0 %v241
      %257 = vmatpush.msra.mxu0 %v240
      %258 = vmatpush.msra.mxu0 %v239
      %259 = vmatpush.msra.mxu0 %v238
      %260 = vmatpush.msra.mxu0 %v237
      %261 = vmatpush.msra.mxu0 %v236
      %262 = vmatpush.msra.mxu0 %v235
      %263 = vmatpush.msra.mxu0 %v234
      %264 = vmatpush.msra.mxu0 %v233
      %265 = vmatpush.msra.mxu0 %v232
      %266 = vmatpush.msra.mxu0 %v231
      %267 = vmatmul.f32.gmra.mxu0 %v223
      %v268 = vpop.f32.mrf.mxu0
      %v269 = vadd.f32 %v249, %v268
      %270 = vmatmul.f32.gmra.mxu0 %v224
      %v271 = vpop.f32.mrf.mxu0
      %v272 = vadd.f32 %v249, %v271
      %273 = vmatmul.f32.gmra.mxu0 %v225
      %v274 = vpop.f32.mrf.mxu0
      %v275 = vadd.f32 %v249, %v274
      %276 = vmatmul.f32.gmra.mxu0 %v226
      %v277 = vpop.f32.mrf.mxu0
      %v278 = vadd.f32 %v249, %v277
      %279 = vmatmul.f32.gmra.mxu0 %v227
      %v280 = vpop.f32.mrf.mxu0
      %v281 = vadd.f32 %v249, %v280
      %282 = vmatmul.f32.gmra.mxu0 %v228
      %v283 = vpop.f32.mrf.mxu0
      %v284 = vadd.f32 %v249, %v283
      %285 = vmatmul.f32.gmra.mxu0 %v229
      %v286 = vpop.f32.mrf.mxu0
      %v287 = vadd.f32 %v249, %v286
      %288 = vmatmul.f32.gmra.mxu0 %v230
      %v289 = vpop.f32.mrf.mxu0
      %v290 = vadd.f32 %v249, %v289
      %291 = vdwg.mxu0
      %v292 = vld [vmem:[%s215] sm:$0xff]
      %v293 = vld [vmem:[%s215 + $0x8] sm:$0xff]
      %v294 = vld [vmem:[%s215 + $0x10] sm:$0xff]
      %v295 = vld [vmem:[%s215 + $0x18] sm:$0xff]
      %v296 = vld [vmem:[%s215 + $0x20] sm:$0xff]
      %v297 = vld [vmem:[%s215 + $0x28] sm:$0xff]
      %v298 = vld [vmem:[%s215 + $0x30] sm:$0xff]
      %v299 = vld [vmem:[%s215 + $0x38] sm:$0xff]
      %v300 = vadd.f32 %v269, %v292
      %v301 = vadd.f32 %v272, %v293
      %v302 = vadd.f32 %v275, %v294
      %v303 = vadd.f32 %v278, %v295
      %v304 = vadd.f32 %v281, %v296
      %v305 = vadd.f32 %v284, %v297
      %v306 = vadd.f32 %v287, %v298
      %v307 = vadd.f32 %v290, %v299
      %308 = vst [vmem:[%s221] sm:$0xff] %v300
      %309 = vst [vmem:[%s221 + $0x8] sm:$0xff] %v301
      %310 = vst [vmem:[%s221 + $0x10] sm:$0xff] %v302
      %311 = vst [vmem:[%s221 + $0x18] sm:$0xff] %v303
      %312 = vst [vmem:[%s221 + $0x20] sm:$0xff] %v304
      %313 = vst [vmem:[%s221 + $0x28] sm:$0xff] %v305
      %314 = vst [vmem:[%s221 + $0x30] sm:$0xff] %v306
      %315 = vst [vmem:[%s221 + $0x38] sm:$0xff] %v307
      %s316 = smul.u32 8, %s15
      %p317 = scmp.lt.s32.totalorder %s316, 15
      %s318 = scalar_select %p317, %s316, 15
      %s319 = smul.addr %s318, 8
      %s320 = scalar_lea.vmem %s4, %s319
      // Predicated region
      $region37: #{fno2d_forward.18} parent=35 // pred_check
        %p321 = pneg %p127
      $region38: #{fno2d_forward.18} parent=35 // pred_check_branch
        %323 = sbr.rel (%p321) target = $region40
      $region39: #{fno2d_forward.18} parent=35 // pred_region
        %s324 = smul.u32 8, %s15
      $region40: #{fno2d_forward.18} parent=35 // pred_fallthru
        _
    $region36: #{fno2d_forward.18} parent=5 // pred_fallthru
      _
    %p325 = scmp.le.s32.totalorder 2, %s10
    // Predicated region
    $region41: #{fno2d_forward.18} parent=5 // pred_check
      %p326 = pneg %p325
    $region42: #{fno2d_forward.18} parent=5 // pred_check_branch
      %328 = sbr.rel (%p326) target = $region44
    $region43: #{fno2d_forward.18} parent=5 // pred_region
      %s329 = ssub.s32 %s10, 2
      // Predicated region
      $region45: #{fno2d_forward.18} parent=43 // pred_check
        %p330 = pneg %p133
      $region46: #{fno2d_forward.18} parent=43 // pred_check_branch
        %332 = sbr.rel (%p330) target = $region48
      $region47: #{fno2d_forward.18} parent=43 // pred_region
        %s333 = smul.u32 8, %s16
        %p334 = scmp.lt.s32.totalorder %s333, 15
        %s335 = scalar_select %p334, %s333, 15
        %s336 = smul.addr %s335, 8
        %s337 = scalar_lea.vmem %s4, %s336
      $region48: #{fno2d_forward.18} parent=43 // pred_fallthru
        _
    $region44: #{fno2d_forward.18} parent=5 // pred_fallthru
      _
  $region6: #{fno2d_forward.18} parent=0 // loop_footer
    %s14 = sadd.s32 1, %s10
  $region7: #{fno2d_forward.18} parent=0 // loop_footer_branch
    %9 = sbr.rel target = $region3
  $region8: #{fno2d_forward.18} parent=0 // loop_exit
    _

// kernel: fno2d_forward.19
$region0: #{fno2d_forward.19}
  #allocation0 [shape = 'u32[]', space=smem, size = 0x4, offset = 0x4, fixed_abs, tag = 'smem constant byte address 0x4 - core index']
  #allocation1 [shape = 'u32[72,128]{1,0:T(1,128)}', space=vmem, size = 0x9000, scoped, tag = 'internal scratch']
  %s0 = inlined_call_operand.vmem [shape: f32[128,128], index: 0, kind: input, shape index: {}]
  %s1 = inlined_call_operand.vmem [shape: f32[128,512], index: 1, kind: input, shape index: {}]
  %s2 = inlined_call_operand.vmem [shape: f32[1,512], index: 2, kind: input, shape index: {}]
  %s3 = inlined_call_operand.vmem [shape: f32[512,12], index: 3, kind: input, shape index: {}]
  %s4 = inlined_call_operand.vmem [shape: f32[1,12], index: 4, kind: input, shape index: {}]
  %s5 = inlined_call_operand.vmem [shape: f32[128,12], index: 5, kind: output, shape index: {}]
  %s6 = sld [smem:[#allocation0]]
  $region53: #{fno2d_forward.19} parent=0
    _
  %s8 = ssub.s32 1, %s6
  %s9 = scalar_select 0, %s8, %s6
  loop: start=0, step=1, limit=4
  $region2: #{fno2d_forward.19} parent=0 // loop_pre_header
    _
  $region3: #{fno2d_forward.19} parent=0 // loop_header
    %s11 = sphi 0, %s15
    %p12 = scmp.ge.s32.totalorder %s11, 4
    %s21 = sphi 0, %s23
    %s24 = sphi 0, %s21
    %s25 = sphi 0, %s24
    %s41 = sphi 0, %s25
    %s45 = sphi 0, %s45
    %s47 = sphi 0, %s45
    %s48 = sphi 0, %s47
    %s62 = sphi 0, %s48
    %s66 = sphi 0, %s66
    %s68 = sphi 0, %s66
    %s69 = sphi 0, %s68
    %s83 = sphi 0, %s69
    %s87 = sphi 0, %s87
    %s89 = sphi 0, %s87
    %s90 = sphi 0, %s89
    %s104 = sphi 0, %s90
    %s108 = sphi 0, %s108
    %s110 = sphi 0, %s108
    %s111 = sphi 0, %s110
    %s125 = sphi 0, %s111
    %s131 = sphi 0, %s133
    %s134 = sphi 0, %s131
    %s135 = sphi 0, %s134
    %s151 = sphi 0, %s135
  $region4: #{fno2d_forward.19} parent=0 // loop_header_branch
    %14 = sbr.rel (%p12) target = $region8
  $region5: #{fno2d_forward.19} parent=0 // loop_body
    %s16 = ssub.s32 %s11, 1
    %s17 = ssub.s32 %s11, 2
    %s18 = sadd.s32 %s11, 1
    %s19 = ssub.s32 %s11, %s18
    %p20 = scmp.eq.s32.totalorder %s19, 0
    %s22 = sadd.s32 %s21, 1
    %s23 = scalar_select %p20, %s21, %s22
    %p26 = pneg %p20
    %p27 = scmp.eq.s32.totalorder %s11, 1
    %p28 = por %p26, %p27
    %p29 = scmp.ne.s32.totalorder %s21, %s24
    %p30 = scmp.eq.s32.totalorder %s11, 0
    %p31 = por %p29, %p30
    %p32 = scmp.ne.s32.totalorder %s21, %s24
    %p33 = scmp.eq.s32.totalorder %s16, 1
    %p34 = por %p32, %p33
    %p35 = scmp.ne.s32.totalorder %s24, %s25
    %p36 = scmp.eq.s32.totalorder %s16, 0
    %p37 = por %p35, %p36
    %p38 = scmp.ne.s32.totalorder %s24, %s25
    %p39 = scmp.eq.s32.totalorder %s17, 1
    %p40 = por %p38, %p39
    %p42 = scmp.ne.s32.totalorder %s25, %s41
    %p43 = scmp.eq.s32.totalorder %s17, 0
    %p44 = por %p42, %p43
    %s46 = sadd.s32 %s45, 1
    %p49 = scmp.eq.s32.totalorder %s11, 1
    %p50 = scmp.ne.s32.totalorder %s45, %s47
    %p51 = scmp.eq.s32.totalorder %s11, 0
    %p52 = por %p50, %p51
    %p53 = scmp.ne.s32.totalorder %s45, %s47
    %p54 = scmp.eq.s32.totalorder %s16, 1
    %p55 = por %p53, %p54
    %p56 = scmp.ne.s32.totalorder %s47, %s48
    %p57 = scmp.eq.s32.totalorder %s16, 0
    %p58 = por %p56, %p57
    %p59 = scmp.ne.s32.totalorder %s47, %s48
    %p60 = scmp.eq.s32.totalorder %s17, 1
    %p61 = por %p59, %p60
    %p63 = scmp.ne.s32.totalorder %s48, %s62
    %p64 = scmp.eq.s32.totalorder %s17, 0
    %p65 = por %p63, %p64
    %s67 = sadd.s32 %s66, 1
    %p70 = scmp.eq.s32.totalorder %s11, 1
    %p71 = scmp.ne.s32.totalorder %s66, %s68
    %p72 = scmp.eq.s32.totalorder %s11, 0
    %p73 = por %p71, %p72
    %p74 = scmp.ne.s32.totalorder %s66, %s68
    %p75 = scmp.eq.s32.totalorder %s16, 1
    %p76 = por %p74, %p75
    %p77 = scmp.ne.s32.totalorder %s68, %s69
    %p78 = scmp.eq.s32.totalorder %s16, 0
    %p79 = por %p77, %p78
    %p80 = scmp.ne.s32.totalorder %s68, %s69
    %p81 = scmp.eq.s32.totalorder %s17, 1
    %p82 = por %p80, %p81
    %p84 = scmp.ne.s32.totalorder %s69, %s83
    %p85 = scmp.eq.s32.totalorder %s17, 0
    %p86 = por %p84, %p85
    %s88 = sadd.s32 %s87, 1
    %p91 = scmp.eq.s32.totalorder %s11, 1
    %p92 = scmp.ne.s32.totalorder %s87, %s89
    %p93 = scmp.eq.s32.totalorder %s11, 0
    %p94 = por %p92, %p93
    %p95 = scmp.ne.s32.totalorder %s87, %s89
    %p96 = scmp.eq.s32.totalorder %s16, 1
    %p97 = por %p95, %p96
    %p98 = scmp.ne.s32.totalorder %s89, %s90
    %p99 = scmp.eq.s32.totalorder %s16, 0
    %p100 = por %p98, %p99
    %p101 = scmp.ne.s32.totalorder %s89, %s90
    %p102 = scmp.eq.s32.totalorder %s17, 1
    %p103 = por %p101, %p102
    %p105 = scmp.ne.s32.totalorder %s90, %s104
    %p106 = scmp.eq.s32.totalorder %s17, 0
    %p107 = por %p105, %p106
    %s109 = sadd.s32 %s108, 1
    %p112 = scmp.eq.s32.totalorder %s11, 1
    %p113 = scmp.ne.s32.totalorder %s108, %s110
    %p114 = scmp.eq.s32.totalorder %s11, 0
    %p115 = por %p113, %p114
    %p116 = scmp.ne.s32.totalorder %s108, %s110
    %p117 = scmp.eq.s32.totalorder %s16, 1
    %p118 = por %p116, %p117
    %p119 = scmp.ne.s32.totalorder %s110, %s111
    %p120 = scmp.eq.s32.totalorder %s16, 0
    %p121 = por %p119, %p120
    %p122 = scmp.ne.s32.totalorder %s110, %s111
    %p123 = scmp.eq.s32.totalorder %s17, 1
    %p124 = por %p122, %p123
    %p126 = scmp.ne.s32.totalorder %s111, %s125
    %p127 = scmp.eq.s32.totalorder %s17, 0
    %p128 = por %p126, %p127
    %s129 = ssub.s32 %s11, %s18
    %p130 = scmp.eq.s32.totalorder %s129, 0
    %s132 = sadd.s32 %s131, 1
    %s133 = scalar_select %p130, %s131, %s132
    %p136 = pneg %p130
    %p137 = scmp.eq.s32.totalorder %s11, 1
    %p138 = por %p136, %p137
    %p139 = scmp.ne.s32.totalorder %s131, %s134
    %p140 = scmp.eq.s32.totalorder %s11, 0
    %p141 = por %p139, %p140
    %p142 = scmp.ne.s32.totalorder %s131, %s134
    %p143 = scmp.eq.s32.totalorder %s16, 1
    %p144 = por %p142, %p143
    %p145 = scmp.ne.s32.totalorder %s134, %s135
    %p146 = scmp.eq.s32.totalorder %s16, 0
    %p147 = por %p145, %p146
    %p148 = scmp.ne.s32.totalorder %s134, %s135
    %p149 = scmp.eq.s32.totalorder %s17, 1
    %p150 = por %p148, %p149
    %p152 = scmp.ne.s32.totalorder %s135, %s151
    %p153 = scmp.eq.s32.totalorder %s17, 0
    %p154 = por %p152, %p153
    %p155 = scmp.le.s32.totalorder 1, %s11
    %p156 = scmp.lt.s32.totalorder %s11, 3
    %p157 = pnand %p155, %p156
    %p158 = pneg %p157
    // Predicated region
    $region9: #{fno2d_forward.19} parent=5 // pred_check
      _
    $region10: #{fno2d_forward.19} parent=5 // pred_check_branch
      %160 = sbr.rel (%p157) target = $region12
    $region11: #{fno2d_forward.19} parent=5 // pred_region
      %s161 = ssub.s32 %s11, 1
      // Predicated region
      $region13: #{fno2d_forward.19} parent=11 // pred_check
        %p162 = pneg %p58
      $region14: #{fno2d_forward.19} parent=11 // pred_check_branch
        %164 = sbr.rel (%p162) target = $region16
      $region15: #{fno2d_forward.19} parent=11 // pred_region
        _
      $region16: #{fno2d_forward.19} parent=11 // pred_fallthru
        _
      // Predicated region
      $region17: #{fno2d_forward.19} parent=11 // pred_check
        %p165 = pneg %p79
      $region18: #{fno2d_forward.19} parent=11 // pred_check_branch
        %167 = sbr.rel (%p165) target = $region20
      $region19: #{fno2d_forward.19} parent=11 // pred_region
        _
      $region20: #{fno2d_forward.19} parent=11 // pred_fallthru
        _
      // Predicated region
      $region21: #{fno2d_forward.19} parent=11 // pred_check
        %p168 = pneg %p100
      $region22: #{fno2d_forward.19} parent=11 // pred_check_branch
        %170 = sbr.rel (%p168) target = $region24
      $region23: #{fno2d_forward.19} parent=11 // pred_region
        _
      $region24: #{fno2d_forward.19} parent=11 // pred_fallthru
        _
      // Predicated region
      $region25: #{fno2d_forward.19} parent=11 // pred_check
        %p171 = pneg %p121
      $region26: #{fno2d_forward.19} parent=11 // pred_check_branch
        %173 = sbr.rel (%p171) target = $region28
      $region27: #{fno2d_forward.19} parent=11 // pred_region
        _
      $region28: #{fno2d_forward.19} parent=11 // pred_fallthru
        _
    $region12: #{fno2d_forward.19} parent=5 // pred_fallthru
      _
    %p174 = scmp.lt.s32.totalorder %s11, 2
    // Predicated region
    $region29: #{fno2d_forward.19} parent=5 // pred_check
      %p175 = pneg %p174
    $region30: #{fno2d_forward.19} parent=5 // pred_check_branch
      %177 = sbr.rel (%p175) target = $region32
    $region31: #{fno2d_forward.19} parent=5 // pred_region
      // Predicated region
      $region33: #{fno2d_forward.19} parent=31 // pred_check
        %p178 = pneg %p31
      $region34: #{fno2d_forward.19} parent=31 // pred_check_branch
        %180 = sbr.rel (%p178) target = $region36
      $region35: #{fno2d_forward.19} parent=31 // pred_region
        %s181 = smul.u32 8, %s11
        %p182 = scmp.lt.s32.totalorder %s181, 15
        %s183 = scalar_select %p182, %s181, 15
        %s184 = smul.addr %s183, 8
        %s185 = scalar_lea.vmem %s0, %s184
        %s186 = smul.u32 8, %s11
      $region36: #{fno2d_forward.19} parent=31 // pred_fallthru
        _
    $region32: #{fno2d_forward.19} parent=5 // pred_fallthru
      _
    %p187 = scmp.le.s32.totalorder 1, %s11
    %p188 = scmp.lt.s32.totalorder %s11, 3
    %p189 = pnand %p187, %p188
    %p190 = pneg %p189
    // Predicated region
    $region37: #{fno2d_forward.19} parent=5 // pred_check
      _
    $region38: #{fno2d_forward.19} parent=5 // pred_check_branch
      %192 = sbr.rel (%p189) target = $region40
    $region39: #{fno2d_forward.19} parent=5 // pred_region
      %s193 = ssub.s32 %s11, 1
      %s194 = smul.u32 8, %s16
      %p195 = scmp.lt.s32.totalorder %s194, 15
      %s196 = scalar_select %p195, %s194, 15
      %s197 = smul.addr %s196, 8
      %s198 = scalar_lea.vmem %s0, %s197
      %p199 = pneg %p37
      %p200 = pneg %p34
      %p201 = pneg %p58
      %p202 = pneg %p55
      %p203 = pneg %p79
      %p204 = pneg %p76
      %p205 = pneg %p100
      %p206 = pneg %p97
      %p207 = pneg %p121
      %p208 = pneg %p118
      %p209 = pneg %p147
      %p210 = pneg %p144
      %s211 = smul.u32 8, %s16
      %p212 = scmp.lt.s32.totalorder %s211, 15
      %s213 = scalar_select %p212, %s211, 15
      %s214 = smul.addr %s213, 8
      %s215 = scalar_lea.vmem %s5, %s214
      %s216 = smul.u32 8, %s16
      %p217 = scmp.lt.s32.totalorder %s216, 15
      %s218 = scalar_select %p217, %s216, 15
      %s219 = smul.addr %s218, 8
      %s220 = scalar_lea.vmem %s0, %s219
      %s221 = smul.u32 8, %s16
      %s222 = smul.u32 8, %s16
      %p223 = scmp.lt.s32.totalorder %s222, 15
      %s224 = scalar_select %p223, %s222, 15
      %s225 = smul.addr %s224, 8
      %s226 = scalar_lea.vmem %s5, %s225
      %s227 = smul.u32 8, %s16
      %v228 = vld [vmem:[%s220] sm:$0xff]
      %v229 = vld [vmem:[%s220 + $0x8] sm:$0xff]
      %v230 = vld [vmem:[%s220 + $0x10] sm:$0xff]
      %v231 = vld [vmem:[%s220 + $0x18] sm:$0xff]
      %v232 = vld [vmem:[%s220 + $0x20] sm:$0xff]
      %v233 = vld [vmem:[%s220 + $0x28] sm:$0xff]
      %v234 = vld [vmem:[%s220 + $0x30] sm:$0xff]
      %v235 = vld [vmem:[%s220 + $0x38] sm:$0xff]
      %v236 = vld [vmem:[%s1] sm:$0xff]
      %v237 = vld [vmem:[%s1 + $0x8] sm:$0xff]
      %v238 = vld [vmem:[%s1 + $0x10] sm:$0xff]
      %v239 = vld [vmem:[%s1 + $0x18] sm:$0xff]
      %v240 = vld [vmem:[%s1 + $0x20] sm:$0xff]
      %v241 = vld [vmem:[%s1 + $0x28] sm:$0xff]
      %v242 = vld [vmem:[%s1 + $0x30] sm:$0xff]
      %v243 = vld [vmem:[%s1 + $0x38] sm:$0xff]
      %v244 = vld [vmem:[%s1 + $0x40] sm:$0xff]
      %v245 = vld [vmem:[%s1 + $0x48] sm:$0xff]
      %v246 = vld [vmem:[%s1 + $0x50] sm:$0xff]
      %v247 = vld [vmem:[%s1 + $0x58] sm:$0xff]
      %v248 = vld [vmem:[%s1 + $0x60] sm:$0xff]
      %v249 = vld [vmem:[%s1 + $0x68] sm:$0xff]
      %v250 = vld [vmem:[%s1 + $0x70] sm:$0xff]
      %v251 = vld [vmem:[%s1 + $0x78] sm:$0xff]
      %v252 = vld [vmem:[%s1 + $0x80] sm:$0xff]
      %v253 = vld [vmem:[%s1 + $0x88] sm:$0xff]
      %v254 = vld [vmem:[%s1 + $0x90] sm:$0xff]
      %v255 = vld [vmem:[%s1 + $0x98] sm:$0xff]
      %v256 = vld [vmem:[%s1 + $0xa0] sm:$0xff]
      %v257 = vld [vmem:[%s1 + $0xa8] sm:$0xff]
      %v258 = vld [vmem:[%s1 + $0xb0] sm:$0xff]
      %v259 = vld [vmem:[%s1 + $0xb8] sm:$0xff]
      %v260 = vld [vmem:[%s1 + $0xc0] sm:$0xff]
      %v261 = vld [vmem:[%s1 + $0xc8] sm:$0xff]
      %v262 = vld [vmem:[%s1 + $0xd0] sm:$0xff]
      %v263 = vld [vmem:[%s1 + $0xd8] sm:$0xff]
      %v264 = vld [vmem:[%s1 + $0xe0] sm:$0xff]
      %v265 = vld [vmem:[%s1 + $0xe8] sm:$0xff]
      %v266 = vld [vmem:[%s1 + $0xf0] sm:$0xff]
      %v267 = vld [vmem:[%s1 + $0xf8] sm:$0xff]
      %v268 = vld [vmem:[%s1 + $0x100] sm:$0xff]
      %v269 = vld [vmem:[%s1 + $0x108] sm:$0xff]
      %v270 = vld [vmem:[%s1 + $0x110] sm:$0xff]
      %v271 = vld [vmem:[%s1 + $0x118] sm:$0xff]
      %v272 = vld [vmem:[%s1 + $0x120] sm:$0xff]
      %v273 = vld [vmem:[%s1 + $0x128] sm:$0xff]
      %v274 = vld [vmem:[%s1 + $0x130] sm:$0xff]
      %v275 = vld [vmem:[%s1 + $0x138] sm:$0xff]
      %v276 = vld [vmem:[%s1 + $0x140] sm:$0xff]
      %v277 = vld [vmem:[%s1 + $0x148] sm:$0xff]
      %v278 = vld [vmem:[%s1 + $0x150] sm:$0xff]
      %v279 = vld [vmem:[%s1 + $0x158] sm:$0xff]
      %v280 = vld [vmem:[%s1 + $0x160] sm:$0xff]
      %v281 = vld [vmem:[%s1 + $0x168] sm:$0xff]
      %v282 = vld [vmem:[%s1 + $0x170] sm:$0xff]
      %v283 = vld [vmem:[%s1 + $0x178] sm:$0xff]
      %v284 = vld [vmem:[%s1 + $0x180] sm:$0xff]
      %v285 = vld [vmem:[%s1 + $0x188] sm:$0xff]
      %v286 = vld [vmem:[%s1 + $0x190] sm:$0xff]
      %v287 = vld [vmem:[%s1 + $0x198] sm:$0xff]
      %v288 = vld [vmem:[%s1 + $0x1a0] sm:$0xff]
      %v289 = vld [vmem:[%s1 + $0x1a8] sm:$0xff]
      %v290 = vld [vmem:[%s1 + $0x1b0] sm:$0xff]
      %v291 = vld [vmem:[%s1 + $0x1b8] sm:$0xff]
      %v292 = vld [vmem:[%s1 + $0x1c0] sm:$0xff]
      %v293 = vld [vmem:[%s1 + $0x1c8] sm:$0xff]
      %v294 = vld [vmem:[%s1 + $0x1d0] sm:$0xff]
      %v295 = vld [vmem:[%s1 + $0x1d8] sm:$0xff]
      %v296 = vld [vmem:[%s1 + $0x1e0] sm:$0xff]
      %v297 = vld [vmem:[%s1 + $0x1e8] sm:$0xff]
      %v298 = vld [vmem:[%s1 + $0x1f0] sm:$0xff]
      %v299 = vld [vmem:[%s1 + $0x1f8] sm:$0xff]
      %v300 = vld [vmem:[%s2] sm:$0xf]
      %v302 = vperm.slane %v300, 0
      %v303 = vperm.slane %v300, 1
      %v304 = vperm.slane %v300, 2
      %v305 = vperm.slane %v300, 3
      %310 = vmatpush.msra.mxu0 %v296
      %311 = vmatpush.msra.mxu0 %v292
      %312 = vmatpush.msra.mxu0 %v288
      %313 = vmatpush.msra.mxu0 %v284
      %314 = vmatpush.msra.mxu0 %v280
      %315 = vmatpush.msra.mxu0 %v276
      %316 = vmatpush.msra.mxu0 %v272
      %317 = vmatpush.msra.mxu0 %v268
      %318 = vmatpush.msra.mxu0 %v264
      %319 = vmatpush.msra.mxu0 %v260
      %320 = vmatpush.msra.mxu0 %v256
      %321 = vmatpush.msra.mxu0 %v252
      %322 = vmatpush.msra.mxu0 %v248
      %323 = vmatpush.msra.mxu0 %v244
      %324 = vmatpush.msra.mxu0 %v240
      %325 = vmatpush.msra.mxu0 %v236
      %326 = vmatmul.f32.gmra.mxu0 %v228
      %v327 = vpop.f32.mrf.mxu0
      %v328 = vadd.f32 %v302, %v327
      %329 = vmatmul.f32.gmra.mxu0 %v229
      %v330 = vpop.f32.mrf.mxu0
      %v331 = vadd.f32 %v302, %v330
      %332 = vmatmul.f32.gmra.mxu0 %v230
      %v333 = vpop.f32.mrf.mxu0
      %v334 = vadd.f32 %v302, %v333
      %335 = vmatmul.f32.gmra.mxu0 %v231
      %v336 = vpop.f32.mrf.mxu0
      %v337 = vadd.f32 %v302, %v336
      %338 = vmatmul.f32.gmra.mxu0 %v232
      %v339 = vpop.f32.mrf.mxu0
      %v340 = vadd.f32 %v302, %v339
      %341 = vmatmul.f32.gmra.mxu0 %v233
      %v342 = vpop.f32.mrf.mxu0
      %v343 = vadd.f32 %v302, %v342
      %344 = vmatmul.f32.gmra.mxu0 %v234
      %v345 = vpop.f32.mrf.mxu0
      %v346 = vadd.f32 %v302, %v345
      %347 = vmatmul.f32.gmra.mxu0 %v235
      %v348 = vpop.f32.mrf.mxu0
      %v349 = vadd.f32 %v302, %v348
      %350 = vdwg.mxu0
      %351 = vmatpush.msra.mxu0 %v297
      %352 = vmatpush.msra.mxu0 %v293
      %353 = vmatpush.msra.mxu0 %v289
      %354 = vmatpush.msra.mxu0 %v285
      %355 = vmatpush.msra.mxu0 %v281
      %356 = vmatpush.msra.mxu0 %v277
      %357 = vmatpush.msra.mxu0 %v273
      %358 = vmatpush.msra.mxu0 %v269
      %359 = vmatpush.msra.mxu0 %v265
      %360 = vmatpush.msra.mxu0 %v261
      %361 = vmatpush.msra.mxu0 %v257
      %362 = vmatpush.msra.mxu0 %v253
      %363 = vmatpush.msra.mxu0 %v249
      %364 = vmatpush.msra.mxu0 %v245
      %365 = vmatpush.msra.mxu0 %v241
      %366 = vmatpush.msra.mxu0 %v237
      %367 = vmatmul.f32.gmra.mxu0 %v228
      %v368 = vpop.f32.mrf.mxu0
      %v369 = vadd.f32 %v303, %v368
      %370 = vmatmul.f32.gmra.mxu0 %v229
      %v371 = vpop.f32.mrf.mxu0
      %v372 = vadd.f32 %v303, %v371
      %373 = vmatmul.f32.gmra.mxu0 %v230
      %v374 = vpop.f32.mrf.mxu0
      %v375 = vadd.f32 %v303, %v374
      %376 = vmatmul.f32.gmra.mxu0 %v231
      %v377 = vpop.f32.mrf.mxu0
      %v378 = vadd.f32 %v303, %v377
      %379 = vmatmul.f32.gmra.mxu0 %v232
      %v380 = vpop.f32.mrf.mxu0
      %v381 = vadd.f32 %v303, %v380
      %382 = vmatmul.f32.gmra.mxu0 %v233
      %v383 = vpop.f32.mrf.mxu0
      %v384 = vadd.f32 %v303, %v383
      %385 = vmatmul.f32.gmra.mxu0 %v234
      %v386 = vpop.f32.mrf.mxu0
      %v387 = vadd.f32 %v303, %v386
      %388 = vmatmul.f32.gmra.mxu0 %v235
      %v389 = vpop.f32.mrf.mxu0
      %v390 = vadd.f32 %v303, %v389
      %391 = vdwg.mxu0
      %392 = vmatpush.msra.mxu0 %v298
      %393 = vmatpush.msra.mxu0 %v294
      %394 = vmatpush.msra.mxu0 %v290
      %395 = vmatpush.msra.mxu0 %v286
      %396 = vmatpush.msra.mxu0 %v282
      %397 = vmatpush.msra.mxu0 %v278
      %398 = vmatpush.msra.mxu0 %v274
      %399 = vmatpush.msra.mxu0 %v270
      %400 = vmatpush.msra.mxu0 %v266
      %401 = vmatpush.msra.mxu0 %v262
      %402 = vmatpush.msra.mxu0 %v258
      %403 = vmatpush.msra.mxu0 %v254
      %404 = vmatpush.msra.mxu0 %v250
      %405 = vmatpush.msra.mxu0 %v246
      %406 = vmatpush.msra.mxu0 %v242
      %407 = vmatpush.msra.mxu0 %v238
      %408 = vmatmul.f32.gmra.mxu0 %v228
      %v409 = vpop.f32.mrf.mxu0
      %v410 = vadd.f32 %v304, %v409
      %411 = vmatmul.f32.gmra.mxu0 %v229
      %v412 = vpop.f32.mrf.mxu0
      %v413 = vadd.f32 %v304, %v412
      %414 = vmatmul.f32.gmra.mxu0 %v230
      %v415 = vpop.f32.mrf.mxu0
      %v416 = vadd.f32 %v304, %v415
      %417 = vmatmul.f32.gmra.mxu0 %v231
      %v418 = vpop.f32.mrf.mxu0
      %v419 = vadd.f32 %v304, %v418
      %420 = vmatmul.f32.gmra.mxu0 %v232
      %v421 = vpop.f32.mrf.mxu0
      %v422 = vadd.f32 %v304, %v421
      %423 = vmatmul.f32.gmra.mxu0 %v233
      %v424 = vpop.f32.mrf.mxu0
      %v425 = vadd.f32 %v304, %v424
      %426 = vmatmul.f32.gmra.mxu0 %v234
      %v427 = vpop.f32.mrf.mxu0
      %v428 = vadd.f32 %v304, %v427
      %429 = vmatmul.f32.gmra.mxu0 %v235
      %v430 = vpop.f32.mrf.mxu0
      %v431 = vadd.f32 %v304, %v430
      %432 = vdwg.mxu0
      %433 = vmatpush.msra.mxu0 %v299
      %434 = vmatpush.msra.mxu0 %v295
      %435 = vmatpush.msra.mxu0 %v291
      %436 = vmatpush.msra.mxu0 %v287
      %437 = vmatpush.msra.mxu0 %v283
      %438 = vmatpush.msra.mxu0 %v279
      %439 = vmatpush.msra.mxu0 %v275
      %440 = vmatpush.msra.mxu0 %v271
      %441 = vmatpush.msra.mxu0 %v267
      %442 = vmatpush.msra.mxu0 %v263
      %443 = vmatpush.msra.mxu0 %v259
      %444 = vmatpush.msra.mxu0 %v255
      %445 = vmatpush.msra.mxu0 %v251
      %446 = vmatpush.msra.mxu0 %v247
      %447 = vmatpush.msra.mxu0 %v243
      %448 = vmatpush.msra.mxu0 %v239
      %449 = vmatmul.f32.gmra.mxu0 %v228
      %v450 = vpop.f32.mrf.mxu0
      %v451 = vadd.f32 %v305, %v450
      %452 = vmatmul.f32.gmra.mxu0 %v229
      %v453 = vpop.f32.mrf.mxu0
      %v454 = vadd.f32 %v305, %v453
      %455 = vmatmul.f32.gmra.mxu0 %v230
      %v456 = vpop.f32.mrf.mxu0
      %v457 = vadd.f32 %v305, %v456
      %458 = vmatmul.f32.gmra.mxu0 %v231
      %v459 = vpop.f32.mrf.mxu0
      %v460 = vadd.f32 %v305, %v459
      %461 = vmatmul.f32.gmra.mxu0 %v232
      %v462 = vpop.f32.mrf.mxu0
      %v463 = vadd.f32 %v305, %v462
      %464 = vmatmul.f32.gmra.mxu0 %v233
      %v465 = vpop.f32.mrf.mxu0
      %v466 = vadd.f32 %v305, %v465
      %467 = vmatmul.f32.gmra.mxu0 %v234
      %v468 = vpop.f32.mrf.mxu0
      %v469 = vadd.f32 %v305, %v468
      %470 = vmatmul.f32.gmra.mxu0 %v235
      %v471 = vpop.f32.mrf.mxu0
      %v472 = vadd.f32 %v305, %v471
      %473 = vdwg.mxu0
      %v474 = vmul.f32 %v328, 0.5
      %v475 = vmul.f32 %v369, 0.5
      %v476 = vmul.f32 %v410, 0.5
      %v477 = vmul.f32 %v451, 0.5
      %v478 = vmul.f32 %v331, 0.5
      %v479 = vmul.f32 %v372, 0.5
      %v480 = vmul.f32 %v413, 0.5
      %v481 = vmul.f32 %v454, 0.5
      %v482 = vmul.f32 %v334, 0.5
      %v483 = vmul.f32 %v375, 0.5
      %v484 = vmul.f32 %v416, 0.5
      %v485 = vmul.f32 %v457, 0.5
      %v486 = vmul.f32 %v337, 0.5
      %v487 = vmul.f32 %v378, 0.5
      %v488 = vmul.f32 %v419, 0.5
      %v489 = vmul.f32 %v460, 0.5
      %v490 = vmul.f32 %v340, 0.5
      %v491 = vmul.f32 %v381, 0.5
      %v492 = vmul.f32 %v422, 0.5
      %v493 = vmul.f32 %v463, 0.5
      %v494 = vmul.f32 %v343, 0.5
      %v495 = vmul.f32 %v384, 0.5
      %v496 = vmul.f32 %v425, 0.5
      %v497 = vmul.f32 %v466, 0.5
      %v498 = vmul.f32 %v346, 0.5
      %v499 = vmul.f32 %v387, 0.5
      %v500 = vmul.f32 %v428, 0.5
      %v501 = vmul.f32 %v469, 0.5
      %v502 = vmul.f32 %v349, 0.5
      %v503 = vmul.f32 %v390, 0.5
      %v504 = vmul.f32 %v431, 0.5
      %v505 = vmul.f32 %v472, 0.5
      %v506 = vmul.f32 %v328, 0.70710677
      %v507 = vmul.f32 %v369, 0.70710677
      %v508 = vmul.f32 %v410, 0.70710677
      %v509 = vmul.f32 %v451, 0.70710677
      %v510 = vmul.f32 %v331, 0.70710677
      %v511 = vmul.f32 %v372, 0.70710677
      %v512 = vmul.f32 %v413, 0.70710677
      %v513 = vmul.f32 %v454, 0.70710677
      %v514 = vmul.f32 %v334, 0.70710677
      %v515 = vmul.f32 %v375, 0.70710677
      %v516 = vmul.f32 %v416, 0.70710677
      %v517 = vmul.f32 %v457, 0.70710677
      %v518 = vmul.f32 %v337, 0.70710677
      %v519 = vmul.f32 %v378, 0.70710677
      %v520 = vmul.f32 %v419, 0.70710677
      %v521 = vmul.f32 %v460, 0.70710677
      %v522 = vmul.f32 %v340, 0.70710677
      %v523 = vmul.f32 %v381, 0.70710677
      %v524 = vmul.f32 %v422, 0.70710677
      %v525 = vmul.f32 %v463, 0.70710677
      %v526 = vmul.f32 %v343, 0.70710677
      %v527 = vmul.f32 %v384, 0.70710677
      %v528 = vmul.f32 %v425, 0.70710677
      %v529 = vmul.f32 %v466, 0.70710677
      %v530 = vmul.f32 %v346, 0.70710677
      %v531 = vmul.f32 %v387, 0.70710677
      %v532 = vmul.f32 %v428, 0.70710677
      %v533 = vmul.f32 %v469, 0.70710677
      %v534 = vmul.f32 %v349, 0.70710677
      %v535 = vmul.f32 %v390, 0.70710677
      %v536 = vmul.f32 %v431, 0.70710677
      %v537 = vmul.f32 %v472, 0.70710677
      %vm538 = vcmp.ge.f32.partialorder %v506, 0.0
      %vm539 = vcmp.ge.f32.partialorder %v507, 0.0
      %vm540 = vcmp.ge.f32.partialorder %v508, 0.0
      %vm541 = vcmp.ge.f32.partialorder %v509, 0.0
      %vm542 = vcmp.ge.f32.partialorder %v510, 0.0
      %vm543 = vcmp.ge.f32.partialorder %v511, 0.0
      %vm544 = vcmp.ge.f32.partialorder %v512, 0.0
      %vm545 = vcmp.ge.f32.partialorder %v513, 0.0
      %vm546 = vcmp.ge.f32.partialorder %v514, 0.0
      %vm547 = vcmp.ge.f32.partialorder %v515, 0.0
      %vm548 = vcmp.ge.f32.partialorder %v516, 0.0
      %vm549 = vcmp.ge.f32.partialorder %v517, 0.0
      %vm550 = vcmp.ge.f32.partialorder %v518, 0.0
      %vm551 = vcmp.ge.f32.partialorder %v519, 0.0
      %vm552 = vcmp.ge.f32.partialorder %v520, 0.0
      %vm553 = vcmp.ge.f32.partialorder %v521, 0.0
      %vm554 = vcmp.ge.f32.partialorder %v522, 0.0
      %vm555 = vcmp.ge.f32.partialorder %v523, 0.0
      %vm556 = vcmp.ge.f32.partialorder %v524, 0.0
      %vm557 = vcmp.ge.f32.partialorder %v525, 0.0
      %vm558 = vcmp.ge.f32.partialorder %v526, 0.0
      %vm559 = vcmp.ge.f32.partialorder %v527, 0.0
      %vm560 = vcmp.ge.f32.partialorder %v528, 0.0
      %vm561 = vcmp.ge.f32.partialorder %v529, 0.0
      %vm562 = vcmp.ge.f32.partialorder %v530, 0.0
      %vm563 = vcmp.ge.f32.partialorder %v531, 0.0
      %vm564 = vcmp.ge.f32.partialorder %v532, 0.0
      %vm565 = vcmp.ge.f32.partialorder %v533, 0.0
      %vm566 = vcmp.ge.f32.partialorder %v534, 0.0
      %vm567 = vcmp.ge.f32.partialorder %v535, 0.0
      %vm568 = vcmp.ge.f32.partialorder %v536, 0.0
      %vm569 = vcmp.ge.f32.partialorder %v537, 0.0
      %v570 = vsel %vm538, 1.0, -1.0
      %v571 = vsel %vm539, 1.0, -1.0
      %v572 = vsel %vm540, 1.0, -1.0
      %v573 = vsel %vm541, 1.0, -1.0
      %v574 = vsel %vm542, 1.0, -1.0
      %v575 = vsel %vm543, 1.0, -1.0
      %v576 = vsel %vm544, 1.0, -1.0
      %v577 = vsel %vm545, 1.0, -1.0
      %v578 = vsel %vm546, 1.0, -1.0
      %v579 = vsel %vm547, 1.0, -1.0
      %v580 = vsel %vm548, 1.0, -1.0
      %v581 = vsel %vm549, 1.0, -1.0
      %v582 = vsel %vm550, 1.0, -1.0
      %v583 = vsel %vm551, 1.0, -1.0
      %v584 = vsel %vm552, 1.0, -1.0
      %v585 = vsel %vm553, 1.0, -1.0
      %v586 = vsel %vm554, 1.0, -1.0
      %v587 = vsel %vm555, 1.0, -1.0
      %v588 = vsel %vm556, 1.0, -1.0
      %v589 = vsel %vm557, 1.0, -1.0
      %v590 = vsel %vm558, 1.0, -1.0
      %v591 = vsel %vm559, 1.0, -1.0
      %v592 = vsel %vm560, 1.0, -1.0
      %v593 = vsel %vm561, 1.0, -1.0
      %v594 = vsel %vm562, 1.0, -1.0
      %v595 = vsel %vm563, 1.0, -1.0
      %v596 = vsel %vm564, 1.0, -1.0
      %v597 = vsel %vm565, 1.0, -1.0
      %v598 = vsel %vm566, 1.0, -1.0
      %v599 = vsel %vm567, 1.0, -1.0
      %v600 = vsel %vm568, 1.0, -1.0
      %v601 = vsel %vm569, 1.0, -1.0
      %v602 = vand.u32 2147483647, %v506
      %v603 = vand.u32 2147483647, %v507
      %v604 = vand.u32 2147483647, %v508
      %v605 = vand.u32 2147483647, %v509
      %v606 = vand.u32 2147483647, %v510
      %v607 = vand.u32 2147483647, %v511
      %v608 = vand.u32 2147483647, %v512
      %v609 = vand.u32 2147483647, %v513
      %v610 = vand.u32 2147483647, %v514
      %v611 = vand.u32 2147483647, %v515
      %v612 = vand.u32 2147483647, %v516
      %v613 = vand.u32 2147483647, %v517
      %v614 = vand.u32 2147483647, %v518
      %v615 = vand.u32 2147483647, %v519
      %v616 = vand.u32 2147483647, %v520
      %v617 = vand.u32 2147483647, %v521
      %v618 = vand.u32 2147483647, %v522
      %v619 = vand.u32 2147483647, %v523
      %v620 = vand.u32 2147483647, %v524
      %v621 = vand.u32 2147483647, %v525
      %v622 = vand.u32 2147483647, %v526
      %v623 = vand.u32 2147483647, %v527
      %v624 = vand.u32 2147483647, %v528
      %v625 = vand.u32 2147483647, %v529
      %v626 = vand.u32 2147483647, %v530
      %v627 = vand.u32 2147483647, %v531
      %v628 = vand.u32 2147483647, %v532
      %v629 = vand.u32 2147483647, %v533
      %v630 = vand.u32 2147483647, %v534
      %v631 = vand.u32 2147483647, %v535
      %v632 = vand.u32 2147483647, %v536
      %v633 = vand.u32 2147483647, %v537
      %v634 = vmul.f32 %v602, 0.3275911
      %v635 = vmul.f32 %v603, 0.3275911
      %v636 = vmul.f32 %v604, 0.3275911
      %v637 = vmul.f32 %v605, 0.3275911
      %v638 = vmul.f32 %v606, 0.3275911
      %v639 = vmul.f32 %v607, 0.3275911
      %v640 = vmul.f32 %v608, 0.3275911
      %v641 = vmul.f32 %v609, 0.3275911
      %v642 = vmul.f32 %v610, 0.3275911
      %v643 = vmul.f32 %v611, 0.3275911
      %v644 = vmul.f32 %v612, 0.3275911
      %v645 = vmul.f32 %v613, 0.3275911
      %v646 = vmul.f32 %v614, 0.3275911
      %v647 = vmul.f32 %v615, 0.3275911
      %v648 = vmul.f32 %v616, 0.3275911
      %v649 = vmul.f32 %v617, 0.3275911
      %v650 = vmul.f32 %v618, 0.3275911
      %v651 = vmul.f32 %v619, 0.3275911
      %v652 = vmul.f32 %v620, 0.3275911
      %v653 = vmul.f32 %v621, 0.3275911
      %v654 = vmul.f32 %v622, 0.3275911
      %v655 = vmul.f32 %v623, 0.3275911
      %v656 = vmul.f32 %v624, 0.3275911
      %v657 = vmul.f32 %v625, 0.3275911
      %v658 = vmul.f32 %v626, 0.3275911
      %v659 = vmul.f32 %v627, 0.3275911
      %v660 = vmul.f32 %v628, 0.3275911
      %v661 = vmul.f32 %v629, 0.3275911
      %v662 = vmul.f32 %v630, 0.3275911
      %v663 = vmul.f32 %v631, 0.3275911
      %v664 = vmul.f32 %v632, 0.3275911
      %v665 = vmul.f32 %v633, 0.3275911
      %v666 = vadd.f32 %v634, 1.0
      %v667 = vadd.f32 %v635, 1.0
      %v668 = vadd.f32 %v636, 1.0
      %v669 = vadd.f32 %v637, 1.0
      %v670 = vadd.f32 %v638, 1.0
      %v671 = vadd.f32 %v639, 1.0
      %v672 = vadd.f32 %v640, 1.0
      %v673 = vadd.f32 %v641, 1.0
      %v674 = vadd.f32 %v642, 1.0
      %v675 = vadd.f32 %v643, 1.0
      %v676 = vadd.f32 %v644, 1.0
      %v677 = vadd.f32 %v645, 1.0
      %v678 = vadd.f32 %v646, 1.0
      %v679 = vadd.f32 %v647, 1.0
      %v680 = vadd.f32 %v648, 1.0
      %v681 = vadd.f32 %v649, 1.0
      %v682 = vadd.f32 %v650, 1.0
      %v683 = vadd.f32 %v651, 1.0
      %v684 = vadd.f32 %v652, 1.0
      %v685 = vadd.f32 %v653, 1.0
      %v686 = vadd.f32 %v654, 1.0
      %v687 = vadd.f32 %v655, 1.0
      %v688 = vadd.f32 %v656, 1.0
      %v689 = vadd.f32 %v657, 1.0
      %v690 = vadd.f32 %v658, 1.0
      %v691 = vadd.f32 %v659, 1.0
      %v692 = vadd.f32 %v660, 1.0
      %v693 = vadd.f32 %v661, 1.0
      %v694 = vadd.f32 %v662, 1.0
      %v695 = vadd.f32 %v663, 1.0
      %v696 = vadd.f32 %v664, 1.0
      %v697 = vadd.f32 %v665, 1.0
      %v698 = vrcp.pop %v666
      %v699 = vmul.f32 %v666, %v698
      %v700 = vsub.f32 1.0, %v699
      %v701 = vmul.f32 %v698, %v700
      %v702 = vadd.f32 %v698, %v701
      %vm703 = vweird.f32 %v666
      %vm704 = vweird.f32 %v698
      %vm705 = vmor %vm703, %vm704
      %v706 = vsel %vm705, %v698, %v702
      %v707 = vand.u32 2147483647, %v666
      %vm708 = vcmp.eq.f32.partialorder %v707, 8.507059e+37
      %v709 = vand.u32 %v666, 2147483648
      %v710 = vor.u32 1.1754944e-38, %v709
      %v711 = vsel %vm708, %v710, %v706
      %v712 = vmul.f32 1.0, %v711
      %v713 = vrcp.pop %v667
      %v714 = vmul.f32 %v667, %v713
      %v715 = vsub.f32 1.0, %v714
      %v716 = vmul.f32 %v713, %v715
      %v717 = vadd.f32 %v713, %v716
      %vm718 = vweird.f32 %v667
      %vm719 = vweird.f32 %v713
      %vm720 = vmor %vm718, %vm719
      %v721 = vsel %vm720, %v713, %v717
      %v722 = vand.u32 2147483647, %v667
      %vm723 = vcmp.eq.f32.partialorder %v722, 8.507059e+37
      %v724 = vand.u32 %v667, 2147483648
      %v725 = vor.u32 1.1754944e-38, %v724
      %v726 = vsel %vm723, %v725, %v721
      %v727 = vmul.f32 1.0, %v726
      %v728 = vrcp.pop %v668
      %v729 = vmul.f32 %v668, %v728
      %v730 = vsub.f32 1.0, %v729
      %v731 = vmul.f32 %v728, %v730
      %v732 = vadd.f32 %v728, %v731
      %vm733 = vweird.f32 %v668
      %vm734 = vweird.f32 %v728
      %vm735 = vmor %vm733, %vm734
      %v736 = vsel %vm735, %v728, %v732
      %v737 = vand.u32 2147483647, %v668
      %vm738 = vcmp.eq.f32.partialorder %v737, 8.507059e+37
      %v739 = vand.u32 %v668, 2147483648
      %v740 = vor.u32 1.1754944e-38, %v739
      %v741 = vsel %vm738, %v740, %v736
      %v742 = vmul.f32 1.0, %v741
      %v743 = vrcp.pop %v669
      %v744 = vmul.f32 %v669, %v743
      %v745 = vsub.f32 1.0, %v744
      %v746 = vmul.f32 %v743, %v745
      %v747 = vadd.f32 %v743, %v746
      %vm748 = vweird.f32 %v669
      %vm749 = vweird.f32 %v743
      %vm750 = vmor %vm748, %vm749
      %v751 = vsel %vm750, %v743, %v747
      %v752 = vand.u32 2147483647, %v669
      %vm753 = vcmp.eq.f32.partialorder %v752, 8.507059e+37
      %v754 = vand.u32 %v669, 2147483648
      %v755 = vor.u32 1.1754944e-38, %v754
      %v756 = vsel %vm753, %v755, %v751
      %v757 = vmul.f32 1.0, %v756
      %v758 = vrcp.pop %v670
      %v759 = vmul.f32 %v670, %v758
      %v760 = vsub.f32 1.0, %v759
      %v761 = vmul.f32 %v758, %v760
      %v762 = vadd.f32 %v758, %v761
      %vm763 = vweird.f32 %v670
      %vm764 = vweird.f32 %v758
      %vm765 = vmor %vm763, %vm764
      %v766 = vsel %vm765, %v758, %v762
      %v767 = vand.u32 2147483647, %v670
      %vm768 = vcmp.eq.f32.partialorder %v767, 8.507059e+37
      %v769 = vand.u32 %v670, 2147483648
      %v770 = vor.u32 1.1754944e-38, %v769
      %v771 = vsel %vm768, %v770, %v766
      %v772 = vmul.f32 1.0, %v771
      %v773 = vrcp.pop %v671
      %v774 = vmul.f32 %v671, %v773
      %v775 = vsub.f32 1.0, %v774
      %v776 = vmul.f32 %v773, %v775
      %v777 = vadd.f32 %v773, %v776
      %vm778 = vweird.f32 %v671
      %vm779 = vweird.f32 %v773
      %vm780 = vmor %vm778, %vm779
      %v781 = vsel %vm780, %v773, %v777
      %v782 = vand.u32 2147483647, %v671
      %vm783 = vcmp.eq.f32.partialorder %v782, 8.507059e+37
      %v784 = vand.u32 %v671, 2147483648
      %v785 = vor.u32 1.1754944e-38, %v784
      %v786 = vsel %vm783, %v785, %v781
      %v787 = vmul.f32 1.0, %v786
      %v788 = vrcp.pop %v672
      %v789 = vmul.f32 %v672, %v788
      %v790 = vsub.f32 1.0, %v789
      %v791 = vmul.f32 %v788, %v790
      %v792 = vadd.f32 %v788, %v791
      %vm793 = vweird.f32 %v672
      %vm794 = vweird.f32 %v788
      %vm795 = vmor %vm793, %vm794
      %v796 = vsel %vm795, %v788, %v792
      %v797 = vand.u32 2147483647, %v672
      %vm798 = vcmp.eq.f32.partialorder %v797, 8.507059e+37
      %v799 = vand.u32 %v672, 2147483648
      %v800 = vor.u32 1.1754944e-38, %v799
      %v801 = vsel %vm798, %v800, %v796
      %v802 = vmul.f32 1.0, %v801
      %v803 = vrcp.pop %v673
      %v804 = vmul.f32 %v673, %v803
      %v805 = vsub.f32 1.0, %v804
      %v806 = vmul.f32 %v803, %v805
      %v807 = vadd.f32 %v803, %v806
      %vm808 = vweird.f32 %v673
      %vm809 = vweird.f32 %v803
      %vm810 = vmor %vm808, %vm809
      %v811 = vsel %vm810, %v803, %v807
      %v812 = vand.u32 2147483647, %v673
      %vm813 = vcmp.eq.f32.partialorder %v812, 8.507059e+37
      %v814 = vand.u32 %v673, 2147483648
      %v815 = vor.u32 1.1754944e-38, %v814
      %v816 = vsel %vm813, %v815, %v811
      %v817 = vmul.f32 1.0, %v816
      %v818 = vrcp.pop %v674
      %v819 = vmul.f32 %v674, %v818
      %v820 = vsub.f32 1.0, %v819
      %v821 = vmul.f32 %v818, %v820
      %v822 = vadd.f32 %v818, %v821
      %vm823 = vweird.f32 %v674
      %vm824 = vweird.f32 %v818
      %vm825 = vmor %vm823, %vm824
      %v826 = vsel %vm825, %v818, %v822
      %v827 = vand.u32 2147483647, %v674
      %vm828 = vcmp.eq.f32.partialorder %v827, 8.507059e+37
      %v829 = vand.u32 %v674, 2147483648
      %v830 = vor.u32 1.1754944e-38, %v829
      %v831 = vsel %vm828, %v830, %v826
      %v832 = vmul.f32 1.0, %v831
      %v833 = vrcp.pop %v675
      %v834 = vmul.f32 %v675, %v833
      %v835 = vsub.f32 1.0, %v834
      %v836 = vmul.f32 %v833, %v835
      %v837 = vadd.f32 %v833, %v836
      %vm838 = vweird.f32 %v675
      %vm839 = vweird.f32 %v833
      %vm840 = vmor %vm838, %vm839
      %v841 = vsel %vm840, %v833, %v837
      %v842 = vand.u32 2147483647, %v675
      %vm843 = vcmp.eq.f32.partialorder %v842, 8.507059e+37
      %v844 = vand.u32 %v675, 2147483648
      %v845 = vor.u32 1.1754944e-38, %v844
      %v846 = vsel %vm843, %v845, %v841
      %v847 = vmul.f32 1.0, %v846
      %v848 = vrcp.pop %v676
      %v849 = vmul.f32 %v676, %v848
      %v850 = vsub.f32 1.0, %v849
      %v851 = vmul.f32 %v848, %v850
      %v852 = vadd.f32 %v848, %v851
      %vm853 = vweird.f32 %v676
      %vm854 = vweird.f32 %v848
      %vm855 = vmor %vm853, %vm854
      %v856 = vsel %vm855, %v848, %v852
      %v857 = vand.u32 2147483647, %v676
      %vm858 = vcmp.eq.f32.partialorder %v857, 8.507059e+37
      %v859 = vand.u32 %v676, 2147483648
      %v860 = vor.u32 1.1754944e-38, %v859
      %v861 = vsel %vm858, %v860, %v856
      %v862 = vmul.f32 1.0, %v861
      %v863 = vrcp.pop %v677
      %v864 = vmul.f32 %v677, %v863
      %v865 = vsub.f32 1.0, %v864
      %v866 = vmul.f32 %v863, %v865
      %v867 = vadd.f32 %v863, %v866
      %vm868 = vweird.f32 %v677
      %vm869 = vweird.f32 %v863
      %vm870 = vmor %vm868, %vm869
      %v871 = vsel %vm870, %v863, %v867
      %v872 = vand.u32 2147483647, %v677
      %vm873 = vcmp.eq.f32.partialorder %v872, 8.507059e+37
      %v874 = vand.u32 %v677, 2147483648
      %v875 = vor.u32 1.1754944e-38, %v874
      %v876 = vsel %vm873, %v875, %v871
      %v877 = vmul.f32 1.0, %v876
      %v878 = vrcp.pop %v678
      %v879 = vmul.f32 %v678, %v878
      %v880 = vsub.f32 1.0, %v879
      %v881 = vmul.f32 %v878, %v880
      %v882 = vadd.f32 %v878, %v881
      %vm883 = vweird.f32 %v678
      %vm884 = vweird.f32 %v878
      %vm885 = vmor %vm883, %vm884
      %v886 = vsel %vm885, %v878, %v882
      %v887 = vand.u32 2147483647, %v678
      %vm888 = vcmp.eq.f32.partialorder %v887, 8.507059e+37
      %v889 = vand.u32 %v678, 2147483648
      %v890 = vor.u32 1.1754944e-38, %v889
      %v891 = vsel %vm888, %v890, %v886
      %v892 = vmul.f32 1.0, %v891
      %v893 = vrcp.pop %v679
      %v894 = vmul.f32 %v679, %v893
      %v895 = vsub.f32 1.0, %v894
      %v896 = vmul.f32 %v893, %v895
      %v897 = vadd.f32 %v893, %v896
      %vm898 = vweird.f32 %v679
      %vm899 = vweird.f32 %v893
      %vm900 = vmor %vm898, %vm899
      %v901 = vsel %vm900, %v893, %v897
      %v902 = vand.u32 2147483647, %v679
      %vm903 = vcmp.eq.f32.partialorder %v902, 8.507059e+37
      %v904 = vand.u32 %v679, 2147483648
      %v905 = vor.u32 1.1754944e-38, %v904
      %v906 = vsel %vm903, %v905, %v901
      %v907 = vmul.f32 1.0, %v906
      %v908 = vrcp.pop %v680
      %v909 = vmul.f32 %v680, %v908
      %v910 = vsub.f32 1.0, %v909
      %v911 = vmul.f32 %v908, %v910
      %v912 = vadd.f32 %v908, %v911
      %vm913 = vweird.f32 %v680
      %vm914 = vweird.f32 %v908
      %vm915 = vmor %vm913, %vm914
      %v916 = vsel %vm915, %v908, %v912
      %v917 = vand.u32 2147483647, %v680
      %vm918 = vcmp.eq.f32.partialorder %v917, 8.507059e+37
      %v919 = vand.u32 %v680, 2147483648
      %v920 = vor.u32 1.1754944e-38, %v919
      %v921 = vsel %vm918, %v920, %v916
      %v922 = vmul.f32 1.0, %v921
      %v923 = vrcp.pop %v681
      %v924 = vmul.f32 %v681, %v923
      %v925 = vsub.f32 1.0, %v924
      %v926 = vmul.f32 %v923, %v925
      %v927 = vadd.f32 %v923, %v926
      %vm928 = vweird.f32 %v681
      %vm929 = vweird.f32 %v923
      %vm930 = vmor %vm928, %vm929
      %v931 = vsel %vm930, %v923, %v927
      %v932 = vand.u32 2147483647, %v681
      %vm933 = vcmp.eq.f32.partialorder %v932, 8.507059e+37
      %v934 = vand.u32 %v681, 2147483648
      %v935 = vor.u32 1.1754944e-38, %v934
      %v936 = vsel %vm933, %v935, %v931
      %v937 = vmul.f32 1.0, %v936
      %v938 = vrcp.pop %v682
      %v939 = vmul.f32 %v682, %v938
      %v940 = vsub.f32 1.0, %v939
      %v941 = vmul.f32 %v938, %v940
      %v942 = vadd.f32 %v938, %v941
      %vm943 = vweird.f32 %v682
      %vm944 = vweird.f32 %v938
      %vm945 = vmor %vm943, %vm944
      %v946 = vsel %vm945, %v938, %v942
      %v947 = vand.u32 2147483647, %v682
      %vm948 = vcmp.eq.f32.partialorder %v947, 8.507059e+37
      %v949 = vand.u32 %v682, 2147483648
      %v950 = vor.u32 1.1754944e-38, %v949
      %v951 = vsel %vm948, %v950, %v946
      %v952 = vmul.f32 1.0, %v951
      %v953 = vrcp.pop %v683
      %v954 = vmul.f32 %v683, %v953
      %v955 = vsub.f32 1.0, %v954
      %v956 = vmul.f32 %v953, %v955
      %v957 = vadd.f32 %v953, %v956
      %vm958 = vweird.f32 %v683
      %vm959 = vweird.f32 %v953
      %vm960 = vmor %vm958, %vm959
      %v961 = vsel %vm960, %v953, %v957
      %v962 = vand.u32 2147483647, %v683
      %vm963 = vcmp.eq.f32.partialorder %v962, 8.507059e+37
      %v964 = vand.u32 %v683, 2147483648
      %v965 = vor.u32 1.1754944e-38, %v964
      %v966 = vsel %vm963, %v965, %v961
      %v967 = vmul.f32 1.0, %v966
      %v968 = vrcp.pop %v684
      %v969 = vmul.f32 %v684, %v968
      %v970 = vsub.f32 1.0, %v969
      %v971 = vmul.f32 %v968, %v970
      %v972 = vadd.f32 %v968, %v971
      %vm973 = vweird.f32 %v684
      %vm974 = vweird.f32 %v968
      %vm975 = vmor %vm973, %vm974
      %v976 = vsel %vm975, %v968, %v972
      %v977 = vand.u32 2147483647, %v684
      %vm978 = vcmp.eq.f32.partialorder %v977, 8.507059e+37
      %v979 = vand.u32 %v684, 2147483648
      %v980 = vor.u32 1.1754944e-38, %v979
      %v981 = vsel %vm978, %v980, %v976
      %v982 = vmul.f32 1.0, %v981
      %v983 = vrcp.pop %v685
      %v984 = vmul.f32 %v685, %v983
      %v985 = vsub.f32 1.0, %v984
      %v986 = vmul.f32 %v983, %v985
      %v987 = vadd.f32 %v983, %v986
      %vm988 = vweird.f32 %v685
      %vm989 = vweird.f32 %v983
      %vm990 = vmor %vm988, %vm989
      %v991 = vsel %vm990, %v983, %v987
      %v992 = vand.u32 2147483647, %v685
      %vm993 = vcmp.eq.f32.partialorder %v992, 8.507059e+37
      %v994 = vand.u32 %v685, 2147483648
      %v995 = vor.u32 1.1754944e-38, %v994
      %v996 = vsel %vm993, %v995, %v991
      %v997 = vmul.f32 1.0, %v996
      %v998 = vrcp.pop %v686
      %v999 = vmul.f32 %v686, %v998
      %v1000 = vsub.f32 1.0, %v999
      %v1001 = vmul.f32 %v998, %v1000
      %v1002 = vadd.f32 %v998, %v1001
      %vm1003 = vweird.f32 %v686
      %vm1004 = vweird.f32 %v998
      %vm1005 = vmor %vm1003, %vm1004
      %v1006 = vsel %vm1005, %v998, %v1002
      %v1007 = vand.u32 2147483647, %v686
      %vm1008 = vcmp.eq.f32.partialorder %v1007, 8.507059e+37
      %v1009 = vand.u32 %v686, 2147483648
      %v1010 = vor.u32 1.1754944e-38, %v1009
      %v1011 = vsel %vm1008, %v1010, %v1006
      %v1012 = vmul.f32 1.0, %v1011
      %v1013 = vrcp.pop %v687
      %v1014 = vmul.f32 %v687, %v1013
      %v1015 = vsub.f32 1.0, %v1014
      %v1016 = vmul.f32 %v1013, %v1015
      %v1017 = vadd.f32 %v1013, %v1016
      %vm1018 = vweird.f32 %v687
      %vm1019 = vweird.f32 %v1013
      %vm1020 = vmor %vm1018, %vm1019
      %v1021 = vsel %vm1020, %v1013, %v1017
      %v1022 = vand.u32 2147483647, %v687
      %vm1023 = vcmp.eq.f32.partialorder %v1022, 8.507059e+37
      %v1024 = vand.u32 %v687, 2147483648
      %v1025 = vor.u32 1.1754944e-38, %v1024
      %v1026 = vsel %vm1023, %v1025, %v1021
      %v1027 = vmul.f32 1.0, %v1026
      %v1028 = vrcp.pop %v688
      %v1029 = vmul.f32 %v688, %v1028
      %v1030 = vsub.f32 1.0, %v1029
      %v1031 = vmul.f32 %v1028, %v1030
      %v1032 = vadd.f32 %v1028, %v1031
      %vm1033 = vweird.f32 %v688
      %vm1034 = vweird.f32 %v1028
      %vm1035 = vmor %vm1033, %vm1034
      %v1036 = vsel %vm1035, %v1028, %v1032
      %v1037 = vand.u32 2147483647, %v688
      %vm1038 = vcmp.eq.f32.partialorder %v1037, 8.507059e+37
      %v1039 = vand.u32 %v688, 2147483648
      %v1040 = vor.u32 1.1754944e-38, %v1039
      %v1041 = vsel %vm1038, %v1040, %v1036
      %v1042 = vmul.f32 1.0, %v1041
      %v1043 = vrcp.pop %v689
      %v1044 = vmul.f32 %v689, %v1043
      %v1045 = vsub.f32 1.0, %v1044
      %v1046 = vmul.f32 %v1043, %v1045
      %v1047 = vadd.f32 %v1043, %v1046
      %vm1048 = vweird.f32 %v689
      %vm1049 = vweird.f32 %v1043
      %vm1050 = vmor %vm1048, %vm1049
      %v1051 = vsel %vm1050, %v1043, %v1047
      %v1052 = vand.u32 2147483647, %v689
      %vm1053 = vcmp.eq.f32.partialorder %v1052, 8.507059e+37
      %v1054 = vand.u32 %v689, 2147483648
      %v1055 = vor.u32 1.1754944e-38, %v1054
      %v1056 = vsel %vm1053, %v1055, %v1051
      %v1057 = vmul.f32 1.0, %v1056
      %v1058 = vrcp.pop %v690
      %v1059 = vmul.f32 %v690, %v1058
      %v1060 = vsub.f32 1.0, %v1059
      %v1061 = vmul.f32 %v1058, %v1060
      %v1062 = vadd.f32 %v1058, %v1061
      %vm1063 = vweird.f32 %v690
      %vm1064 = vweird.f32 %v1058
      %vm1065 = vmor %vm1063, %vm1064
      %v1066 = vsel %vm1065, %v1058, %v1062
      %v1067 = vand.u32 2147483647, %v690
      %vm1068 = vcmp.eq.f32.partialorder %v1067, 8.507059e+37
      %v1069 = vand.u32 %v690, 2147483648
      %v1070 = vor.u32 1.1754944e-38, %v1069
      %v1071 = vsel %vm1068, %v1070, %v1066
      %v1072 = vmul.f32 1.0, %v1071
      %v1073 = vrcp.pop %v691
      %v1074 = vmul.f32 %v691, %v1073
      %v1075 = vsub.f32 1.0, %v1074
      %v1076 = vmul.f32 %v1073, %v1075
      %v1077 = vadd.f32 %v1073, %v1076
      %vm1078 = vweird.f32 %v691
      %vm1079 = vweird.f32 %v1073
      %vm1080 = vmor %vm1078, %vm1079
      %v1081 = vsel %vm1080, %v1073, %v1077
      %v1082 = vand.u32 2147483647, %v691
      %vm1083 = vcmp.eq.f32.partialorder %v1082, 8.507059e+37
      %v1084 = vand.u32 %v691, 2147483648
      %v1085 = vor.u32 1.1754944e-38, %v1084
      %v1086 = vsel %vm1083, %v1085, %v1081
      %v1087 = vmul.f32 1.0, %v1086
      %v1088 = vrcp.pop %v692
      %v1089 = vmul.f32 %v692, %v1088
      %v1090 = vsub.f32 1.0, %v1089
      %v1091 = vmul.f32 %v1088, %v1090
      %v1092 = vadd.f32 %v1088, %v1091
      %vm1093 = vweird.f32 %v692
      %vm1094 = vweird.f32 %v1088
      %vm1095 = vmor %vm1093, %vm1094
      %v1096 = vsel %vm1095, %v1088, %v1092
      %v1097 = vand.u32 2147483647, %v692
      %vm1098 = vcmp.eq.f32.partialorder %v1097, 8.507059e+37
      %v1099 = vand.u32 %v692, 2147483648
      %v1100 = vor.u32 1.1754944e-38, %v1099
      %v1101 = vsel %vm1098, %v1100, %v1096
      %v1102 = vmul.f32 1.0, %v1101
      %v1103 = vrcp.pop %v693
      %v1104 = vmul.f32 %v693, %v1103
      %v1105 = vsub.f32 1.0, %v1104
      %v1106 = vmul.f32 %v1103, %v1105
      %v1107 = vadd.f32 %v1103, %v1106
      %vm1108 = vweird.f32 %v693
      %vm1109 = vweird.f32 %v1103
      %vm1110 = vmor %vm1108, %vm1109
      %v1111 = vsel %vm1110, %v1103, %v1107
      %v1112 = vand.u32 2147483647, %v693
      %vm1113 = vcmp.eq.f32.partialorder %v1112, 8.507059e+37
      %v1114 = vand.u32 %v693, 2147483648
      %v1115 = vor.u32 1.1754944e-38, %v1114
      %v1116 = vsel %vm1113, %v1115, %v1111
      %v1117 = vmul.f32 1.0, %v1116
      %v1118 = vrcp.pop %v694
      %v1119 = vmul.f32 %v694, %v1118
      %v1120 = vsub.f32 1.0, %v1119
      %v1121 = vmul.f32 %v1118, %v1120
      %v1122 = vadd.f32 %v1118, %v1121
      %vm1123 = vweird.f32 %v694
      %vm1124 = vweird.f32 %v1118
      %vm1125 = vmor %vm1123, %vm1124
      %v1126 = vsel %vm1125, %v1118, %v1122
      %v1127 = vand.u32 2147483647, %v694
      %vm1128 = vcmp.eq.f32.partialorder %v1127, 8.507059e+37
      %v1129 = vand.u32 %v694, 2147483648
      %v1130 = vor.u32 1.1754944e-38, %v1129
      %v1131 = vsel %vm1128, %v1130, %v1126
      %v1132 = vmul.f32 1.0, %v1131
      %v1133 = vrcp.pop %v695
      %v1134 = vmul.f32 %v695, %v1133
      %v1135 = vsub.f32 1.0, %v1134
      %v1136 = vmul.f32 %v1133, %v1135
      %v1137 = vadd.f32 %v1133, %v1136
      %vm1138 = vweird.f32 %v695
      %vm1139 = vweird.f32 %v1133
      %vm1140 = vmor %vm1138, %vm1139
      %v1141 = vsel %vm1140, %v1133, %v1137
      %v1142 = vand.u32 2147483647, %v695
      %vm1143 = vcmp.eq.f32.partialorder %v1142, 8.507059e+37
      %v1144 = vand.u32 %v695, 2147483648
      %v1145 = vor.u32 1.1754944e-38, %v1144
      %v1146 = vsel %vm1143, %v1145, %v1141
      %v1147 = vmul.f32 1.0, %v1146
      %v1148 = vrcp.pop %v696
      %v1149 = vmul.f32 %v696, %v1148
      %v1150 = vsub.f32 1.0, %v1149
      %v1151 = vmul.f32 %v1148, %v1150
      %v1152 = vadd.f32 %v1148, %v1151
      %vm1153 = vweird.f32 %v696
      %vm1154 = vweird.f32 %v1148
      %vm1155 = vmor %vm1153, %vm1154
      %v1156 = vsel %vm1155, %v1148, %v1152
      %v1157 = vand.u32 2147483647, %v696
      %vm1158 = vcmp.eq.f32.partialorder %v1157, 8.507059e+37
      %v1159 = vand.u32 %v696, 2147483648
      %v1160 = vor.u32 1.1754944e-38, %v1159
      %v1161 = vsel %vm1158, %v1160, %v1156
      %v1162 = vmul.f32 1.0, %v1161
      %v1163 = vrcp.pop %v697
      %v1164 = vmul.f32 %v697, %v1163
      %v1165 = vsub.f32 1.0, %v1164
      %v1166 = vmul.f32 %v1163, %v1165
      %v1167 = vadd.f32 %v1163, %v1166
      %vm1168 = vweird.f32 %v697
      %vm1169 = vweird.f32 %v1163
      %vm1170 = vmor %vm1168, %vm1169
      %v1171 = vsel %vm1170, %v1163, %v1167
      %v1172 = vand.u32 2147483647, %v697
      %vm1173 = vcmp.eq.f32.partialorder %v1172, 8.507059e+37
      %v1174 = vand.u32 %v697, 2147483648
      %v1175 = vor.u32 1.1754944e-38, %v1174
      %v1176 = vsel %vm1173, %v1175, %v1171
      %v1177 = vmul.f32 1.0, %v1176
      %v1178 = vmul.f32 %v712, 1.0614054
      %v1179 = vmul.f32 %v727, 1.0614054
      %v1180 = vmul.f32 %v742, 1.0614054
      %v1181 = vmul.f32 %v757, 1.0614054
      %v1182 = vmul.f32 %v772, 1.0614054
      %v1183 = vmul.f32 %v787, 1.0614054
      %v1184 = vmul.f32 %v802, 1.0614054
      %v1185 = vmul.f32 %v817, 1.0614054
      %v1186 = vmul.f32 %v832, 1.0614054
      %v1187 = vmul.f32 %v847, 1.0614054
      %v1188 = vmul.f32 %v862, 1.0614054
      %v1189 = vmul.f32 %v877, 1.0614054
      %v1190 = vmul.f32 %v892, 1.0614054
      %v1191 = vmul.f32 %v907, 1.0614054
      %v1192 = vmul.f32 %v922, 1.0614054
      %v1193 = vmul.f32 %v937, 1.0614054
      %v1194 = vmul.f32 %v952, 1.0614054
      %v1195 = vmul.f32 %v967, 1.0614054
      %v1196 = vmul.f32 %v982, 1.0614054
      %v1197 = vmul.f32 %v997, 1.0614054
      %v1198 = vmul.f32 %v1012, 1.0614054
      %v1199 = vmul.f32 %v1027, 1.0614054
      %v1200 = vmul.f32 %v1042, 1.0614054
      %v1201 = vmul.f32 %v1057, 1.0614054
      %v1202 = vmul.f32 %v1072, 1.0614054
      %v1203 = vmul.f32 %v1087, 1.0614054
      %v1204 = vmul.f32 %v1102, 1.0614054
      %v1205 = vmul.f32 %v1117, 1.0614054
      %v1206 = vmul.f32 %v1132, 1.0614054
      %v1207 = vmul.f32 %v1147, 1.0614054
      %v1208 = vmul.f32 %v1162, 1.0614054
      %v1209 = vmul.f32 %v1177, 1.0614054
      %v1210 = vadd.f32 %v1178, -1.4531521
      %v1211 = vadd.f32 %v1179, -1.4531521
      %v1212 = vadd.f32 %v1180, -1.4531521
      %v1213 = vadd.f32 %v1181, -1.4531521
      %v1214 = vadd.f32 %v1182, -1.4531521
      %v1215 = vadd.f32 %v1183, -1.4531521
      %v1216 = vadd.f32 %v1184, -1.4531521
      %v1217 = vadd.f32 %v1185, -1.4531521
      %v1218 = vadd.f32 %v1186, -1.4531521
      %v1219 = vadd.f32 %v1187, -1.4531521
      %v1220 = vadd.f32 %v1188, -1.4531521
      %v1221 = vadd.f32 %v1189, -1.4531521
      %v1222 = vadd.f32 %v1190, -1.4531521
      %v1223 = vadd.f32 %v1191, -1.4531521
      %v1224 = vadd.f32 %v1192, -1.4531521
      %v1225 = vadd.f32 %v1193, -1.4531521
      %v1226 = vadd.f32 %v1194, -1.4531521
      %v1227 = vadd.f32 %v1195, -1.4531521
      %v1228 = vadd.f32 %v1196, -1.4531521
      %v1229 = vadd.f32 %v1197, -1.4531521
      %v1230 = vadd.f32 %v1198, -1.4531521
      %v1231 = vadd.f32 %v1199, -1.4531521
      %v1232 = vadd.f32 %v1200, -1.4531521
      %v1233 = vadd.f32 %v1201, -1.4531521
      %v1234 = vadd.f32 %v1202, -1.4531521
      %v1235 = vadd.f32 %v1203, -1.4531521
      %v1236 = vadd.f32 %v1204, -1.4531521
      %v1237 = vadd.f32 %v1205, -1.4531521
      %v1238 = vadd.f32 %v1206, -1.4531521
      %v1239 = vadd.f32 %v1207, -1.4531521
      %v1240 = vadd.f32 %v1208, -1.4531521
      %v1241 = vadd.f32 %v1209, -1.4531521
      %v1242 = vmul.f32 %v1210, %v712
      %v1243 = vmul.f32 %v1211, %v727
      %v1244 = vmul.f32 %v1212, %v742
      %v1245 = vmul.f32 %v1213, %v757
      %v1246 = vmul.f32 %v1214, %v772
      %v1247 = vmul.f32 %v1215, %v787
      %v1248 = vmul.f32 %v1216, %v802
      %v1249 = vmul.f32 %v1217, %v817
      %v1250 = vmul.f32 %v1218, %v832
      %v1251 = vmul.f32 %v1219, %v847
      %v1252 = vmul.f32 %v1220, %v862
      %v1253 = vmul.f32 %v1221, %v877
      %v1254 = vmul.f32 %v1222, %v892
      %v1255 = vmul.f32 %v1223, %v907
      %v1256 = vmul.f32 %v1224, %v922
      %v1257 = vmul.f32 %v1225, %v937
      %v1258 = vmul.f32 %v1226, %v952
      %v1259 = vmul.f32 %v1227, %v967
      %v1260 = vmul.f32 %v1228, %v982
      %v1261 = vmul.f32 %v1229, %v997
      %v1262 = vmul.f32 %v1230, %v1012
      %v1263 = vmul.f32 %v1231, %v1027
      %v1264 = vmul.f32 %v1232, %v1042
      %v1265 = vmul.f32 %v1233, %v1057
      %v1266 = vmul.f32 %v1234, %v1072
      %v1267 = vmul.f32 %v1235, %v1087
      %v1268 = vmul.f32 %v1236, %v1102
      %v1269 = vmul.f32 %v1237, %v1117
      %v1270 = vmul.f32 %v1238, %v1132
      %v1271 = vmul.f32 %v1239, %v1147
      %v1272 = vmul.f32 %v1240, %v1162
      %v1273 = vmul.f32 %v1241, %v1177
      %v1274 = vadd.f32 %v1242, 1.4214138
      %v1275 = vadd.f32 %v1243, 1.4214138
      %v1276 = vadd.f32 %v1244, 1.4214138
      %v1277 = vadd.f32 %v1245, 1.4214138
      %v1278 = vadd.f32 %v1246, 1.4214138
      %v1279 = vadd.f32 %v1247, 1.4214138
      %v1280 = vadd.f32 %v1248, 1.4214138
      %v1281 = vadd.f32 %v1249, 1.4214138
      %v1282 = vadd.f32 %v1250, 1.4214138
      %v1283 = vadd.f32 %v1251, 1.4214138
      %v1284 = vadd.f32 %v1252, 1.4214138
      %v1285 = vadd.f32 %v1253, 1.4214138
      %v1286 = vadd.f32 %v1254, 1.4214138
      %v1287 = vadd.f32 %v1255, 1.4214138
      %v1288 = vadd.f32 %v1256, 1.4214138
      %v1289 = vadd.f32 %v1257, 1.4214138
      %v1290 = vadd.f32 %v1258, 1.4214138
      %v1291 = vadd.f32 %v1259, 1.4214138
      %v1292 = vadd.f32 %v1260, 1.4214138
      %v1293 = vadd.f32 %v1261, 1.4214138
      %v1294 = vadd.f32 %v1262, 1.4214138
      %v1295 = vadd.f32 %v1263, 1.4214138
      %v1296 = vadd.f32 %v1264, 1.4214138
      %v1297 = vadd.f32 %v1265, 1.4214138
      %v1298 = vadd.f32 %v1266, 1.4214138
      %v1299 = vadd.f32 %v1267, 1.4214138
      %v1300 = vadd.f32 %v1268, 1.4214138
      %v1301 = vadd.f32 %v1269, 1.4214138
      %v1302 = vadd.f32 %v1270, 1.4214138
      %v1303 = vadd.f32 %v1271, 1.4214138
      %v1304 = vadd.f32 %v1272, 1.4214138
      %v1305 = vadd.f32 %v1273, 1.4214138
      %v1306 = vmul.f32 %v1274, %v712
      %v1307 = vmul.f32 %v1275, %v727
      %v1308 = vmul.f32 %v1276, %v742
      %v1309 = vmul.f32 %v1277, %v757
      %v1310 = vmul.f32 %v1278, %v772
      %v1311 = vmul.f32 %v1279, %v787
      %v1312 = vmul.f32 %v1280, %v802
      %v1313 = vmul.f32 %v1281, %v817
      %v1314 = vmul.f32 %v1282, %v832
      %v1315 = vmul.f32 %v1283, %v847
      %v1316 = vmul.f32 %v1284, %v862
      %v1317 = vmul.f32 %v1285, %v877
      %v1318 = vmul.f32 %v1286, %v892
      %v1319 = vmul.f32 %v1287, %v907
      %v1320 = vmul.f32 %v1288, %v922
      %v1321 = vmul.f32 %v1289, %v937
      %v1322 = vmul.f32 %v1290, %v952
      %v1323 = vmul.f32 %v1291, %v967
      %v1324 = vmul.f32 %v1292, %v982
      %v1325 = vmul.f32 %v1293, %v997
      %v1326 = vmul.f32 %v1294, %v1012
      %v1327 = vmul.f32 %v1295, %v1027
      %v1328 = vmul.f32 %v1296, %v1042
      %v1329 = vmul.f32 %v1297, %v1057
      %v1330 = vmul.f32 %v1298, %v1072
      %v1331 = vmul.f32 %v1299, %v1087
      %v1332 = vmul.f32 %v1300, %v1102
      %v1333 = vmul.f32 %v1301, %v1117
      %v1334 = vmul.f32 %v1302, %v1132
      %v1335 = vmul.f32 %v1303, %v1147
      %v1336 = vmul.f32 %v1304, %v1162
      %v1337 = vmul.f32 %v1305, %v1177
      %v1338 = vadd.f32 %v1306, -0.28449672
      %v1339 = vadd.f32 %v1307, -0.28449672
      %v1340 = vadd.f32 %v1308, -0.28449672
      %v1341 = vadd.f32 %v1309, -0.28449672
      %v1342 = vadd.f32 %v1310, -0.28449672
      %v1343 = vadd.f32 %v1311, -0.28449672
      %v1344 = vadd.f32 %v1312, -0.28449672
      %v1345 = vadd.f32 %v1313, -0.28449672
      %v1346 = vadd.f32 %v1314, -0.28449672
      %v1347 = vadd.f32 %v1315, -0.28449672
      %v1348 = vadd.f32 %v1316, -0.28449672
      %v1349 = vadd.f32 %v1317, -0.28449672
      %v1350 = vadd.f32 %v1318, -0.28449672
      %v1351 = vadd.f32 %v1319, -0.28449672
      %v1352 = vadd.f32 %v1320, -0.28449672
      %v1353 = vadd.f32 %v1321, -0.28449672
      %v1354 = vadd.f32 %v1322, -0.28449672
      %v1355 = vadd.f32 %v1323, -0.28449672
      %v1356 = vadd.f32 %v1324, -0.28449672
      %v1357 = vadd.f32 %v1325, -0.28449672
      %v1358 = vadd.f32 %v1326, -0.28449672
      %v1359 = vadd.f32 %v1327, -0.28449672
      %v1360 = vadd.f32 %v1328, -0.28449672
      %v1361 = vadd.f32 %v1329, -0.28449672
      %v1362 = vadd.f32 %v1330, -0.28449672
      %v1363 = vadd.f32 %v1331, -0.28449672
      %v1364 = vadd.f32 %v1332, -0.28449672
      %v1365 = vadd.f32 %v1333, -0.28449672
      %v1366 = vadd.f32 %v1334, -0.28449672
      %v1367 = vadd.f32 %v1335, -0.28449672
      %v1368 = vadd.f32 %v1336, -0.28449672
      %v1369 = vadd.f32 %v1337, -0.28449672
      %v1370 = vmul.f32 %v1338, %v712
      %v1371 = vmul.f32 %v1339, %v727
      %v1372 = vmul.f32 %v1340, %v742
      %v1373 = vmul.f32 %v1341, %v757
      %v1374 = vmul.f32 %v1342, %v772
      %v1375 = vmul.f32 %v1343, %v787
      %v1376 = vmul.f32 %v1344, %v802
      %v1377 = vmul.f32 %v1345, %v817
      %v1378 = vmul.f32 %v1346, %v832
      %v1379 = vmul.f32 %v1347, %v847
      %v1380 = vmul.f32 %v1348, %v862
      %v1381 = vmul.f32 %v1349, %v877
      %v1382 = vmul.f32 %v1350, %v892
      %v1383 = vmul.f32 %v1351, %v907
      %v1384 = vmul.f32 %v1352, %v922
      %v1385 = vmul.f32 %v1353, %v937
      %v1386 = vmul.f32 %v1354, %v952
      %v1387 = vmul.f32 %v1355, %v967
      %v1388 = vmul.f32 %v1356, %v982
      %v1389 = vmul.f32 %v1357, %v997
      %v1390 = vmul.f32 %v1358, %v1012
      %v1391 = vmul.f32 %v1359, %v1027
      %v1392 = vmul.f32 %v1360, %v1042
      %v1393 = vmul.f32 %v1361, %v1057
      %v1394 = vmul.f32 %v1362, %v1072
      %v1395 = vmul.f32 %v1363, %v1087
      %v1396 = vmul.f32 %v1364, %v1102
      %v1397 = vmul.f32 %v1365, %v1117
      %v1398 = vmul.f32 %v1366, %v1132
      %v1399 = vmul.f32 %v1367, %v1147
      %v1400 = vmul.f32 %v1368, %v1162
      %v1401 = vmul.f32 %v1369, %v1177
      %v1402 = vadd.f32 %v1370, 0.2548296
      %v1403 = vadd.f32 %v1371, 0.2548296
      %v1404 = vadd.f32 %v1372, 0.2548296
      %v1405 = vadd.f32 %v1373, 0.2548296
      %v1406 = vadd.f32 %v1374, 0.2548296
      %v1407 = vadd.f32 %v1375, 0.2548296
      %v1408 = vadd.f32 %v1376, 0.2548296
      %v1409 = vadd.f32 %v1377, 0.2548296
      %v1410 = vadd.f32 %v1378, 0.2548296
      %v1411 = vadd.f32 %v1379, 0.2548296
      %v1412 = vadd.f32 %v1380, 0.2548296
      %v1413 = vadd.f32 %v1381, 0.2548296
      %v1414 = vadd.f32 %v1382, 0.2548296
      %v1415 = vadd.f32 %v1383, 0.2548296
      %v1416 = vadd.f32 %v1384, 0.2548296
      %v1417 = vadd.f32 %v1385, 0.2548296
      %v1418 = vadd.f32 %v1386, 0.2548296
      %v1419 = vadd.f32 %v1387, 0.2548296
      %v1420 = vadd.f32 %v1388, 0.2548296
      %v1421 = vadd.f32 %v1389, 0.2548296
      %v1422 = vadd.f32 %v1390, 0.2548296
      %v1423 = vadd.f32 %v1391, 0.2548296
      %v1424 = vadd.f32 %v1392, 0.2548296
      %v1425 = vadd.f32 %v1393, 0.2548296
      %v1426 = vadd.f32 %v1394, 0.2548296
      %v1427 = vadd.f32 %v1395, 0.2548296
      %v1428 = vadd.f32 %v1396, 0.2548296
      %v1429 = vadd.f32 %v1397, 0.2548296
      %v1430 = vadd.f32 %v1398, 0.2548296
      %v1431 = vadd.f32 %v1399, 0.2548296
      %v1432 = vadd.f32 %v1400, 0.2548296
      %v1433 = vadd.f32 %v1401, 0.2548296
      %v1434 = vmul.f32 %v1402, %v712
      %v1435 = vmul.f32 %v1403, %v727
      %v1436 = vmul.f32 %v1404, %v742
      %v1437 = vmul.f32 %v1405, %v757
      %v1438 = vmul.f32 %v1406, %v772
      %v1439 = vmul.f32 %v1407, %v787
      %v1440 = vmul.f32 %v1408, %v802
      %v1441 = vmul.f32 %v1409, %v817
      %v1442 = vmul.f32 %v1410, %v832
      %v1443 = vmul.f32 %v1411, %v847
      %v1444 = vmul.f32 %v1412, %v862
      %v1445 = vmul.f32 %v1413, %v877
      %v1446 = vmul.f32 %v1414, %v892
      %v1447 = vmul.f32 %v1415, %v907
      %v1448 = vmul.f32 %v1416, %v922
      %v1449 = vmul.f32 %v1417, %v937
      %v1450 = vmul.f32 %v1418, %v952
      %v1451 = vmul.f32 %v1419, %v967
      %v1452 = vmul.f32 %v1420, %v982
      %v1453 = vmul.f32 %v1421, %v997
      %v1454 = vmul.f32 %v1422, %v1012
      %v1455 = vmul.f32 %v1423, %v1027
      %v1456 = vmul.f32 %v1424, %v1042
      %v1457 = vmul.f32 %v1425, %v1057
      %v1458 = vmul.f32 %v1426, %v1072
      %v1459 = vmul.f32 %v1427, %v1087
      %v1460 = vmul.f32 %v1428, %v1102
      %v1461 = vmul.f32 %v1429, %v1117
      %v1462 = vmul.f32 %v1430, %v1132
      %v1463 = vmul.f32 %v1431, %v1147
      %v1464 = vmul.f32 %v1432, %v1162
      %v1465 = vmul.f32 %v1433, %v1177
      %v1466 = vsub.f32 0.0, %v602
      %v1467 = vsub.f32 0.0, %v603
      %v1468 = vsub.f32 0.0, %v604
      %v1469 = vsub.f32 0.0, %v605
      %v1470 = vsub.f32 0.0, %v606
      %v1471 = vsub.f32 0.0, %v607
      %v1472 = vsub.f32 0.0, %v608
      %v1473 = vsub.f32 0.0, %v609
      %v1474 = vsub.f32 0.0, %v610
      %v1475 = vsub.f32 0.0, %v611
      %v1476 = vsub.f32 0.0, %v612
      %v1477 = vsub.f32 0.0, %v613
      %v1478 = vsub.f32 0.0, %v614
      %v1479 = vsub.f32 0.0, %v615
      %v1480 = vsub.f32 0.0, %v616
      %v1481 = vsub.f32 0.0, %v617
      %v1482 = vsub.f32 0.0, %v618
      %v1483 = vsub.f32 0.0, %v619
      %v1484 = vsub.f32 0.0, %v620
      %v1485 = vsub.f32 0.0, %v621
      %v1486 = vsub.f32 0.0, %v622
      %v1487 = vsub.f32 0.0, %v623
      %v1488 = vsub.f32 0.0, %v624
      %v1489 = vsub.f32 0.0, %v625
      %v1490 = vsub.f32 0.0, %v626
      %v1491 = vsub.f32 0.0, %v627
      %v1492 = vsub.f32 0.0, %v628
      %v1493 = vsub.f32 0.0, %v629
      %v1494 = vsub.f32 0.0, %v630
      %v1495 = vsub.f32 0.0, %v631
      %v1496 = vsub.f32 0.0, %v632
      %v1497 = vsub.f32 0.0, %v633
      %v1498 = vmul.f32 %v1466, %v602
      %v1499 = vmul.f32 %v1467, %v603
      %v1500 = vmul.f32 %v1468, %v604
      %v1501 = vmul.f32 %v1469, %v605
      %v1502 = vmul.f32 %v1470, %v606
      %v1503 = vmul.f32 %v1471, %v607
      %v1504 = vmul.f32 %v1472, %v608
      %v1505 = vmul.f32 %v1473, %v609
      %v1506 = vmul.f32 %v1474, %v610
      %v1507 = vmul.f32 %v1475, %v611
      %v1508 = vmul.f32 %v1476, %v612
      %v1509 = vmul.f32 %v1477, %v613
      %v1510 = vmul.f32 %v1478, %v614
      %v1511 = vmul.f32 %v1479, %v615
      %v1512 = vmul.f32 %v1480, %v616
      %v1513 = vmul.f32 %v1481, %v617
      %v1514 = vmul.f32 %v1482, %v618
      %v1515 = vmul.f32 %v1483, %v619
      %v1516 = vmul.f32 %v1484, %v620
      %v1517 = vmul.f32 %v1485, %v621
      %v1518 = vmul.f32 %v1486, %v622
      %v1519 = vmul.f32 %v1487, %v623
      %v1520 = vmul.f32 %v1488, %v624
      %v1521 = vmul.f32 %v1489, %v625
      %v1522 = vmul.f32 %v1490, %v626
      %v1523 = vmul.f32 %v1491, %v627
      %v1524 = vmul.f32 %v1492, %v628
      %v1525 = vmul.f32 %v1493, %v629
      %v1526 = vmul.f32 %v1494, %v630
      %v1527 = vmul.f32 %v1495, %v631
      %v1528 = vmul.f32 %v1496, %v632
      %v1529 = vmul.f32 %v1497, %v633
      %v1530 = vmul.f32 %v1498, 1.442695
      %v1531 = vpow.pop %v1530
      %v1532 = vmul.f32 %v1499, 1.442695
      %v1533 = vpow.pop %v1532
      %v1534 = vmul.f32 %v1500, 1.442695
      %v1535 = vpow.pop %v1534
      %v1536 = vmul.f32 %v1501, 1.442695
      %v1537 = vpow.pop %v1536
      %v1538 = vmul.f32 %v1502, 1.442695
      %v1539 = vpow.pop %v1538
      %v1540 = vmul.f32 %v1503, 1.442695
      %v1541 = vpow.pop %v1540
      %v1542 = vmul.f32 %v1504, 1.442695
      %v1543 = vpow.pop %v1542
      %v1544 = vmul.f32 %v1505, 1.442695
      %v1545 = vpow.pop %v1544
      %v1546 = vmul.f32 %v1506, 1.442695
      %v1547 = vpow.pop %v1546
      %v1548 = vmul.f32 %v1507, 1.442695
      %v1549 = vpow.pop %v1548
      %v1550 = vmul.f32 %v1508, 1.442695
      %v1551 = vpow.pop %v1550
      %v1552 = vmul.f32 %v1509, 1.442695
      %v1553 = vpow.pop %v1552
      %v1554 = vmul.f32 %v1510, 1.442695
      %v1555 = vpow.pop %v1554
      %v1556 = vmul.f32 %v1511, 1.442695
      %v1557 = vpow.pop %v1556
      %v1558 = vmul.f32 %v1512, 1.442695
      %v1559 = vpow.pop %v1558
      %v1560 = vmul.f32 %v1513, 1.442695
      %v1561 = vpow.pop %v1560
      %v1562 = vmul.f32 %v1514, 1.442695
      %v1563 = vpow.pop %v1562
      %v1564 = vmul.f32 %v1515, 1.442695
      %v1565 = vpow.pop %v1564
      %v1566 = vmul.f32 %v1516, 1.442695
      %v1567 = vpow.pop %v1566
      %v1568 = vmul.f32 %v1517, 1.442695
      %v1569 = vpow.pop %v1568
      %v1570 = vmul.f32 %v1518, 1.442695
      %v1571 = vpow.pop %v1570
      %v1572 = vmul.f32 %v1519, 1.442695
      %v1573 = vpow.pop %v1572
      %v1574 = vmul.f32 %v1520, 1.442695
      %v1575 = vpow.pop %v1574
      %v1576 = vmul.f32 %v1521, 1.442695
      %v1577 = vpow.pop %v1576
      %v1578 = vmul.f32 %v1522, 1.442695
      %v1579 = vpow.pop %v1578
      %v1580 = vmul.f32 %v1523, 1.442695
      %v1581 = vpow.pop %v1580
      %v1582 = vmul.f32 %v1524, 1.442695
      %v1583 = vpow.pop %v1582
      %v1584 = vmul.f32 %v1525, 1.442695
      %v1585 = vpow.pop %v1584
      %v1586 = vmul.f32 %v1526, 1.442695
      %v1587 = vpow.pop %v1586
      %v1588 = vmul.f32 %v1527, 1.442695
      %v1589 = vpow.pop %v1588
      %v1590 = vmul.f32 %v1528, 1.442695
      %v1591 = vpow.pop %v1590
      %v1592 = vmul.f32 %v1529, 1.442695
      %v1593 = vpow.pop %v1592
      %v1594 = vmul.f32 %v1434, %v1531
      %v1595 = vmul.f32 %v1435, %v1533
      %v1596 = vmul.f32 %v1436, %v1535
      %v1597 = vmul.f32 %v1437, %v1537
      %v1598 = vmul.f32 %v1438, %v1539
      %v1599 = vmul.f32 %v1439, %v1541
      %v1600 = vmul.f32 %v1440, %v1543
      %v1601 = vmul.f32 %v1441, %v1545
      %v1602 = vmul.f32 %v1442, %v1547
      %v1603 = vmul.f32 %v1443, %v1549
      %v1604 = vmul.f32 %v1444, %v1551
      %v1605 = vmul.f32 %v1445, %v1553
      %v1606 = vmul.f32 %v1446, %v1555
      %v1607 = vmul.f32 %v1447, %v1557
      %v1608 = vmul.f32 %v1448, %v1559
      %v1609 = vmul.f32 %v1449, %v1561
      %v1610 = vmul.f32 %v1450, %v1563
      %v1611 = vmul.f32 %v1451, %v1565
      %v1612 = vmul.f32 %v1452, %v1567
      %v1613 = vmul.f32 %v1453, %v1569
      %v1614 = vmul.f32 %v1454, %v1571
      %v1615 = vmul.f32 %v1455, %v1573
      %v1616 = vmul.f32 %v1456, %v1575
      %v1617 = vmul.f32 %v1457, %v1577
      %v1618 = vmul.f32 %v1458, %v1579
      %v1619 = vmul.f32 %v1459, %v1581
      %v1620 = vmul.f32 %v1460, %v1583
      %v1621 = vmul.f32 %v1461, %v1585
      %v1622 = vmul.f32 %v1462, %v1587
      %v1623 = vmul.f32 %v1463, %v1589
      %v1624 = vmul.f32 %v1464, %v1591
      %v1625 = vmul.f32 %v1465, %v1593
      %v1626 = vsub.f32 1.0, %v1594
      %v1627 = vsub.f32 1.0, %v1595
      %v1628 = vsub.f32 1.0, %v1596
      %v1629 = vsub.f32 1.0, %v1597
      %v1630 = vsub.f32 1.0, %v1598
      %v1631 = vsub.f32 1.0, %v1599
      %v1632 = vsub.f32 1.0, %v1600
      %v1633 = vsub.f32 1.0, %v1601
      %v1634 = vsub.f32 1.0, %v1602
      %v1635 = vsub.f32 1.0, %v1603
      %v1636 = vsub.f32 1.0, %v1604
      %v1637 = vsub.f32 1.0, %v1605
      %v1638 = vsub.f32 1.0, %v1606
      %v1639 = vsub.f32 1.0, %v1607
      %v1640 = vsub.f32 1.0, %v1608
      %v1641 = vsub.f32 1.0, %v1609
      %v1642 = vsub.f32 1.0, %v1610
      %v1643 = vsub.f32 1.0, %v1611
      %v1644 = vsub.f32 1.0, %v1612
      %v1645 = vsub.f32 1.0, %v1613
      %v1646 = vsub.f32 1.0, %v1614
      %v1647 = vsub.f32 1.0, %v1615
      %v1648 = vsub.f32 1.0, %v1616
      %v1649 = vsub.f32 1.0, %v1617
      %v1650 = vsub.f32 1.0, %v1618
      %v1651 = vsub.f32 1.0, %v1619
      %v1652 = vsub.f32 1.0, %v1620
      %v1653 = vsub.f32 1.0, %v1621
      %v1654 = vsub.f32 1.0, %v1622
      %v1655 = vsub.f32 1.0, %v1623
      %v1656 = vsub.f32 1.0, %v1624
      %v1657 = vsub.f32 1.0, %v1625
      %v1658 = vmul.f32 %v570, %v1626
      %v1659 = vmul.f32 %v571, %v1627
      %v1660 = vmul.f32 %v572, %v1628
      %v1661 = vmul.f32 %v573, %v1629
      %v1662 = vmul.f32 %v574, %v1630
      %v1663 = vmul.f32 %v575, %v1631
      %v1664 = vmul.f32 %v576, %v1632
      %v1665 = vmul.f32 %v577, %v1633
      %v1666 = vmul.f32 %v578, %v1634
      %v1667 = vmul.f32 %v579, %v1635
      %v1668 = vmul.f32 %v580, %v1636
      %v1669 = vmul.f32 %v581, %v1637
      %v1670 = vmul.f32 %v582, %v1638
      %v1671 = vmul.f32 %v583, %v1639
      %v1672 = vmul.f32 %v584, %v1640
      %v1673 = vmul.f32 %v585, %v1641
      %v1674 = vmul.f32 %v586, %v1642
      %v1675 = vmul.f32 %v587, %v1643
      %v1676 = vmul.f32 %v588, %v1644
      %v1677 = vmul.f32 %v589, %v1645
      %v1678 = vmul.f32 %v590, %v1646
      %v1679 = vmul.f32 %v591, %v1647
      %v1680 = vmul.f32 %v592, %v1648
      %v1681 = vmul.f32 %v593, %v1649
      %v1682 = vmul.f32 %v594, %v1650
      %v1683 = vmul.f32 %v595, %v1651
      %v1684 = vmul.f32 %v596, %v1652
      %v1685 = vmul.f32 %v597, %v1653
      %v1686 = vmul.f32 %v598, %v1654
      %v1687 = vmul.f32 %v599, %v1655
      %v1688 = vmul.f32 %v600, %v1656
      %v1689 = vmul.f32 %v601, %v1657
      %v1690 = vadd.f32 %v1658, 1.0
      %v1691 = vadd.f32 %v1659, 1.0
      %v1692 = vadd.f32 %v1660, 1.0
      %v1693 = vadd.f32 %v1661, 1.0
      %v1694 = vadd.f32 %v1662, 1.0
      %v1695 = vadd.f32 %v1663, 1.0
      %v1696 = vadd.f32 %v1664, 1.0
      %v1697 = vadd.f32 %v1665, 1.0
      %v1698 = vadd.f32 %v1666, 1.0
      %v1699 = vadd.f32 %v1667, 1.0
      %v1700 = vadd.f32 %v1668, 1.0
      %v1701 = vadd.f32 %v1669, 1.0
      %v1702 = vadd.f32 %v1670, 1.0
      %v1703 = vadd.f32 %v1671, 1.0
      %v1704 = vadd.f32 %v1672, 1.0
      %v1705 = vadd.f32 %v1673, 1.0
      %v1706 = vadd.f32 %v1674, 1.0
      %v1707 = vadd.f32 %v1675, 1.0
      %v1708 = vadd.f32 %v1676, 1.0
      %v1709 = vadd.f32 %v1677, 1.0
      %v1710 = vadd.f32 %v1678, 1.0
      %v1711 = vadd.f32 %v1679, 1.0
      %v1712 = vadd.f32 %v1680, 1.0
      %v1713 = vadd.f32 %v1681, 1.0
      %v1714 = vadd.f32 %v1682, 1.0
      %v1715 = vadd.f32 %v1683, 1.0
      %v1716 = vadd.f32 %v1684, 1.0
      %v1717 = vadd.f32 %v1685, 1.0
      %v1718 = vadd.f32 %v1686, 1.0
      %v1719 = vadd.f32 %v1687, 1.0
      %v1720 = vadd.f32 %v1688, 1.0
      %v1721 = vadd.f32 %v1689, 1.0
      %v1722 = vmul.f32 %v474, %v1690
      %v1723 = vmul.f32 %v475, %v1691
      %v1724 = vmul.f32 %v476, %v1692
      %v1725 = vmul.f32 %v477, %v1693
      %v1726 = vmul.f32 %v478, %v1694
      %v1727 = vmul.f32 %v479, %v1695
      %v1728 = vmul.f32 %v480, %v1696
      %v1729 = vmul.f32 %v481, %v1697
      %v1730 = vmul.f32 %v482, %v1698
      %v1731 = vmul.f32 %v483, %v1699
      %v1732 = vmul.f32 %v484, %v1700
      %v1733 = vmul.f32 %v485, %v1701
      %v1734 = vmul.f32 %v486, %v1702
      %v1735 = vmul.f32 %v487, %v1703
      %v1736 = vmul.f32 %v488, %v1704
      %v1737 = vmul.f32 %v489, %v1705
      %v1738 = vmul.f32 %v490, %v1706
      %v1739 = vmul.f32 %v491, %v1707
      %v1740 = vmul.f32 %v492, %v1708
      %v1741 = vmul.f32 %v493, %v1709
      %v1742 = vmul.f32 %v494, %v1710
      %v1743 = vmul.f32 %v495, %v1711
      %v1744 = vmul.f32 %v496, %v1712
      %v1745 = vmul.f32 %v497, %v1713
      %v1746 = vmul.f32 %v498, %v1714
      %v1747 = vmul.f32 %v499, %v1715
      %v1748 = vmul.f32 %v500, %v1716
      %v1749 = vmul.f32 %v501, %v1717
      %v1750 = vmul.f32 %v502, %v1718
      %v1751 = vmul.f32 %v503, %v1719
      %v1752 = vmul.f32 %v504, %v1720
      %v1753 = vmul.f32 %v505, %v1721
      %v1754 = vld [vmem:[%s3] sm:$0xff]
      %v1755 = vld [vmem:[%s3 + $0x8] sm:$0xff]
      %v1756 = vld [vmem:[%s3 + $0x10] sm:$0xff]
      %v1757 = vld [vmem:[%s3 + $0x18] sm:$0xff]
      %v1758 = vld [vmem:[%s3 + $0x20] sm:$0xff]
      %v1759 = vld [vmem:[%s3 + $0x28] sm:$0xff]
      %v1760 = vld [vmem:[%s3 + $0x30] sm:$0xff]
      %v1761 = vld [vmem:[%s3 + $0x38] sm:$0xff]
      %v1762 = vld [vmem:[%s3 + $0x40] sm:$0xff]
      %v1763 = vld [vmem:[%s3 + $0x48] sm:$0xff]
      %v1764 = vld [vmem:[%s3 + $0x50] sm:$0xff]
      %v1765 = vld [vmem:[%s3 + $0x58] sm:$0xff]
      %v1766 = vld [vmem:[%s3 + $0x60] sm:$0xff]
      %v1767 = vld [vmem:[%s3 + $0x68] sm:$0xff]
      %v1768 = vld [vmem:[%s3 + $0x70] sm:$0xff]
      %v1769 = vld [vmem:[%s3 + $0x78] sm:$0xff]
      %v1770 = vld [vmem:[%s3 + $0x80] sm:$0xff]
      %v1771 = vld [vmem:[%s3 + $0x88] sm:$0xff]
      %v1772 = vld [vmem:[%s3 + $0x90] sm:$0xff]
      %v1773 = vld [vmem:[%s3 + $0x98] sm:$0xff]
      %v1774 = vld [vmem:[%s3 + $0xa0] sm:$0xff]
      %v1775 = vld [vmem:[%s3 + $0xa8] sm:$0xff]
      %v1776 = vld [vmem:[%s3 + $0xb0] sm:$0xff]
      %v1777 = vld [vmem:[%s3 + $0xb8] sm:$0xff]
      %v1778 = vld [vmem:[%s3 + $0xc0] sm:$0xff]
      %v1779 = vld [vmem:[%s3 + $0xc8] sm:$0xff]
      %v1780 = vld [vmem:[%s3 + $0xd0] sm:$0xff]
      %v1781 = vld [vmem:[%s3 + $0xd8] sm:$0xff]
      %v1782 = vld [vmem:[%s3 + $0xe0] sm:$0xff]
      %v1783 = vld [vmem:[%s3 + $0xe8] sm:$0xff]
      %v1784 = vld [vmem:[%s3 + $0xf0] sm:$0xff]
      %v1785 = vld [vmem:[%s3 + $0xf8] sm:$0xff]
      %v1786 = vld [vmem:[%s3 + $0x100] sm:$0xff]
      %v1787 = vld [vmem:[%s3 + $0x108] sm:$0xff]
      %v1788 = vld [vmem:[%s3 + $0x110] sm:$0xff]
      %v1789 = vld [vmem:[%s3 + $0x118] sm:$0xff]
      %v1790 = vld [vmem:[%s3 + $0x120] sm:$0xff]
      %v1791 = vld [vmem:[%s3 + $0x128] sm:$0xff]
      %v1792 = vld [vmem:[%s3 + $0x130] sm:$0xff]
      %v1793 = vld [vmem:[%s3 + $0x138] sm:$0xff]
      %v1794 = vld [vmem:[%s3 + $0x140] sm:$0xff]
      %v1795 = vld [vmem:[%s3 + $0x148] sm:$0xff]
      %v1796 = vld [vmem:[%s3 + $0x150] sm:$0xff]
      %v1797 = vld [vmem:[%s3 + $0x158] sm:$0xff]
      %v1798 = vld [vmem:[%s3 + $0x160] sm:$0xff]
      %v1799 = vld [vmem:[%s3 + $0x168] sm:$0xff]
      %v1800 = vld [vmem:[%s3 + $0x170] sm:$0xff]
      %v1801 = vld [vmem:[%s3 + $0x178] sm:$0xff]
      %v1802 = vld [vmem:[%s3 + $0x180] sm:$0xff]
      %v1803 = vld [vmem:[%s3 + $0x188] sm:$0xff]
      %v1804 = vld [vmem:[%s3 + $0x190] sm:$0xff]
      %v1805 = vld [vmem:[%s3 + $0x198] sm:$0xff]
      %v1806 = vld [vmem:[%s3 + $0x1a0] sm:$0xff]
      %v1807 = vld [vmem:[%s3 + $0x1a8] sm:$0xff]
      %v1808 = vld [vmem:[%s3 + $0x1b0] sm:$0xff]
      %v1809 = vld [vmem:[%s3 + $0x1b8] sm:$0xff]
      %v1810 = vld [vmem:[%s3 + $0x1c0] sm:$0xff]
      %v1811 = vld [vmem:[%s3 + $0x1c8] sm:$0xff]
      %v1812 = vld [vmem:[%s3 + $0x1d0] sm:$0xff]
      %v1813 = vld [vmem:[%s3 + $0x1d8] sm:$0xff]
      %v1814 = vld [vmem:[%s3 + $0x1e0] sm:$0xff]
      %v1815 = vld [vmem:[%s3 + $0x1e8] sm:$0xff]
      %v1816 = vld [vmem:[%s3 + $0x1f0] sm:$0xff]
      %v1817 = vld [vmem:[%s3 + $0x1f8] sm:$0xff]
      %v1818 = vld [vmem:[%s4] sm:$0x1]
      %v1820 = vperm.slane %v1818, 0
      %1822 = vmatpush.msra.mxu0 %v1769
      %1823 = vmatpush.msra.mxu0 %v1768
      %1824 = vmatpush.msra.mxu0 %v1767
      %1825 = vmatpush.msra.mxu0 %v1766
      %1826 = vmatpush.msra.mxu0 %v1765
      %1827 = vmatpush.msra.mxu0 %v1764
      %1828 = vmatpush.msra.mxu0 %v1763
      %1829 = vmatpush.msra.mxu0 %v1762
      %1830 = vmatpush.msra.mxu0 %v1761
      %1831 = vmatpush.msra.mxu0 %v1760
      %1832 = vmatpush.msra.mxu0 %v1759
      %1833 = vmatpush.msra.mxu0 %v1758
      %1834 = vmatpush.msra.mxu0 %v1757
      %1835 = vmatpush.msra.mxu0 %v1756
      %1836 = vmatpush.msra.mxu0 %v1755
      %1837 = vmatpush.msra.mxu0 %v1754
      %1838 = vmatmul.f32.gmra.mxu0 %v1722
      %v1839 = vpop.f32.mrf.mxu0
      %v1840 = vadd.f32 %v1820, %v1839
      %1841 = vmatmul.f32.gmra.mxu0 %v1726
      %v1842 = vpop.f32.mrf.mxu0
      %v1843 = vadd.f32 %v1820, %v1842
      %1844 = vmatmul.f32.gmra.mxu0 %v1730
      %v1845 = vpop.f32.mrf.mxu0
      %v1846 = vadd.f32 %v1820, %v1845
      %1847 = vmatmul.f32.gmra.mxu0 %v1734
      %v1848 = vpop.f32.mrf.mxu0
      %v1849 = vadd.f32 %v1820, %v1848
      %1850 = vmatmul.f32.gmra.mxu0 %v1738
      %v1851 = vpop.f32.mrf.mxu0
      %v1852 = vadd.f32 %v1820, %v1851
      %1853 = vmatmul.f32.gmra.mxu0 %v1742
      %v1854 = vpop.f32.mrf.mxu0
      %v1855 = vadd.f32 %v1820, %v1854
      %1856 = vmatmul.f32.gmra.mxu0 %v1746
      %v1857 = vpop.f32.mrf.mxu0
      %v1858 = vadd.f32 %v1820, %v1857
      %1859 = vmatmul.f32.gmra.mxu0 %v1750
      %v1860 = vpop.f32.mrf.mxu0
      %v1861 = vadd.f32 %v1820, %v1860
      %1862 = vdwg.mxu0
      %1863 = vmatpush.msra.mxu0 %v1785
      %1864 = vmatpush.msra.mxu0 %v1784
      %1865 = vmatpush.msra.mxu0 %v1783
      %1866 = vmatpush.msra.mxu0 %v1782
      %1867 = vmatpush.msra.mxu0 %v1781
      %1868 = vmatpush.msra.mxu0 %v1780
      %1869 = vmatpush.msra.mxu0 %v1779
      %1870 = vmatpush.msra.mxu0 %v1778
      %1871 = vmatpush.msra.mxu0 %v1777
      %1872 = vmatpush.msra.mxu0 %v1776
      %1873 = vmatpush.msra.mxu0 %v1775
      %1874 = vmatpush.msra.mxu0 %v1774
      %1875 = vmatpush.msra.mxu0 %v1773
      %1876 = vmatpush.msra.mxu0 %v1772
      %1877 = vmatpush.msra.mxu0 %v1771
      %1878 = vmatpush.msra.mxu0 %v1770
      %1879 = vmatmul.f32.gmra.mxu0 %v1723
      %v1880 = vpop.f32.mrf.mxu0
      %v1881 = vadd.f32 %v1840, %v1880
      %1882 = vmatmul.f32.gmra.mxu0 %v1727
      %v1883 = vpop.f32.mrf.mxu0
      %v1884 = vadd.f32 %v1843, %v1883
      %1885 = vmatmul.f32.gmra.mxu0 %v1731
      %v1886 = vpop.f32.mrf.mxu0
      %v1887 = vadd.f32 %v1846, %v1886
      %1888 = vmatmul.f32.gmra.mxu0 %v1735
      %v1889 = vpop.f32.mrf.mxu0
      %v1890 = vadd.f32 %v1849, %v1889
      %1891 = vmatmul.f32.gmra.mxu0 %v1739
      %v1892 = vpop.f32.mrf.mxu0
      %v1893 = vadd.f32 %v1852, %v1892
      %1894 = vmatmul.f32.gmra.mxu0 %v1743
      %v1895 = vpop.f32.mrf.mxu0
      %v1896 = vadd.f32 %v1855, %v1895
      %1897 = vmatmul.f32.gmra.mxu0 %v1747
      %v1898 = vpop.f32.mrf.mxu0
      %v1899 = vadd.f32 %v1858, %v1898
      %1900 = vmatmul.f32.gmra.mxu0 %v1751
      %v1901 = vpop.f32.mrf.mxu0
      %v1902 = vadd.f32 %v1861, %v1901
      %1903 = vdwg.mxu0
      %1904 = vmatpush.msra.mxu0 %v1801
      %1905 = vmatpush.msra.mxu0 %v1800
      %1906 = vmatpush.msra.mxu0 %v1799
      %1907 = vmatpush.msra.mxu0 %v1798
      %1908 = vmatpush.msra.mxu0 %v1797
      %1909 = vmatpush.msra.mxu0 %v1796
      %1910 = vmatpush.msra.mxu0 %v1795
      %1911 = vmatpush.msra.mxu0 %v1794
      %1912 = vmatpush.msra.mxu0 %v1793
      %1913 = vmatpush.msra.mxu0 %v1792
      %1914 = vmatpush.msra.mxu0 %v1791
      %1915 = vmatpush.msra.mxu0 %v1790
      %1916 = vmatpush.msra.mxu0 %v1789
      %1917 = vmatpush.msra.mxu0 %v1788
      %1918 = vmatpush.msra.mxu0 %v1787
      %1919 = vmatpush.msra.mxu0 %v1786
      %1920 = vmatmul.f32.gmra.mxu0 %v1724
      %v1921 = vpop.f32.mrf.mxu0
      %v1922 = vadd.f32 %v1881, %v1921
      %1923 = vmatmul.f32.gmra.mxu0 %v1728
      %v1924 = vpop.f32.mrf.mxu0
      %v1925 = vadd.f32 %v1884, %v1924
      %1926 = vmatmul.f32.gmra.mxu0 %v1732
      %v1927 = vpop.f32.mrf.mxu0
      %v1928 = vadd.f32 %v1887, %v1927
      %1929 = vmatmul.f32.gmra.mxu0 %v1736
      %v1930 = vpop.f32.mrf.mxu0
      %v1931 = vadd.f32 %v1890, %v1930
      %1932 = vmatmul.f32.gmra.mxu0 %v1740
      %v1933 = vpop.f32.mrf.mxu0
      %v1934 = vadd.f32 %v1893, %v1933
      %1935 = vmatmul.f32.gmra.mxu0 %v1744
      %v1936 = vpop.f32.mrf.mxu0
      %v1937 = vadd.f32 %v1896, %v1936
      %1938 = vmatmul.f32.gmra.mxu0 %v1748
      %v1939 = vpop.f32.mrf.mxu0
      %v1940 = vadd.f32 %v1899, %v1939
      %1941 = vmatmul.f32.gmra.mxu0 %v1752
      %v1942 = vpop.f32.mrf.mxu0
      %v1943 = vadd.f32 %v1902, %v1942
      %1944 = vdwg.mxu0
      %1945 = vmatpush.msra.mxu0 %v1817
      %1946 = vmatpush.msra.mxu0 %v1816
      %1947 = vmatpush.msra.mxu0 %v1815
      %1948 = vmatpush.msra.mxu0 %v1814
      %1949 = vmatpush.msra.mxu0 %v1813
      %1950 = vmatpush.msra.mxu0 %v1812
      %1951 = vmatpush.msra.mxu0 %v1811
      %1952 = vmatpush.msra.mxu0 %v1810
      %1953 = vmatpush.msra.mxu0 %v1809
      %1954 = vmatpush.msra.mxu0 %v1808
      %1955 = vmatpush.msra.mxu0 %v1807
      %1956 = vmatpush.msra.mxu0 %v1806
      %1957 = vmatpush.msra.mxu0 %v1805
      %1958 = vmatpush.msra.mxu0 %v1804
      %1959 = vmatpush.msra.mxu0 %v1803
      %1960 = vmatpush.msra.mxu0 %v1802
      %1961 = vmatmul.f32.gmra.mxu0 %v1725
      %v1962 = vpop.f32.mrf.mxu0
      %v1963 = vadd.f32 %v1922, %v1962
      %1964 = vmatmul.f32.gmra.mxu0 %v1729
      %v1965 = vpop.f32.mrf.mxu0
      %v1966 = vadd.f32 %v1925, %v1965
      %1967 = vmatmul.f32.gmra.mxu0 %v1733
      %v1968 = vpop.f32.mrf.mxu0
      %v1969 = vadd.f32 %v1928, %v1968
      %1970 = vmatmul.f32.gmra.mxu0 %v1737
      %v1971 = vpop.f32.mrf.mxu0
      %v1972 = vadd.f32 %v1931, %v1971
      %1973 = vmatmul.f32.gmra.mxu0 %v1741
      %v1974 = vpop.f32.mrf.mxu0
      %v1975 = vadd.f32 %v1934, %v1974
      %1976 = vmatmul.f32.gmra.mxu0 %v1745
      %v1977 = vpop.f32.mrf.mxu0
      %v1978 = vadd.f32 %v1937, %v1977
      %1979 = vmatmul.f32.gmra.mxu0 %v1749
      %v1980 = vpop.f32.mrf.mxu0
      %v1981 = vadd.f32 %v1940, %v1980
      %1982 = vmatmul.f32.gmra.mxu0 %v1753
      %v1983 = vpop.f32.mrf.mxu0
      %v1984 = vadd.f32 %v1943, %v1983
      %1985 = vdwg.mxu0
      %vm1986 = vcmask 97280
      %1987 = vst.msk [vmem:[%s226] sm:$0xff] %vm1986, %v1963
      %1988 = vst.msk [vmem:[%s226 + $0x8] sm:$0xff] %vm1986, %v1966
      %1989 = vst.msk [vmem:[%s226 + $0x10] sm:$0xff] %vm1986, %v1969
      %1990 = vst.msk [vmem:[%s226 + $0x18] sm:$0xff] %vm1986, %v1972
      %1991 = vst.msk [vmem:[%s226 + $0x20] sm:$0xff] %vm1986, %v1975
      %1992 = vst.msk [vmem:[%s226 + $0x28] sm:$0xff] %vm1986, %v1978
      %1993 = vst.msk [vmem:[%s226 + $0x30] sm:$0xff] %vm1986, %v1981
      %1994 = vst.msk [vmem:[%s226 + $0x38] sm:$0xff] %vm1986, %v1984
      %s1995 = smul.u32 8, %s16
      %p1996 = scmp.lt.s32.totalorder %s1995, 15
      %s1997 = scalar_select %p1996, %s1995, 15
      %s1998 = smul.addr %s1997, 8
      %s1999 = scalar_lea.vmem %s5, %s1998
      // Predicated region
      $region41: #{fno2d_forward.19} parent=39 // pred_check
        %p2000 = pneg %p144
      $region42: #{fno2d_forward.19} parent=39 // pred_check_branch
        %2002 = sbr.rel (%p2000) target = $region44
      $region43: #{fno2d_forward.19} parent=39 // pred_region
        %s2003 = smul.u32 8, %s16
      $region44: #{fno2d_forward.19} parent=39 // pred_fallthru
        _
    $region40: #{fno2d_forward.19} parent=5 // pred_fallthru
      _
    %p2004 = scmp.le.s32.totalorder 2, %s11
    // Predicated region
    $region45: #{fno2d_forward.19} parent=5 // pred_check
      %p2005 = pneg %p2004
    $region46: #{fno2d_forward.19} parent=5 // pred_check_branch
      %2007 = sbr.rel (%p2005) target = $region48
    $region47: #{fno2d_forward.19} parent=5 // pred_region
      %s2008 = ssub.s32 %s11, 2
      // Predicated region
      $region49: #{fno2d_forward.19} parent=47 // pred_check
        %p2009 = pneg %p150
      $region50: #{fno2d_forward.19} parent=47 // pred_check_branch
        %2011 = sbr.rel (%p2009) target = $region52
      $region51: #{fno2d_forward.19} parent=47 // pred_region
        %s2012 = smul.u32 8, %s17
        %p2013 = scmp.lt.s32.totalorder %s2012, 15
        %s2014 = scalar_select %p2013, %s2012, 15
        %s2015 = smul.addr %s2014, 8
        %s2016 = scalar_lea.vmem %s5, %s2015
      $region52: #{fno2d_forward.19} parent=47 // pred_fallthru
        _
    $region48: #{fno2d_forward.19} parent=5 // pred_fallthru
      _
  $region6: #{fno2d_forward.19} parent=0 // loop_footer
    %s15 = sadd.s32 1, %s11
  $region7: #{fno2d_forward.19} parent=0 // loop_footer_branch
    %10 = sbr.rel target = $region3
  $region8: #{fno2d_forward.19} parent=0 // loop_exit
    _

</llo_original>
